<compile_context>
chip_gen: v5e
topology: v5e:2x2
jax: 0.10.0
libtpu: 0.0.40
codegen_flags: <defaults>
</compile_context>

<pallas_src>
import functools

import numpy as np

import jax
import jax.numpy as jnp
from jax.experimental import pallas as pl
from jax.experimental.pallas import tpu as pltpu

_BN_EPS = 1e-5
_LANES = 128


def _round_up(n, m):
    return ((n + m - 1) // m) * m


def _nbytes(shape, dtype):
    n = 1
    for d in shape:
        n *= int(d)
    return n * np.dtype(dtype).itemsize


def _cparams(n_parallel_axes, io_block_bytes, scratch_bytes=0):
    """Footprint-derived scoped-VMEM limit: double-buffered in/out blocks + scratch
    + headroom, clamped so it stays within v7x's 64 MiB/TC VMEM."""
    vmem = 2 * int(io_block_bytes) + int(scratch_bytes) + (4 << 20)
    vmem = int(min(max(vmem, 16 << 20), 48 << 20))
    return pltpu.CompilerParams(
        dimension_semantics=("parallel",) * n_parallel_axes,
        vmem_limit_bytes=vmem)


# --------------------------- in-kernel helpers ------------------------------- #

def _accum_3x3(tap_fn, w_ref, rows, cin):
    """9-tap accumulation matmul (no materialized im2col buffer).

    tap_fn(kh, kw) -> (rows, cin) slab of the (padded / phase-decomposed) input.
    w_ref: (9*cin, Cpo) with taps stacked (kh, kw) row-major along K.
    Returns the f32 (rows, Cpo) accumulator.
    """
    cpo = w_ref.shape[-1]
    acc = jnp.zeros((rows, cpo), jnp.float32)
    t = 0
    for kh in range(3):
        for kw in range(3):
            acc = acc + jnp.dot(tap_fn(kh, kw),
                                w_ref[t * cin:(t + 1) * cin, :],
                                preferred_element_type=jnp.float32)
            t += 1
    return acc


def _write_stats(st_ref, acc):
    """Per-block BN partial stats (sum / sum-of-squares over rows) from the f32 acc.
    Padded channel lanes are exactly zero (zero-padded weights), so their stats are
    benign: rsqrt(0+eps)*0 with zero gamma/beta stays zero."""
    st_ref[0:1, :] = jnp.sum(acc, axis=0, keepdims=True)
    st_ref[1:2, :] = jnp.sum(acc * acc, axis=0, keepdims=True)


def _fill_halo_and_interior(pad_ref, y):
    """Write y into the interior of the (H+2, W+2, C) scratch; zero only the
    1-pixel halo (the interior is fully overwritten every grid step)."""
    Hp, Wp, C = pad_ref.shape
    H, W = Hp - 2, Wp - 2
    zrow = jnp.zeros((1, Wp, C), pad_ref.dtype)
    zcol = jnp.zeros((Hp, 1, C), pad_ref.dtype)
    pad_ref[0:1, :, :] = zrow
    pad_ref[H + 1:H + 2, :, :] = zrow
    pad_ref[:, 0:1, :] = zcol
    pad_ref[:, W + 1:W + 2, :] = zcol
    pad_ref[1:H + 1, 1:W + 1, :] = y.astype(pad_ref.dtype)


# --------------------------------- kernels ----------------------------------- #

def conv1_s1_kernel(x_ref, w_ref, o_ref, st_ref, pad_ref):
    """stride-1 3x3 conv with in-kernel spatial zero-pad + BN partial stats."""
    H, W, C = x_ref.shape
    Cpo = o_ref.shape[-1]
    _fill_halo_and_interior(pad_ref, x_ref[...])
    tap = lambda kh, kw: pad_ref[kh:kh + H, kw:kw + W, :].reshape(H * W, C)
    acc = _accum_3x3(tap, w_ref, H * W, C)
    o_ref[...] = acc.reshape(H, W, Cpo).astype(o_ref.dtype)
    _write_stats(st_ref, acc)


def conv1_s1_down_kernel(x_ref, w_ref, wd_ref, o_ref, st_ref, r_ref, rst_ref,
                         pad_ref):
    """stride-1 3x3 conv + fused downsample 1x1 conv + BN partial stats for both."""
    H, W, C = x_ref.shape
    Cpo = o_ref.shape[-1]
    x = x_ref[...]
    _fill_halo_and_interior(pad_ref, x)
    tap = lambda kh, kw: pad_ref[kh:kh + H, kw:kw + W, :].reshape(H * W, C)
    acc = _accum_3x3(tap, w_ref, H * W, C)
    o_ref[...] = acc.reshape(H, W, Cpo).astype(o_ref.dtype)
    _write_stats(st_ref, acc)
    # downsample 1x1 (stride 1): reads exactly the data already resident for conv1
    r = jnp.dot(x.reshape(H * W, C), wd_ref[...], preferred_element_type=jnp.float32)
    r_ref[...] = r.reshape(H, W, Cpo).astype(r_ref.dtype)
    _write_stats(rst_ref, r)


def conv1_phase_kernel(ph_ref, w_ref, o_ref, st_ref, *, stride):
    """strided 3x3 conv via phase decomposition (no stride-1 overcompute)."""
    Ho, Wo, Cpo = o_ref.shape
    C = ph_ref.shape[-1]

    def tap(kh, kw):
        p = (kh % stride) * stride + (kw % stride)
        m, n = kh // stride, kw // stride
        return ph_ref[p, m:m + Ho, n:n + Wo, :].reshape(Ho * Wo, C)

    acc = _accum_3x3(tap, w_ref, Ho * Wo, C)
    o_ref[...] = acc.reshape(Ho, Wo, Cpo).astype(o_ref.dtype)
    _write_stats(st_ref, acc)


def conv1_phase_down_kernel(ph_ref, w_ref, wd_ref, o_ref, st_ref, r_ref, rst_ref,
                            *, stride):
    """strided 3x3 conv + fused strided downsample 1x1 conv (center tap) + stats."""
    Ho, Wo, Cpo = o_ref.shape
    C = ph_ref.shape[-1]

    def tap(kh, kw):
        p = (kh % stride) * stride + (kw % stride)
        m, n = kh // stride, kw // stride
        return ph_ref[p, m:m + Ho, n:n + Wo, :].reshape(Ho * Wo, C)

    acc = _accum_3x3(tap, w_ref, Ho * Wo, C)
    o_ref[...] = acc.reshape(Ho, Wo, Cpo).astype(o_ref.dtype)
    _write_stats(st_ref, acc)
    # x[::s, ::s] is exactly the center tap of the phase decomposition
    r = jnp.dot(tap(1, 1), wd_ref[...], preferred_element_type=jnp.float32)
    r_ref[...] = r.reshape(Ho, Wo, Cpo).astype(r_ref.dtype)
    _write_stats(rst_ref, r)


def bn_relu_conv2_kernel(x_ref, s_ref, h_ref, w_ref, o_ref, st_ref, pad_ref):
    """Fused bn1 affine + ReLU (f32 elementwise) + stride-1 3x3 conv + BN2 stats."""
    H, W, C = x_ref.shape
    Cpo = o_ref.shape[-1]
    y = jnp.maximum(x_ref[...].astype(jnp.float32) * s_ref[...] + h_ref[...], 0.0)
    _fill_halo_and_interior(pad_ref, y)
    tap = lambda kh, kw: pad_ref[kh:kh + H, kw:kw + W, :].reshape(H * W, C)
    acc = _accum_3x3(tap, w_ref, H * W, C)
    o_ref[...] = acc.reshape(H, W, Cpo).astype(o_ref.dtype)
    _write_stats(st_ref, acc)


def bn_add_relu_kernel(a_ref, r_ref, sa_ref, ha_ref, sr_ref, hr_ref, o_ref):
    """out = relu(a*sa + ha + r*sr + hr)  (bn2 + downsample-BN affine + add + relu)."""
    y = (a_ref[...].astype(jnp.float32) * sa_ref[...] + ha_ref[...]
         + r_ref[...].astype(jnp.float32) * sr_ref[...] + hr_ref[...])
    o_ref[...] = jnp.maximum(y, 0.0)


# ----------------------------- pallas_call wrappers --------------------------- #

def _conv1_stride1(x, w1, wd, cdt):
    B, H, W, Cpi = x.shape
    Cpo = w1.shape[-1]
    img_in = pl.BlockSpec((None, H, W, Cpi), lambda b: (b, 0, 0, 0))
    img_out = pl.BlockSpec((None, H, W, Cpo), lambda b: (b, 0, 0, 0))
    stat = pl.BlockSpec((None, 2, Cpo), lambda b: (b, 0, 0))
    wspec = pl.BlockSpec((9 * Cpi, Cpo), lambda b: (0, 0))

    in_specs = [img_in, wspec]
    args = [x, w1]
    out_shape = [jax.ShapeDtypeStruct((B, H, W, Cpo), cdt),
                 jax.ShapeDtypeStruct((B, 2, Cpo), jnp.float32)]
    out_specs = [img_out, stat]
    kernel = conv1_s1_kernel
    if wd is not None:
        in_specs.append(pl.BlockSpec((Cpi, Cpo), lambda b: (0, 0)))
        args.append(wd)
        out_shape += [jax.ShapeDtypeStruct((B, H, W, Cpo), cdt),
                      jax.ShapeDtypeStruct((B, 2, Cpo), jnp.float32)]
        out_specs += [img_out, stat]
        kernel = conv1_s1_down_kernel

    io = (_nbytes((H, W, Cpi), cdt) + _nbytes((9 * Cpi, Cpo), cdt)
          + _nbytes((Cpi, Cpo), cdt)
          + 2 * (_nbytes((H, W, Cpo), cdt) + _nbytes((2, Cpo), jnp.float32)))
    scratch = _nbytes((H + 2, W + 2, Cpi), cdt)
    return pl.pallas_call(
        kernel,
        out_shape=tuple(out_shape),
        grid=(B,),
        in_specs=in_specs,
        out_specs=tuple(out_specs),
        scratch_shapes=[pltpu.VMEM((H + 2, W + 2, Cpi), cdt)],
        compiler_params=_cparams(1, io, scratch),
    )(*args)


def _conv1_phases(phases, w1, wd, stride, Ho, Wo, cdt):
    B, nph, HP, WP, Cpi = phases.shape
    Cpo = w1.shape[-1]
    ph_spec = pl.BlockSpec((None, nph, HP, WP, Cpi), lambda b: (b, 0, 0, 0, 0))
    img_out = pl.BlockSpec((None, Ho, Wo, Cpo), lambda b: (b, 0, 0, 0))
    stat = pl.BlockSpec((None, 2, Cpo), lambda b: (b, 0, 0))
    wspec = pl.BlockSpec((9 * Cpi, Cpo), lambda b: (0, 0))

    in_specs = [ph_spec, wspec]
    args = [phases, w1]
    out_shape = [jax.ShapeDtypeStruct((B, Ho, Wo, Cpo), cdt),
                 jax.ShapeDtypeStruct((B, 2, Cpo), jnp.float32)]
    out_specs = [img_out, stat]
    if wd is None:
        kernel = functools.partial(conv1_phase_kernel, stride=stride)
    else:
        in_specs.append(pl.BlockSpec((Cpi, Cpo), lambda b: (0, 0)))
        args.append(wd)
        out_shape += [jax.ShapeDtypeStruct((B, Ho, Wo, Cpo), cdt),
                      jax.ShapeDtypeStruct((B, 2, Cpo), jnp.float32)]
        out_specs += [img_out, stat]
        kernel = functools.partial(conv1_phase_down_kernel, stride=stride)

    io = (_nbytes((nph, HP, WP, Cpi), cdt) + _nbytes((9 * Cpi, Cpo), cdt)
          + _nbytes((Cpi, Cpo), cdt)
          + 2 * (_nbytes((Ho, Wo, Cpo), cdt) + _nbytes((2, Cpo), jnp.float32)))
    return pl.pallas_call(
        kernel,
        out_shape=tuple(out_shape),
        grid=(B,),
        in_specs=in_specs,
        out_specs=tuple(out_specs),
        compiler_params=_cparams(1, io),
    )(*args)


def _bn_relu_conv2(x, scale, shift, w2, cdt):
    B, H, W, C = x.shape
    Cpo = w2.shape[-1]
    io = (_nbytes((H, W, C), cdt) + _nbytes((9 * C, Cpo), cdt)
          + _nbytes((H, W, Cpo), cdt) + 2 * _nbytes((2, Cpo), jnp.float32))
    scratch = _nbytes((H + 2, W + 2, C), cdt)
    return pl.pallas_call(
        bn_relu_conv2_kernel,
        out_shape=(jax.ShapeDtypeStruct((B, H, W, Cpo), cdt),
                   jax.ShapeDtypeStruct((B, 2, Cpo), jnp.float32)),
        grid=(B,),
        in_specs=[pl.BlockSpec((None, H, W, C), lambda b: (b, 0, 0, 0)),
                  pl.BlockSpec((1, C), lambda b: (0, 0)),
                  pl.BlockSpec((1, C), lambda b: (0, 0)),
                  pl.BlockSpec((9 * C, Cpo), lambda b: (0, 0))],
        out_specs=(pl.BlockSpec((None, H, W, Cpo), lambda b: (b, 0, 0, 0)),
                   pl.BlockSpec((None, 2, Cpo), lambda b: (b, 0, 0))),
        scratch_shapes=[pltpu.VMEM((H + 2, W + 2, C), cdt)],
        compiler_params=_cparams(1, io, scratch),
    )(x, scale, shift, w2)


def _bn_add_relu(a, r, sa, ha, sr, hr):
    B, H, W, C = a.shape
    # Row-tiled, halo-free epilogue; leading "parallel" spatial axis (megacore / v7x).
    TR = 8 if H % 8 == 0 else H
    nrt = H // TR
    img = pl.BlockSpec((None, TR, W, C), lambda t, b: (b, t, 0, 0))
    out = pl.BlockSpec((None, TR, W, C), lambda t, b: (b, t, 0, 0))
    vec = pl.BlockSpec((1, C), lambda t, b: (0, 0))
    io = (_nbytes((TR, W, C), a.dtype) + _nbytes((TR, W, C), r.dtype)
          + _nbytes((TR, W, C), jnp.float32) + 4 * _nbytes((1, C), jnp.float32))
    return pl.pallas_call(
        bn_add_relu_kernel,
        out_shape=jax.ShapeDtypeStruct((B, H, W, C), jnp.float32),
        grid=(nrt, B),
        in_specs=[img, img, vec, vec, vec, vec],
        out_specs=out,
        compiler_params=_cparams(2, io),
    )(a, r, sa, ha, sr, hr)


# ------------------------------ XLA-side helpers ------------------------------ #

def _pad_c(v, cp):
    """Zero-pad the last (channel) dim to cp."""
    return jnp.pad(v, [(0, 0)] * (v.ndim - 1) + [(0, cp - v.shape[-1])])


def _make_phases(x, stride):
    """x: (B, H, W, C) -> (B, stride*stride, HP, WP, C).
    Phase (a, b) (index a*stride+b) holds xpad[:, a::stride, b::stride, :] where xpad
    is x spatially zero-padded by 1, so all in-kernel tap reads are contiguous."""
    B, H, W, C = x.shape
    xp = jnp.pad(x, ((0, 0), (1, 1), (1, 1), (0, 0)))
    HP = -(-(H + 2) // stride)
    WP = -(-(W + 2) // stride)
    phases = []
    for a in range(stride):
        for b in range(stride):
            ph = xp[:, a::stride, b::stride, :]
            ph = jnp.pad(ph, ((0, 0), (0, HP - ph.shape[1]),
                              (0, WP - ph.shape[2]), (0, 0)))
            phases.append(ph)
    return jnp.stack(phases, axis=1)


def _bn_finalize(stats, gamma_p, beta_p, count):
    """Single-pass BN finalize from per-image partial sums / sums-of-squares.
    stats: (B, 2, Cpo) f32; gamma_p/beta_p: (Cpo,). Returns (1, Cpo) scale, shift."""
    s = jnp.sum(stats[:, 0, :], axis=0)
    ssq = jnp.sum(stats[:, 1, :], axis=0)
    mean = s / count
    var = jnp.maximum(ssq / count - mean * mean, 0.0)
    scale = gamma_p * jax.lax.rsqrt(var + _BN_EPS)
    shift = beta_p - mean * scale
    return (scale.reshape(1, -1).astype(jnp.float32),
            shift.reshape(1, -1).astype(jnp.float32))


# ------------------------------- block forward -------------------------------- #

def basic_block_pallas(x_nchw, params, stride=1, compute_dtype=jnp.bfloat16):
    """BasicBlock forward. Input/output NCHW (PyTorch convention).
    compute_dtype controls conv matmul operand / intermediate storage dtype
    (accumulation, BN statistics and elementwise math are always f32)."""
    x = jnp.transpose(x_nchw, (0, 2, 3, 1)).astype(jnp.float32)      # NHWC
    B, H, W, Cin = x.shape
    Cout = params["conv1_w"].shape[0]
    Cpi, Cpo = _round_up(Cin, _LANES), _round_up(Cout, _LANES)
    Ho, Wo = (H - 1) // stride + 1, (W - 1) // stride + 1
    cdt = compute_dtype
    has_down = params.get("down_w") is not None
    if not has_down:
        assert stride == 1 and Cin == Cout, (
            "identity residual requires stride==1 and inplanes==planes")

    xc = _pad_c(x, Cpi).astype(cdt)                                  # (B,H,W,Cpi)

    # weights: OIHW -> HWIO, channel-pad to 128-lane multiples, taps stacked along K
    w1 = jnp.transpose(params["conv1_w"], (2, 3, 1, 0))              # (3,3,Cin,Cout)
    w1 = jnp.pad(w1, ((0, 0), (0, 0), (0, Cpi - Cin), (0, Cpo - Cout)))
    w1 = w1.reshape(9 * Cpi, Cpo).astype(cdt)
    w2 = jnp.transpose(params["conv2_w"], (2, 3, 1, 0))              # (3,3,Cout,Cout)
    w2 = jnp.pad(w2, ((0, 0), (0, 0), (0, Cpo - Cout), (0, Cpo - Cout)))
    w2 = w2.reshape(9 * Cpo, Cpo).astype(cdt)
    wd = None
    if has_down:
        wd = jnp.transpose(params["down_w"][:, :, 0, 0], (1, 0))     # (Cin, Cout)
        wd = jnp.pad(wd, ((0, Cpi - Cin), (0, Cpo - Cout))).astype(cdt)

    g1, b1 = _pad_c(params["bn1_gamma"], Cpo), _pad_c(params["bn1_beta"], Cpo)
    g2, b2 = _pad_c(params["bn2_gamma"], Cpo), _pad_c(params["bn2_beta"], Cpo)

    # conv1 (+ fused downsample 1x1) + per-image BN partial stats
    if stride == 1:
        res = _conv1_stride1(xc, w1, wd, cdt)
    else:
        phases = _make_phases(xc, stride)
        res = _conv1_phases(phases, w1, wd, stride, Ho, Wo, cdt)
    if has_down:
        out1, st1, resid, std = res
    else:
        out1, st1 = res
        resid = xc            # identity residual (stride==1, Cin==Cout asserted)

    n = B * Ho * Wo
    s1, h1 = _bn_finalize(st1, g1, b1, n)

    # bn1 affine + relu + conv2 + BN2 partial stats, all fused in one kernel
    out2, st2 = _bn_relu_conv2(out1, s1, h1, w2, cdt)
    s2, h2 = _bn_finalize(st2, g2, b2, n)

    if has_down:
        gd = _pad_c(params["down_bn_gamma"], Cpo)
        bd = _pad_c(params["down_bn_beta"], Cpo)
        sd, hd = _bn_finalize(std, gd, bd, n)
    else:
        sd = jnp.ones((1, Cpo), jnp.float32)
        hd = jnp.zeros((1, Cpo), jnp.float32)

    # bn2 + downsample-BN affine + residual add + relu, one fused elementwise kernel
    out = _bn_add_relu(out2, resid, s2, h2, sd, hd)

    return jnp.transpose(out[:, :, :, :Cout], (0, 3, 1, 2))          # back to NCHW


# ----------------------------- pure-JAX reference ----------------------------- #

def basic_block_ref(x, params, stride=1):
    def bn(y, g, b):
        mean = jnp.mean(y, axis=(0, 2, 3), keepdims=True)
        var = jnp.mean(jnp.square(y - mean), axis=(0, 2, 3), keepdims=True)
        return ((y - mean) * jax.lax.rsqrt(var + _BN_EPS)
                * g.reshape(1, -1, 1, 1) + b.reshape(1, -1, 1, 1))

    def conv(y, w, s, p):
        return jax.lax.conv_general_dilated(
            y, w, (s, s), ((p, p), (p, p)),
            dimension_numbers=("NCHW", "OIHW", "NCHW"),
            precision=jax.lax.Precision.HIGHEST)

    if params.get("down_w") is not None:
        residual = bn(conv(x, params["down_w"], stride, 0),
                      params["down_bn_gamma"], params["down_bn_beta"])
    else:
        residual = x
    out = jax.nn.relu(bn(conv(x, params["conv1_w"], stride, 1),
                         params["bn1_gamma"], params["bn1_beta"]))
    out = bn(conv(out, params["conv2_w"], 1, 1),
             params["bn2_gamma"], params["bn2_beta"])
    return jax.nn.relu(out + residual)


# ----------------------------------- main ------------------------------------- #

if __name__ == "__main__":
    key = jax.random.PRNGKey(0)

    def make_params(k, inplanes, planes, downsample):
        ks = jax.random.split(k, 9)
        p = {
            "conv1_w": 0.2 * jax.random.normal(ks[0], (planes, inplanes, 3, 3), jnp.float32),
            "conv2_w": 0.2 * jax.random.normal(ks[1], (planes, planes, 3, 3), jnp.float32),
            "bn1_gamma": 1.0 + 0.1 * jax.random.normal(ks[2], (planes,), jnp.float32),
            "bn1_beta": 0.1 * jax.random.normal(ks[3], (planes,), jnp.float32),
            "bn2_gamma": 1.0 + 0.1 * jax.random.normal(ks[4], (planes,), jnp.float32),
            "bn2_beta": 0.1 * jax.random.normal(ks[5], (planes,), jnp.float32),
        }
        if downsample:
            p["down_w"] = 0.2 * jax.random.normal(ks[6], (planes, inplanes, 1, 1), jnp.float32)
            p["down_bn_gamma"] = 1.0 + 0.1 * jax.random.normal(ks[7], (planes,), jnp.float32)
            p["down_bn_beta"] = 0.1 * jax.random.normal(ks[8], (planes,), jnp.float32)
        return p

    kA, kB, kC, kx1, kx2, kx3 = jax.random.split(key, 6)
    B, H, W = 2, 16, 16

    # Config A: inplanes != planes -> downsample (1x1 conv + BN), stride 2. f32 path.
    xA = jax.random.normal(kx1, (B, 4, H, W), jnp.float32)
    pA = make_params(kA, 4, 8, downsample=True)
    fwdA = jax.jit(functools.partial(basic_block_pallas, stride=2,
                                     compute_dtype=jnp.float32))
    outA = jax.block_until_ready(fwdA(xA, pA))
    assert outA.shape == (B, 8, H // 2, W // 2), outA.shape
    refA = basic_block_ref(xA, pA, stride=2)
    errA = float(jnp.max(jnp.abs(outA - refA)))
    assert errA < 2e-3, f"config A max abs err {errA}"

    # Config B: inplanes == planes -> identity residual, stride 1. f32 path.
    xB = jax.random.normal(kx2, (B, 8, H, W), jnp.float32)
    pB = make_params(kB, 8, 8, downsample=False)
    fwdB = jax.jit(functools.partial(basic_block_pallas, stride=1,
                                     compute_dtype=jnp.float32))
    outB = jax.block_until_ready(fwdB(xB, pB))
    assert outB.shape == (B, 8, H, W), outB.shape
    refB = basic_block_ref(xB, pB, stride=1)
    errB = float(jnp.max(jnp.abs(outB - refB)))
    assert errB < 2e-3, f"config B max abs err {errB}"

    # Config C: inplanes != planes, stride 1 -> fused stride-1 conv1 + 1x1 downsample.
    xC = jax.random.normal(kx3, (B, 4, H, W), jnp.float32)
    pC = make_params(kC, 4, 8, downsample=True)
    fwdC = jax.jit(functools.partial(basic_block_pallas, stride=1,
                                     compute_dtype=jnp.float32))
    outC = jax.block_until_ready(fwdC(xC, pC))
    assert outC.shape == (B, 8, H, W), outC.shape
    refC = basic_block_ref(xC, pC, stride=1)
    errC = float(jnp.max(jnp.abs(outC - refC)))
    assert errC < 2e-3, f"config C max abs err {errC}"

    # Config A with the default bf16 conv-operand / intermediate path
    # (f32 accumulation, f32 BN stats). Loose tolerance covers bf16 rounding only.
    fwdA16 = jax.jit(functools.partial(basic_block_pallas, stride=2))
    outA16 = jax.block_until_ready(fwdA16(xA, pA))
    err16 = float(jnp.max(jnp.abs(outA16 - refA)))
    assert err16 < 3e-1, f"config A (bf16) max abs err {err16}"

    print("KERNEL_OK")
</pallas_src>

<mosaic_0001>
module attributes {stable_mosaic.version = 11 : i64} {
  func.func @conv1_phase_down_kernel(%arg0: i32, %arg1: memref<1x4x9x9x128xf32, #tpu.memory_space<vmem>>, %arg2: memref<1152x128xf32, #tpu.memory_space<vmem>>, %arg3: memref<128x128xf32, #tpu.memory_space<vmem>>, %arg4: memref<1x8x8x128xf32, #tpu.memory_space<vmem>>, %arg5: memref<1x2x128xf32, #tpu.memory_space<vmem>>, %arg6: memref<1x8x8x128xf32, #tpu.memory_space<vmem>>, %arg7: memref<1x2x128xf32, #tpu.memory_space<vmem>>) attributes {dimension_semantics = [#tpu.dimension_semantics<parallel>], iteration_bounds = array<i64: 2>, scalar_prefetch = 0 : i64, scratch_operands = 0 : i64, tpu.core_type = #tpu.core_type<tc>, window_params = [{transform_indices = @transform_0, window_bounds = array<i64: 1, 4, 9, 9, 128>}, {pipeline_mode = #tpu.pipeline_mode<synchronous>, transform_indices = @transform_1, window_bounds = array<i64: 1152, 128>}, {pipeline_mode = #tpu.pipeline_mode<synchronous>, transform_indices = @transform_2, window_bounds = array<i64: 128, 128>}, {transform_indices = @transform_3, window_bounds = array<i64: 1, 8, 8, 128>}, {transform_indices = @transform_4, window_bounds = array<i64: 1, 2, 128>}, {transform_indices = @transform_5, window_bounds = array<i64: 1, 8, 8, 128>}, {transform_indices = @transform_6, window_bounds = array<i64: 1, 2, 128>}]} {
    %cst = arith.constant 0.000000e+00 : f32
    %0 = vector.broadcast %cst : f32 to vector<64x128xf32>
    %c0 = arith.constant 0 : index
    %c0_0 = arith.constant 0 : index
    %c0_1 = arith.constant 0 : index
    %c0_2 = arith.constant 0 : index
    %c0_3 = arith.constant 0 : index
    %1 = vector.load %arg1[%c0, %c0_0, %c0_1, %c0_2, %c0_3] : memref<1x4x9x9x128xf32, #tpu.memory_space<vmem>>, vector<1x1x8x8x128xf32>
    %2 = vector.shape_cast %1 : vector<1x1x8x8x128xf32> to vector<8x8x128xf32>
    %3 = vector.shape_cast %2 : vector<8x8x128xf32> to vector<64x128xf32>
    %c0_4 = arith.constant 0 : index
    %c0_5 = arith.constant 0 : index
    %4 = vector.load %arg2[%c0_4, %c0_5] : memref<1152x128xf32, #tpu.memory_space<vmem>>, vector<128x128xf32>
    %cst_6 = arith.constant dense<0.000000e+00> : vector<64x128xf32>
    %5 = tpu.matmul %3, %4, %cst_6 {dimension_numbers = #tpu.dot_dimension_numbers<[1], [0], [0], [1], [0, 0, 1, 1], [], []>} : vector<64x128xf32>, vector<128x128xf32>, vector<64x128xf32> -> vector<64x128xf32>
    %6 = arith.addf %0, %5 : vector<64x128xf32>
    %c0_7 = arith.constant 0 : index
    %c1 = arith.constant 1 : index
    %c0_8 = arith.constant 0 : index
    %c0_9 = arith.constant 0 : index
    %c0_10 = arith.constant 0 : index
    %7 = vector.load %arg1[%c0_7, %c1, %c0_8, %c0_9, %c0_10] : memref<1x4x9x9x128xf32, #tpu.memory_space<vmem>>, vector<1x1x8x8x128xf32>
    %8 = vector.shape_cast %7 : vector<1x1x8x8x128xf32> to vector<8x8x128xf32>
    %9 = vector.shape_cast %8 : vector<8x8x128xf32> to vector<64x128xf32>
    %c128 = arith.constant 128 : index
    %c0_11 = arith.constant 0 : index
    %10 = vector.load %arg2[%c128, %c0_11] : memref<1152x128xf32, #tpu.memory_space<vmem>>, vector<128x128xf32>
    %cst_12 = arith.constant dense<0.000000e+00> : vector<64x128xf32>
    %11 = tpu.matmul %9, %10, %cst_12 {dimension_numbers = #tpu.dot_dimension_numbers<[1], [0], [0], [1], [0, 0, 1, 1], [], []>} : vector<64x128xf32>, vector<128x128xf32>, vector<64x128xf32> -> vector<64x128xf32>
    %12 = arith.addf %6, %11 : vector<64x128xf32>
    %c0_13 = arith.constant 0 : index
    %c0_14 = arith.constant 0 : index
    %c0_15 = arith.constant 0 : index
    %c1_16 = arith.constant 1 : index
    %c0_17 = arith.constant 0 : index
    %13 = vector.load %arg1[%c0_13, %c0_14, %c0_15, %c1_16, %c0_17] : memref<1x4x9x9x128xf32, #tpu.memory_space<vmem>>, vector<1x1x8x8x128xf32>
    %14 = vector.shape_cast %13 : vector<1x1x8x8x128xf32> to vector<8x8x128xf32>
    %15 = vector.shape_cast %14 : vector<8x8x128xf32> to vector<64x128xf32>
    %c256 = arith.constant 256 : index
    %c0_18 = arith.constant 0 : index
    %16 = vector.load %arg2[%c256, %c0_18] : memref<1152x128xf32, #tpu.memory_space<vmem>>, vector<128x128xf32>
    %cst_19 = arith.constant dense<0.000000e+00> : vector<64x128xf32>
    %17 = tpu.matmul %15, %16, %cst_19 {dimension_numbers = #tpu.dot_dimension_numbers<[1], [0], [0], [1], [0, 0, 1, 1], [], []>} : vector<64x128xf32>, vector<128x128xf32>, vector<64x128xf32> -> vector<64x128xf32>
    %18 = arith.addf %12, %17 : vector<64x128xf32>
    %c0_20 = arith.constant 0 : index
    %c2 = arith.constant 2 : index
    %c0_21 = arith.constant 0 : index
    %c0_22 = arith.constant 0 : index
    %c0_23 = arith.constant 0 : index
    %19 = vector.load %arg1[%c0_20, %c2, %c0_21, %c0_22, %c0_23] : memref<1x4x9x9x128xf32, #tpu.memory_space<vmem>>, vector<1x1x8x8x128xf32>
    %20 = vector.shape_cast %19 : vector<1x1x8x8x128xf32> to vector<8x8x128xf32>
    %21 = vector.shape_cast %20 : vector<8x8x128xf32> to vector<64x128xf32>
    %c384 = arith.constant 384 : index
    %c0_24 = arith.constant 0 : index
    %22 = vector.load %arg2[%c384, %c0_24] : memref<1152x128xf32, #tpu.memory_space<vmem>>, vector<128x128xf32>
    %cst_25 = arith.constant dense<0.000000e+00> : vector<64x128xf32>
    %23 = tpu.matmul %21, %22, %cst_25 {dimension_numbers = #tpu.dot_dimension_numbers<[1], [0], [0], [1], [0, 0, 1, 1], [], []>} : vector<64x128xf32>, vector<128x128xf32>, vector<64x128xf32> -> vector<64x128xf32>
    %24 = arith.addf %18, %23 : vector<64x128xf32>
    %c0_26 = arith.constant 0 : index
    %c3 = arith.constant 3 : index
    %c0_27 = arith.constant 0 : index
    %c0_28 = arith.constant 0 : index
    %c0_29 = arith.constant 0 : index
    %25 = vector.load %arg1[%c0_26, %c3, %c0_27, %c0_28, %c0_29] : memref<1x4x9x9x128xf32, #tpu.memory_space<vmem>>, vector<1x1x8x8x128xf32>
    %26 = vector.shape_cast %25 : vector<1x1x8x8x128xf32> to vector<8x8x128xf32>
    %27 = vector.shape_cast %26 : vector<8x8x128xf32> to vector<64x128xf32>
    %c512 = arith.constant 512 : index
    %c0_30 = arith.constant 0 : index
    %28 = vector.load %arg2[%c512, %c0_30] : memref<1152x128xf32, #tpu.memory_space<vmem>>, vector<128x128xf32>
    %cst_31 = arith.constant dense<0.000000e+00> : vector<64x128xf32>
    %29 = tpu.matmul %27, %28, %cst_31 {dimension_numbers = #tpu.dot_dimension_numbers<[1], [0], [0], [1], [0, 0, 1, 1], [], []>} : vector<64x128xf32>, vector<128x128xf32>, vector<64x128xf32> -> vector<64x128xf32>
    %30 = arith.addf %24, %29 : vector<64x128xf32>
    %c0_32 = arith.constant 0 : index
    %c2_33 = arith.constant 2 : index
    %c0_34 = arith.constant 0 : index
    %c1_35 = arith.constant 1 : index
    %c0_36 = arith.constant 0 : index
    %31 = vector.load %arg1[%c0_32, %c2_33, %c0_34, %c1_35, %c0_36] : memref<1x4x9x9x128xf32, #tpu.memory_space<vmem>>, vector<1x1x8x8x128xf32>
    %32 = vector.shape_cast %31 : vector<1x1x8x8x128xf32> to vector<8x8x128xf32>
    %33 = vector.shape_cast %32 : vector<8x8x128xf32> to vector<64x128xf32>
    %c640 = arith.constant 640 : index
    %c0_37 = arith.constant 0 : index
    %34 = vector.load %arg2[%c640, %c0_37] : memref<1152x128xf32, #tpu.memory_space<vmem>>, vector<128x128xf32>
    %cst_38 = arith.constant dense<0.000000e+00> : vector<64x128xf32>
    %35 = tpu.matmul %33, %34, %cst_38 {dimension_numbers = #tpu.dot_dimension_numbers<[1], [0], [0], [1], [0, 0, 1, 1], [], []>} : vector<64x128xf32>, vector<128x128xf32>, vector<64x128xf32> -> vector<64x128xf32>
    %36 = arith.addf %30, %35 : vector<64x128xf32>
    %c0_39 = arith.constant 0 : index
    %c0_40 = arith.constant 0 : index
    %c1_41 = arith.constant 1 : index
    %c0_42 = arith.constant 0 : index
    %c0_43 = arith.constant 0 : index
    %37 = vector.load %arg1[%c0_39, %c0_40, %c1_41, %c0_42, %c0_43] : memref<1x4x9x9x128xf32, #tpu.memory_space<vmem>>, vector<1x1x8x8x128xf32>
    %38 = vector.shape_cast %37 : vector<1x1x8x8x128xf32> to vector<8x8x128xf32>
    %39 = vector.shape_cast %38 : vector<8x8x128xf32> to vector<64x128xf32>
    %c768 = arith.constant 768 : index
    %c0_44 = arith.constant 0 : index
    %40 = vector.load %arg2[%c768, %c0_44] : memref<1152x128xf32, #tpu.memory_space<vmem>>, vector<128x128xf32>
    %cst_45 = arith.constant dense<0.000000e+00> : vector<64x128xf32>
    %41 = tpu.matmul %39, %40, %cst_45 {dimension_numbers = #tpu.dot_dimension_numbers<[1], [0], [0], [1], [0, 0, 1, 1], [], []>} : vector<64x128xf32>, vector<128x128xf32>, vector<64x128xf32> -> vector<64x128xf32>
    %42 = arith.addf %36, %41 : vector<64x128xf32>
    %c0_46 = arith.constant 0 : index
    %c1_47 = arith.constant 1 : index
    %c1_48 = arith.constant 1 : index
    %c0_49 = arith.constant 0 : index
    %c0_50 = arith.constant 0 : index
    %43 = vector.load %arg1[%c0_46, %c1_47, %c1_48, %c0_49, %c0_50] : memref<1x4x9x9x128xf32, #tpu.memory_space<vmem>>, vector<1x1x8x8x128xf32>
    %44 = vector.shape_cast %43 : vector<1x1x8x8x128xf32> to vector<8x8x128xf32>
    %45 = vector.shape_cast %44 : vector<8x8x128xf32> to vector<64x128xf32>
    %c896 = arith.constant 896 : index
    %c0_51 = arith.constant 0 : index
    %46 = vector.load %arg2[%c896, %c0_51] : memref<1152x128xf32, #tpu.memory_space<vmem>>, vector<128x128xf32>
    %cst_52 = arith.constant dense<0.000000e+00> : vector<64x128xf32>
    %47 = tpu.matmul %45, %46, %cst_52 {dimension_numbers = #tpu.dot_dimension_numbers<[1], [0], [0], [1], [0, 0, 1, 1], [], []>} : vector<64x128xf32>, vector<128x128xf32>, vector<64x128xf32> -> vector<64x128xf32>
    %48 = arith.addf %42, %47 : vector<64x128xf32>
    %c0_53 = arith.constant 0 : index
    %c0_54 = arith.constant 0 : index
    %c1_55 = arith.constant 1 : index
    %c1_56 = arith.constant 1 : index
    %c0_57 = arith.constant 0 : index
    %49 = vector.load %arg1[%c0_53, %c0_54, %c1_55, %c1_56, %c0_57] : memref<1x4x9x9x128xf32, #tpu.memory_space<vmem>>, vector<1x1x8x8x128xf32>
    %50 = vector.shape_cast %49 : vector<1x1x8x8x128xf32> to vector<8x8x128xf32>
    %51 = vector.shape_cast %50 : vector<8x8x128xf32> to vector<64x128xf32>
    %c1024 = arith.constant 1024 : index
    %c0_58 = arith.constant 0 : index
    %52 = vector.load %arg2[%c1024, %c0_58] : memref<1152x128xf32, #tpu.memory_space<vmem>>, vector<128x128xf32>
    %cst_59 = arith.constant dense<0.000000e+00> : vector<64x128xf32>
    %53 = tpu.matmul %51, %52, %cst_59 {dimension_numbers = #tpu.dot_dimension_numbers<[1], [0], [0], [1], [0, 0, 1, 1], [], []>} : vector<64x128xf32>, vector<128x128xf32>, vector<64x128xf32> -> vector<64x128xf32>
    %54 = arith.addf %48, %53 : vector<64x128xf32>
    %55 = vector.shape_cast %54 : vector<64x128xf32> to vector<8x8x128xf32>
    %c0_60 = arith.constant 0 : index
    %c0_61 = arith.constant 0 : index
    %c0_62 = arith.constant 0 : index
    %c0_63 = arith.constant 0 : index
    %56 = vector.load %arg4[%c0_60, %c0_61, %c0_62, %c0_63] : memref<1x8x8x128xf32, #tpu.memory_space<vmem>>, vector<1x8x8x128xf32>
    %57 = vector.shape_cast %56 : vector<1x8x8x128xf32> to vector<8x8x128xf32>
    %58 = vector.shape_cast %55 : vector<8x8x128xf32> to vector<1x8x8x128xf32>
    tpu.vector_store %arg4[%c0_60, %c0_61, %c0_62, %c0_63], %58 {strides = array<i32>} : memref<1x8x8x128xf32, #tpu.memory_space<vmem>>, vector<1x8x8x128xf32>,
    %cst_64 = arith.constant dense<0.000000e+00> : vector<128xf32>
    %59 = vector.multi_reduction <add>, %54, %cst_64 [0] : vector<64x128xf32> to vector<128xf32>
    %60 = vector.shape_cast %59 : vector<128xf32> to vector<1x128xf32>
    %c0_65 = arith.constant 0 : index
    %c0_66 = arith.constant 0 : index
    %c0_67 = arith.constant 0 : index
    %61 = vector.load %arg5[%c0_65, %c0_66, %c0_67] : memref<1x2x128xf32, #tpu.memory_space<vmem>>, vector<1x1x128xf32>
    %62 = vector.shape_cast %61 : vector<1x1x128xf32> to vector<1x128xf32>
    %63 = vector.shape_cast %60 : vector<1x128xf32> to vector<1x1x128xf32>
    tpu.vector_store %arg5[%c0_65, %c0_66, %c0_67], %63 {strides = array<i32>} : memref<1x2x128xf32, #tpu.memory_space<vmem>>, vector<1x1x128xf32>,
    %64 = arith.mulf %54, %54 : vector<64x128xf32>
    %cst_68 = arith.constant dense<0.000000e+00> : vector<128xf32>
    %65 = vector.multi_reduction <add>, %64, %cst_68 [0] : vector<64x128xf32> to vector<128xf32>
    %66 = vector.shape_cast %65 : vector<128xf32> to vector<1x128xf32>
    %c0_69 = arith.constant 0 : index
    %c1_70 = arith.constant 1 : index
    %c0_71 = arith.constant 0 : index
    %67 = vector.load %arg5[%c0_69, %c1_70, %c0_71] : memref<1x2x128xf32, #tpu.memory_space<vmem>>, vector<1x1x128xf32>
    %68 = vector.shape_cast %67 : vector<1x1x128xf32> to vector<1x128xf32>
    %69 = vector.shape_cast %66 : vector<1x128xf32> to vector<1x1x128xf32>
    tpu.vector_store %arg5[%c0_69, %c1_70, %c0_71], %69 {strides = array<i32>} : memref<1x2x128xf32, #tpu.memory_space<vmem>>, vector<1x1x128xf32>,
    %c0_72 = arith.constant 0 : index
    %c3_73 = arith.constant 3 : index
    %c0_74 = arith.constant 0 : index
    %c0_75 = arith.constant 0 : index
    %c0_76 = arith.constant 0 : index
    %70 = vector.load %arg1[%c0_72, %c3_73, %c0_74, %c0_75, %c0_76] : memref<1x4x9x9x128xf32, #tpu.memory_space<vmem>>, vector<1x1x8x8x128xf32>
    %71 = vector.shape_cast %70 : vector<1x1x8x8x128xf32> to vector<8x8x128xf32>
    %72 = vector.shape_cast %71 : vector<8x8x128xf32> to vector<64x128xf32>
    %c0_77 = arith.constant 0 : index
    %c0_78 = arith.constant 0 : index
    %73 = vector.load %arg3[%c0_77, %c0_78] : memref<128x128xf32, #tpu.memory_space<vmem>>, vector<128x128xf32>
    %cst_79 = arith.constant dense<0.000000e+00> : vector<64x128xf32>
    %74 = tpu.matmul %72, %73, %cst_79 {dimension_numbers = #tpu.dot_dimension_numbers<[1], [0], [0], [1], [0, 0, 1, 1], [], []>} : vector<64x128xf32>, vector<128x128xf32>, vector<64x128xf32> -> vector<64x128xf32>
    %75 = vector.shape_cast %74 : vector<64x128xf32> to vector<8x8x128xf32>
    %c0_80 = arith.constant 0 : index
    %c0_81 = arith.constant 0 : index
    %c0_82 = arith.constant 0 : index
    %c0_83 = arith.constant 0 : index
    %76 = vector.load %arg6[%c0_80, %c0_81, %c0_82, %c0_83] : memref<1x8x8x128xf32, #tpu.memory_space<vmem>>, vector<1x8x8x128xf32>
    %77 = vector.shape_cast %76 : vector<1x8x8x128xf32> to vector<8x8x128xf32>
    %78 = vector.shape_cast %75 : vector<8x8x128xf32> to vector<1x8x8x128xf32>
    tpu.vector_store %arg6[%c0_80, %c0_81, %c0_82, %c0_83], %78 {strides = array<i32>} : memref<1x8x8x128xf32, #tpu.memory_space<vmem>>, vector<1x8x8x128xf32>,
    %cst_84 = arith.constant dense<0.000000e+00> : vector<128xf32>
    %79 = vector.multi_reduction <add>, %74, %cst_84 [0] : vector<64x128xf32> to vector<128xf32>
    %80 = vector.shape_cast %79 : vector<128xf32> to vector<1x128xf32>
    %c0_85 = arith.constant 0 : index
    %c0_86 = arith.constant 0 : index
    %c0_87 = arith.constant 0 : index
    %81 = vector.load %arg7[%c0_85, %c0_86, %c0_87] : memref<1x2x128xf32, #tpu.memory_space<vmem>>, vector<1x1x128xf32>
    %82 = vector.shape_cast %81 : vector<1x1x128xf32> to vector<1x128xf32>
    %83 = vector.shape_cast %80 : vector<1x128xf32> to vector<1x1x128xf32>
    tpu.vector_store %arg7[%c0_85, %c0_86, %c0_87], %83 {strides = array<i32>} : memref<1x2x128xf32, #tpu.memory_space<vmem>>, vector<1x1x128xf32>,
    %84 = arith.mulf %74, %74 : vector<64x128xf32>
    %cst_88 = arith.constant dense<0.000000e+00> : vector<128xf32>
    %85 = vector.multi_reduction <add>, %84, %cst_88 [0] : vector<64x128xf32> to vector<128xf32>
    %86 = vector.shape_cast %85 : vector<128xf32> to vector<1x128xf32>
    %c0_89 = arith.constant 0 : index
    %c1_90 = arith.constant 1 : index
    %c0_91 = arith.constant 0 : index
    %87 = vector.load %arg7[%c0_89, %c1_90, %c0_91] : memref<1x2x128xf32, #tpu.memory_space<vmem>>, vector<1x1x128xf32>
    %88 = vector.shape_cast %87 : vector<1x1x128xf32> to vector<1x128xf32>
    %89 = vector.shape_cast %86 : vector<1x128xf32> to vector<1x1x128xf32>
    tpu.vector_store %arg7[%c0_89, %c1_90, %c0_91], %89 {strides = array<i32>} : memref<1x2x128xf32, #tpu.memory_space<vmem>>, vector<1x1x128xf32>,
    return
  }
  func.func @transform_0(%arg0: i32) -> (i32, i32, i32, i32, i32) {
    %c0_i32 = arith.constant 0 : i32
    %c0_i32_0 = arith.constant 0 : i32
    %c0_i32_1 = arith.constant 0 : i32
    %c0_i32_2 = arith.constant 0 : i32
    %c0_i32_3 = arith.constant 0 : i32
    return %arg0, %c0_i32, %c0_i32_0, %c0_i32_1, %c0_i32_2 : i32, i32, i32, i32, i32
  }
  func.func @transform_1(%arg0: i32) -> (i32, i32) {
    %c0_i32 = arith.constant 0 : i32
    %c0_i32_0 = arith.constant 0 : i32
    %c0_i32_1 = arith.constant 0 : i32
    return %c0_i32, %c0_i32_0 : i32, i32
  }
  func.func @transform_2(%arg0: i32) -> (i32, i32) {
    %c0_i32 = arith.constant 0 : i32
    %c0_i32_0 = arith.constant 0 : i32
    %c0_i32_1 = arith.constant 0 : i32
    return %c0_i32, %c0_i32_0 : i32, i32
  }
  func.func @transform_3(%arg0: i32) -> (i32, i32, i32, i32) {
    %c0_i32 = arith.constant 0 : i32
    %c0_i32_0 = arith.constant 0 : i32
    %c0_i32_1 = arith.constant 0 : i32
    %c0_i32_2 = arith.constant 0 : i32
    return %arg0, %c0_i32, %c0_i32_0, %c0_i32_1 : i32, i32, i32, i32
  }
  func.func @transform_4(%arg0: i32) -> (i32, i32, i32) {
    %c0_i32 = arith.constant 0 : i32
    %c0_i32_0 = arith.constant 0 : i32
    %c0_i32_1 = arith.constant 0 : i32
    return %arg0, %c0_i32, %c0_i32_0 : i32, i32, i32
  }
  func.func @transform_5(%arg0: i32) -> (i32, i32, i32, i32) {
    %c0_i32 = arith.constant 0 : i32
    %c0_i32_0 = arith.constant 0 : i32
    %c0_i32_1 = arith.constant 0 : i32
    %c0_i32_2 = arith.constant 0 : i32
    return %arg0, %c0_i32, %c0_i32_0, %c0_i32_1 : i32, i32, i32, i32
  }
  func.func @transform_6(%arg0: i32) -> (i32, i32, i32) {
    %c0_i32 = arith.constant 0 : i32
    %c0_i32_0 = arith.constant 0 : i32
    %c0_i32_1 = arith.constant 0 : i32
    return %arg0, %c0_i32, %c0_i32_0 : i32, i32, i32
  }
}

module attributes {stable_mosaic.version = 11 : i64} {
  func.func @bn_relu_conv2_kernel(%arg0: i32, %arg1: memref<1x8x8x128xf32, #tpu.memory_space<vmem>>, %arg2: memref<1x128xf32, #tpu.memory_space<vmem>>, %arg3: memref<1x128xf32, #tpu.memory_space<vmem>>, %arg4: memref<1152x128xf32, #tpu.memory_space<vmem>>, %arg5: memref<1x8x8x128xf32, #tpu.memory_space<vmem>>, %arg6: memref<1x2x128xf32, #tpu.memory_space<vmem>>, %arg7: memref<10x10x128xf32, #tpu.memory_space<vmem>>) attributes {dimension_semantics = [#tpu.dimension_semantics<parallel>], iteration_bounds = array<i64: 2>, scalar_prefetch = 0 : i64, scratch_operands = 1 : i64, tpu.core_type = #tpu.core_type<tc>, window_params = [{transform_indices = @transform_0, window_bounds = array<i64: 1, 8, 8, 128>}, {pipeline_mode = #tpu.pipeline_mode<synchronous>, transform_indices = @transform_1, window_bounds = array<i64: 1, 128>}, {pipeline_mode = #tpu.pipeline_mode<synchronous>, transform_indices = @transform_2, window_bounds = array<i64: 1, 128>}, {pipeline_mode = #tpu.pipeline_mode<synchronous>, transform_indices = @transform_3, window_bounds = array<i64: 1152, 128>}, {transform_indices = @transform_4, window_bounds = array<i64: 1, 8, 8, 128>}, {transform_indices = @transform_5, window_bounds = array<i64: 1, 2, 128>}]} {
    %c0 = arith.constant 0 : index
    %c0_0 = arith.constant 0 : index
    %c0_1 = arith.constant 0 : index
    %c0_2 = arith.constant 0 : index
    %0 = vector.load %arg1[%c0, %c0_0, %c0_1, %c0_2] : memref<1x8x8x128xf32, #tpu.memory_space<vmem>>, vector<1x8x8x128xf32>
    %1 = vector.shape_cast %0 : vector<1x8x8x128xf32> to vector<8x8x128xf32>
    %c0_3 = arith.constant 0 : index
    %c0_4 = arith.constant 0 : index
    %2 = vector.load %arg2[%c0_3, %c0_4] : memref<1x128xf32, #tpu.memory_space<vmem>>, vector<1x128xf32>
    %3 = vector.shape_cast %2 : vector<1x128xf32> to vector<1x1x128xf32>
    %4 = vector.broadcast %3 : vector<1x1x128xf32> to vector<8x8x128xf32>
    %5 = arith.mulf %1, %4 : vector<8x8x128xf32>
    %c0_5 = arith.constant 0 : index
    %c0_6 = arith.constant 0 : index
    %6 = vector.load %arg3[%c0_5, %c0_6] : memref<1x128xf32, #tpu.memory_space<vmem>>, vector<1x128xf32>
    %7 = vector.shape_cast %6 : vector<1x128xf32> to vector<1x1x128xf32>
    %8 = vector.broadcast %7 : vector<1x1x128xf32> to vector<8x8x128xf32>
    %9 = arith.addf %5, %8 : vector<8x8x128xf32>
    %cst = arith.constant 0.000000e+00 : f32
    %10 = vector.broadcast %cst : f32 to vector<8x8x128xf32>
    %11 = arith.maximumf %9, %10 : vector<8x8x128xf32>
    %cst_7 = arith.constant 0.000000e+00 : f32
    %12 = vector.broadcast %cst_7 : f32 to vector<1x10x128xf32>
    %cst_8 = arith.constant 0.000000e+00 : f32
    %13 = vector.broadcast %cst_8 : f32 to vector<10x1x128xf32>
    %c0_9 = arith.constant 0 : index
    %c0_10 = arith.constant 0 : index
    %c0_11 = arith.constant 0 : index
    %14 = vector.load %arg7[%c0_9, %c0_10, %c0_11] : memref<10x10x128xf32, #tpu.memory_space<vmem>>, vector<1x10x128xf32>
    tpu.vector_store %arg7[%c0_9, %c0_10, %c0_11], %12 {strides = array<i32>} : memref<10x10x128xf32, #tpu.memory_space<vmem>>, vector<1x10x128xf32>,
    %c9 = arith.constant 9 : index
    %c0_12 = arith.constant 0 : index
    %c0_13 = arith.constant 0 : index
    %15 = vector.load %arg7[%c9, %c0_12, %c0_13] : memref<10x10x128xf32, #tpu.memory_space<vmem>>, vector<1x10x128xf32>
    tpu.vector_store %arg7[%c9, %c0_12, %c0_13], %12 {strides = array<i32>} : memref<10x10x128xf32, #tpu.memory_space<vmem>>, vector<1x10x128xf32>,
    %c0_14 = arith.constant 0 : index
    %c0_15 = arith.constant 0 : index
    %c0_16 = arith.constant 0 : index
    %16 = vector.load %arg7[%c0_14, %c0_15, %c0_16] : memref<10x10x128xf32, #tpu.memory_space<vmem>>, vector<10x1x128xf32>
    tpu.vector_store %arg7[%c0_14, %c0_15, %c0_16], %13 {strides = array<i32>} : memref<10x10x128xf32, #tpu.memory_space<vmem>>, vector<10x1x128xf32>,
    %c0_17 = arith.constant 0 : index
    %c9_18 = arith.constant 9 : index
    %c0_19 = arith.constant 0 : index
    %17 = vector.load %arg7[%c0_17, %c9_18, %c0_19] : memref<10x10x128xf32, #tpu.memory_space<vmem>>, vector<10x1x128xf32>
    tpu.vector_store %arg7[%c0_17, %c9_18, %c0_19], %13 {strides = array<i32>} : memref<10x10x128xf32, #tpu.memory_space<vmem>>, vector<10x1x128xf32>,
    %c1 = arith.constant 1 : index
    %c1_20 = arith.constant 1 : index
    %c0_21 = arith.constant 0 : index
    %18 = vector.load %arg7[%c1, %c1_20, %c0_21] : memref<10x10x128xf32, #tpu.memory_space<vmem>>, vector<8x8x128xf32>
    tpu.vector_store %arg7[%c1, %c1_20, %c0_21], %11 {strides = array<i32>} : memref<10x10x128xf32, #tpu.memory_space<vmem>>, vector<8x8x128xf32>,
    %cst_22 = arith.constant 0.000000e+00 : f32
    %19 = vector.broadcast %cst_22 : f32 to vector<64x128xf32>
    %c0_23 = arith.constant 0 : index
    %c0_24 = arith.constant 0 : index
    %c0_25 = arith.constant 0 : index
    %20 = vector.load %arg7[%c0_23, %c0_24, %c0_25] : memref<10x10x128xf32, #tpu.memory_space<vmem>>, vector<8x8x128xf32>
    %21 = vector.shape_cast %20 : vector<8x8x128xf32> to vector<64x128xf32>
    %c0_26 = arith.constant 0 : index
    %c0_27 = arith.constant 0 : index
    %22 = vector.load %arg4[%c0_26, %c0_27] : memref<1152x128xf32, #tpu.memory_space<vmem>>, vector<128x128xf32>
    %cst_28 = arith.constant dense<0.000000e+00> : vector<64x128xf32>
    %23 = tpu.matmul %21, %22, %cst_28 {dimension_numbers = #tpu.dot_dimension_numbers<[1], [0], [0], [1], [0, 0, 1, 1], [], []>} : vector<64x128xf32>, vector<128x128xf32>, vector<64x128xf32> -> vector<64x128xf32>
    %24 = arith.addf %19, %23 : vector<64x128xf32>
    %c0_29 = arith.constant 0 : index
    %c1_30 = arith.constant 1 : index
    %c0_31 = arith.constant 0 : index
    %25 = vector.load %arg7[%c0_29, %c1_30, %c0_31] : memref<10x10x128xf32, #tpu.memory_space<vmem>>, vector<8x8x128xf32>
    %26 = vector.shape_cast %25 : vector<8x8x128xf32> to vector<64x128xf32>
    %c128 = arith.constant 128 : index
    %c0_32 = arith.constant 0 : index
    %27 = vector.load %arg4[%c128, %c0_32] : memref<1152x128xf32, #tpu.memory_space<vmem>>, vector<128x128xf32>
    %cst_33 = arith.constant dense<0.000000e+00> : vector<64x128xf32>
    %28 = tpu.matmul %26, %27, %cst_33 {dimension_numbers = #tpu.dot_dimension_numbers<[1], [0], [0], [1], [0, 0, 1, 1], [], []>} : vector<64x128xf32>, vector<128x128xf32>, vector<64x128xf32> -> vector<64x128xf32>
    %29 = arith.addf %24, %28 : vector<64x128xf32>
    %c0_34 = arith.constant 0 : index
    %c2 = arith.constant 2 : index
    %c0_35 = arith.constant 0 : index
    %30 = vector.load %arg7[%c0_34, %c2, %c0_35] : memref<10x10x128xf32, #tpu.memory_space<vmem>>, vector<8x8x128xf32>
    %31 = vector.shape_cast %30 : vector<8x8x128xf32> to vector<64x128xf32>
    %c256 = arith.constant 256 : index
    %c0_36 = arith.constant 0 : index
    %32 = vector.load %arg4[%c256, %c0_36] : memref<1152x128xf32, #tpu.memory_space<vmem>>, vector<128x128xf32>
    %cst_37 = arith.constant dense<0.000000e+00> : vector<64x128xf32>
    %33 = tpu.matmul %31, %32, %cst_37 {dimension_numbers = #tpu.dot_dimension_numbers<[1], [0], [0], [1], [0, 0, 1, 1], [], []>} : vector<64x128xf32>, vector<128x128xf32>, vector<64x128xf32> -> vector<64x128xf32>
    %34 = arith.addf %29, %33 : vector<64x128xf32>
    %c1_38 = arith.constant 1 : index
    %c0_39 = arith.constant 0 : index
    %c0_40 = arith.constant 0 : index
    %35 = vector.load %arg7[%c1_38, %c0_39, %c0_40] : memref<10x10x128xf32, #tpu.memory_space<vmem>>, vector<8x8x128xf32>
    %36 = vector.shape_cast %35 : vector<8x8x128xf32> to vector<64x128xf32>
    %c384 = arith.constant 384 : index
    %c0_41 = arith.constant 0 : index
    %37 = vector.load %arg4[%c384, %c0_41] : memref<1152x128xf32, #tpu.memory_space<vmem>>, vector<128x128xf32>
    %cst_42 = arith.constant dense<0.000000e+00> : vector<64x128xf32>
    %38 = tpu.matmul %36, %37, %cst_42 {dimension_numbers = #tpu.dot_dimension_numbers<[1], [0], [0], [1], [0, 0, 1, 1], [], []>} : vector<64x128xf32>, vector<128x128xf32>, vector<64x128xf32> -> vector<64x128xf32>
    %39 = arith.addf %34, %38 : vector<64x128xf32>
    %c1_43 = arith.constant 1 : index
    %c1_44 = arith.constant 1 : index
    %c0_45 = arith.constant 0 : index
    %40 = vector.load %arg7[%c1_43, %c1_44, %c0_45] : memref<10x10x128xf32, #tpu.memory_space<vmem>>, vector<8x8x128xf32>
    %41 = vector.shape_cast %40 : vector<8x8x128xf32> to vector<64x128xf32>
    %c512 = arith.constant 512 : index
    %c0_46 = arith.constant 0 : index
    %42 = vector.load %arg4[%c512, %c0_46] : memref<1152x128xf32, #tpu.memory_space<vmem>>, vector<128x128xf32>
    %cst_47 = arith.constant dense<0.000000e+00> : vector<64x128xf32>
    %43 = tpu.matmul %41, %42, %cst_47 {dimension_numbers = #tpu.dot_dimension_numbers<[1], [0], [0], [1], [0, 0, 1, 1], [], []>} : vector<64x128xf32>, vector<128x128xf32>, vector<64x128xf32> -> vector<64x128xf32>
    %44 = arith.addf %39, %43 : vector<64x128xf32>
    %c1_48 = arith.constant 1 : index
    %c2_49 = arith.constant 2 : index
    %c0_50 = arith.constant 0 : index
    %45 = vector.load %arg7[%c1_48, %c2_49, %c0_50] : memref<10x10x128xf32, #tpu.memory_space<vmem>>, vector<8x8x128xf32>
    %46 = vector.shape_cast %45 : vector<8x8x128xf32> to vector<64x128xf32>
    %c640 = arith.constant 640 : index
    %c0_51 = arith.constant 0 : index
    %47 = vector.load %arg4[%c640, %c0_51] : memref<1152x128xf32, #tpu.memory_space<vmem>>, vector<128x128xf32>
    %cst_52 = arith.constant dense<0.000000e+00> : vector<64x128xf32>
    %48 = tpu.matmul %46, %47, %cst_52 {dimension_numbers = #tpu.dot_dimension_numbers<[1], [0], [0], [1], [0, 0, 1, 1], [], []>} : vector<64x128xf32>, vector<128x128xf32>, vector<64x128xf32> -> vector<64x128xf32>
    %49 = arith.addf %44, %48 : vector<64x128xf32>
    %c2_53 = arith.constant 2 : index
    %c0_54 = arith.constant 0 : index
    %c0_55 = arith.constant 0 : index
    %50 = vector.load %arg7[%c2_53, %c0_54, %c0_55] : memref<10x10x128xf32, #tpu.memory_space<vmem>>, vector<8x8x128xf32>
    %51 = vector.shape_cast %50 : vector<8x8x128xf32> to vector<64x128xf32>
    %c768 = arith.constant 768 : index
    %c0_56 = arith.constant 0 : index
    %52 = vector.load %arg4[%c768, %c0_56] : memref<1152x128xf32, #tpu.memory_space<vmem>>, vector<128x128xf32>
    %cst_57 = arith.constant dense<0.000000e+00> : vector<64x128xf32>
    %53 = tpu.matmul %51, %52, %cst_57 {dimension_numbers = #tpu.dot_dimension_numbers<[1], [0], [0], [1], [0, 0, 1, 1], [], []>} : vector<64x128xf32>, vector<128x128xf32>, vector<64x128xf32> -> vector<64x128xf32>
    %54 = arith.addf %49, %53 : vector<64x128xf32>
    %c2_58 = arith.constant 2 : index
    %c1_59 = arith.constant 1 : index
    %c0_60 = arith.constant 0 : index
    %55 = vector.load %arg7[%c2_58, %c1_59, %c0_60] : memref<10x10x128xf32, #tpu.memory_space<vmem>>, vector<8x8x128xf32>
    %56 = vector.shape_cast %55 : vector<8x8x128xf32> to vector<64x128xf32>
    %c896 = arith.constant 896 : index
    %c0_61 = arith.constant 0 : index
    %57 = vector.load %arg4[%c896, %c0_61] : memref<1152x128xf32, #tpu.memory_space<vmem>>, vector<128x128xf32>
    %cst_62 = arith.constant dense<0.000000e+00> : vector<64x128xf32>
    %58 = tpu.matmul %56, %57, %cst_62 {dimension_numbers = #tpu.dot_dimension_numbers<[1], [0], [0], [1], [0, 0, 1, 1], [], []>} : vector<64x128xf32>, vector<128x128xf32>, vector<64x128xf32> -> vector<64x128xf32>
    %59 = arith.addf %54, %58 : vector<64x128xf32>
    %c2_63 = arith.constant 2 : index
    %c2_64 = arith.constant 2 : index
    %c0_65 = arith.constant 0 : index
    %60 = vector.load %arg7[%c2_63, %c2_64, %c0_65] : memref<10x10x128xf32, #tpu.memory_space<vmem>>, vector<8x8x128xf32>
    %61 = vector.shape_cast %60 : vector<8x8x128xf32> to vector<64x128xf32>
    %c1024 = arith.constant 1024 : index
    %c0_66 = arith.constant 0 : index
    %62 = vector.load %arg4[%c1024, %c0_66] : memref<1152x128xf32, #tpu.memory_space<vmem>>, vector<128x128xf32>
    %cst_67 = arith.constant dense<0.000000e+00> : vector<64x128xf32>
    %63 = tpu.matmul %61, %62, %cst_67 {dimension_numbers = #tpu.dot_dimension_numbers<[1], [0], [0], [1], [0, 0, 1, 1], [], []>} : vector<64x128xf32>, vector<128x128xf32>, vector<64x128xf32> -> vector<64x128xf32>
    %64 = arith.addf %59, %63 : vector<64x128xf32>
    %65 = vector.shape_cast %64 : vector<64x128xf32> to vector<8x8x128xf32>
    %c0_68 = arith.constant 0 : index
    %c0_69 = arith.constant 0 : index
    %c0_70 = arith.constant 0 : index
    %c0_71 = arith.constant 0 : index
    %66 = vector.load %arg5[%c0_68, %c0_69, %c0_70, %c0_71] : memref<1x8x8x128xf32, #tpu.memory_space<vmem>>, vector<1x8x8x128xf32>
    %67 = vector.shape_cast %66 : vector<1x8x8x128xf32> to vector<8x8x128xf32>
    %68 = vector.shape_cast %65 : vector<8x8x128xf32> to vector<1x8x8x128xf32>
    tpu.vector_store %arg5[%c0_68, %c0_69, %c0_70, %c0_71], %68 {strides = array<i32>} : memref<1x8x8x128xf32, #tpu.memory_space<vmem>>, vector<1x8x8x128xf32>,
    %cst_72 = arith.constant dense<0.000000e+00> : vector<128xf32>
    %69 = vector.multi_reduction <add>, %64, %cst_72 [0] : vector<64x128xf32> to vector<128xf32>
    %70 = vector.shape_cast %69 : vector<128xf32> to vector<1x128xf32>
    %c0_73 = arith.constant 0 : index
    %c0_74 = arith.constant 0 : index
    %c0_75 = arith.constant 0 : index
    %71 = vector.load %arg6[%c0_73, %c0_74, %c0_75] : memref<1x2x128xf32, #tpu.memory_space<vmem>>, vector<1x1x128xf32>
    %72 = vector.shape_cast %71 : vector<1x1x128xf32> to vector<1x128xf32>
    %73 = vector.shape_cast %70 : vector<1x128xf32> to vector<1x1x128xf32>
    tpu.vector_store %arg6[%c0_73, %c0_74, %c0_75], %73 {strides = array<i32>} : memref<1x2x128xf32, #tpu.memory_space<vmem>>, vector<1x1x128xf32>,
    %74 = arith.mulf %64, %64 : vector<64x128xf32>
    %cst_76 = arith.constant dense<0.000000e+00> : vector<128xf32>
    %75 = vector.multi_reduction <add>, %74, %cst_76 [0] : vector<64x128xf32> to vector<128xf32>
    %76 = vector.shape_cast %75 : vector<128xf32> to vector<1x128xf32>
    %c0_77 = arith.constant 0 : index
    %c1_78 = arith.constant 1 : index
    %c0_79 = arith.constant 0 : index
    %77 = vector.load %arg6[%c0_77, %c1_78, %c0_79] : memref<1x2x128xf32, #tpu.memory_space<vmem>>, vector<1x1x128xf32>
    %78 = vector.shape_cast %77 : vector<1x1x128xf32> to vector<1x128xf32>
    %79 = vector.shape_cast %76 : vector<1x128xf32> to vector<1x1x128xf32>
    tpu.vector_store %arg6[%c0_77, %c1_78, %c0_79], %79 {strides = array<i32>} : memref<1x2x128xf32, #tpu.memory_space<vmem>>, vector<1x1x128xf32>,
    return
  }
  func.func @transform_0(%arg0: i32) -> (i32, i32, i32, i32) {
    %c0_i32 = arith.constant 0 : i32
    %c0_i32_0 = arith.constant 0 : i32
    %c0_i32_1 = arith.constant 0 : i32
    %c0_i32_2 = arith.constant 0 : i32
    return %arg0, %c0_i32, %c0_i32_0, %c0_i32_1 : i32, i32, i32, i32
  }
  func.func @transform_1(%arg0: i32) -> (i32, i32) {
    %c0_i32 = arith.constant 0 : i32
    %c0_i32_0 = arith.constant 0 : i32
    %c0_i32_1 = arith.constant 0 : i32
    return %c0_i32, %c0_i32_0 : i32, i32
  }
  func.func @transform_2(%arg0: i32) -> (i32, i32) {
    %c0_i32 = arith.constant 0 : i32
    %c0_i32_0 = arith.constant 0 : i32
    %c0_i32_1 = arith.constant 0 : i32
    return %c0_i32, %c0_i32_0 : i32, i32
  }
  func.func @transform_3(%arg0: i32) -> (i32, i32) {
    %c0_i32 = arith.constant 0 : i32
    %c0_i32_0 = arith.constant 0 : i32
    %c0_i32_1 = arith.constant 0 : i32
    return %c0_i32, %c0_i32_0 : i32, i32
  }
  func.func @transform_4(%arg0: i32) -> (i32, i32, i32, i32) {
    %c0_i32 = arith.constant 0 : i32
    %c0_i32_0 = arith.constant 0 : i32
    %c0_i32_1 = arith.constant 0 : i32
    %c0_i32_2 = arith.constant 0 : i32
    return %arg0, %c0_i32, %c0_i32_0, %c0_i32_1 : i32, i32, i32, i32
  }
  func.func @transform_5(%arg0: i32) -> (i32, i32, i32) {
    %c0_i32 = arith.constant 0 : i32
    %c0_i32_0 = arith.constant 0 : i32
    %c0_i32_1 = arith.constant 0 : i32
    return %arg0, %c0_i32, %c0_i32_0 : i32, i32, i32
  }
}

module attributes {stable_mosaic.version = 11 : i64} {
  func.func @bn_add_relu_kernel(%arg0: i32, %arg1: i32, %arg2: memref<1x8x8x128xf32, #tpu.memory_space<vmem>>, %arg3: memref<1x8x8x128xf32, #tpu.memory_space<vmem>>, %arg4: memref<1x128xf32, #tpu.memory_space<vmem>>, %arg5: memref<1x128xf32, #tpu.memory_space<vmem>>, %arg6: memref<1x128xf32, #tpu.memory_space<vmem>>, %arg7: memref<1x128xf32, #tpu.memory_space<vmem>>, %arg8: memref<1x8x8x128xf32, #tpu.memory_space<vmem>>) attributes {dimension_semantics = [#tpu.dimension_semantics<parallel>, #tpu.dimension_semantics<parallel>], iteration_bounds = array<i64: 1, 2>, scalar_prefetch = 0 : i64, scratch_operands = 0 : i64, tpu.core_type = #tpu.core_type<tc>, window_params = [{transform_indices = @transform_0, window_bounds = array<i64: 1, 8, 8, 128>}, {transform_indices = @transform_1, window_bounds = array<i64: 1, 8, 8, 128>}, {pipeline_mode = #tpu.pipeline_mode<synchronous>, transform_indices = @transform_2, window_bounds = array<i64: 1, 128>}, {pipeline_mode = #tpu.pipeline_mode<synchronous>, transform_indices = @transform_3, window_bounds = array<i64: 1, 128>}, {pipeline_mode = #tpu.pipeline_mode<synchronous>, transform_indices = @transform_4, window_bounds = array<i64: 1, 128>}, {pipeline_mode = #tpu.pipeline_mode<synchronous>, transform_indices = @transform_5, window_bounds = array<i64: 1, 128>}, {transform_indices = @transform_6, window_bounds = array<i64: 1, 8, 8, 128>}]} {
    %c0 = arith.constant 0 : index
    %c0_0 = arith.constant 0 : index
    %c0_1 = arith.constant 0 : index
    %c0_2 = arith.constant 0 : index
    %0 = vector.load %arg2[%c0, %c0_0, %c0_1, %c0_2] : memref<1x8x8x128xf32, #tpu.memory_space<vmem>>, vector<1x8x8x128xf32>
    %1 = vector.shape_cast %0 : vector<1x8x8x128xf32> to vector<8x8x128xf32>
    %c0_3 = arith.constant 0 : index
    %c0_4 = arith.constant 0 : index
    %2 = vector.load %arg4[%c0_3, %c0_4] : memref<1x128xf32, #tpu.memory_space<vmem>>, vector<1x128xf32>
    %3 = vector.shape_cast %2 : vector<1x128xf32> to vector<1x1x128xf32>
    %4 = vector.broadcast %3 : vector<1x1x128xf32> to vector<8x8x128xf32>
    %5 = arith.mulf %1, %4 : vector<8x8x128xf32>
    %c0_5 = arith.constant 0 : index
    %c0_6 = arith.constant 0 : index
    %6 = vector.load %arg5[%c0_5, %c0_6] : memref<1x128xf32, #tpu.memory_space<vmem>>, vector<1x128xf32>
    %7 = vector.shape_cast %6 : vector<1x128xf32> to vector<1x1x128xf32>
    %8 = vector.broadcast %7 : vector<1x1x128xf32> to vector<8x8x128xf32>
    %9 = arith.addf %5, %8 : vector<8x8x128xf32>
    %c0_7 = arith.constant 0 : index
    %c0_8 = arith.constant 0 : index
    %c0_9 = arith.constant 0 : index
    %c0_10 = arith.constant 0 : index
    %10 = vector.load %arg3[%c0_7, %c0_8, %c0_9, %c0_10] : memref<1x8x8x128xf32, #tpu.memory_space<vmem>>, vector<1x8x8x128xf32>
    %11 = vector.shape_cast %10 : vector<1x8x8x128xf32> to vector<8x8x128xf32>
    %c0_11 = arith.constant 0 : index
    %c0_12 = arith.constant 0 : index
    %12 = vector.load %arg6[%c0_11, %c0_12] : memref<1x128xf32, #tpu.memory_space<vmem>>, vector<1x128xf32>
    %13 = vector.shape_cast %12 : vector<1x128xf32> to vector<1x1x128xf32>
    %14 = vector.broadcast %13 : vector<1x1x128xf32> to vector<8x8x128xf32>
    %15 = arith.mulf %11, %14 : vector<8x8x128xf32>
    %16 = arith.addf %9, %15 : vector<8x8x128xf32>
    %c0_13 = arith.constant 0 : index
    %c0_14 = arith.constant 0 : index
    %17 = vector.load %arg7[%c0_13, %c0_14] : memref<1x128xf32, #tpu.memory_space<vmem>>, vector<1x128xf32>
    %18 = vector.shape_cast %17 : vector<1x128xf32> to vector<1x1x128xf32>
    %19 = vector.broadcast %18 : vector<1x1x128xf32> to vector<8x8x128xf32>
    %20 = arith.addf %16, %19 : vector<8x8x128xf32>
    %cst = arith.constant 0.000000e+00 : f32
    %21 = vector.broadcast %cst : f32 to vector<8x8x128xf32>
    %22 = arith.maximumf %20, %21 : vector<8x8x128xf32>
    %c0_15 = arith.constant 0 : index
    %c0_16 = arith.constant 0 : index
    %c0_17 = arith.constant 0 : index
    %c0_18 = arith.constant 0 : index
    %23 = vector.load %arg8[%c0_15, %c0_16, %c0_17, %c0_18] : memref<1x8x8x128xf32, #tpu.memory_space<vmem>>, vector<1x8x8x128xf32>
    %24 = vector.shape_cast %23 : vector<1x8x8x128xf32> to vector<8x8x128xf32>
    %25 = vector.shape_cast %22 : vector<8x8x128xf32> to vector<1x8x8x128xf32>
    tpu.vector_store %arg8[%c0_15, %c0_16, %c0_17, %c0_18], %25 {strides = array<i32>} : memref<1x8x8x128xf32, #tpu.memory_space<vmem>>, vector<1x8x8x128xf32>,
    return
  }
  func.func @transform_0(%arg0: i32, %arg1: i32) -> (i32, i32, i32, i32) {
    %c0_i32 = arith.constant 0 : i32
    %c0_i32_0 = arith.constant 0 : i32
    %c0_i32_1 = arith.constant 0 : i32
    return %arg1, %arg0, %c0_i32, %c0_i32_0 : i32, i32, i32, i32
  }
  func.func @transform_1(%arg0: i32, %arg1: i32) -> (i32, i32, i32, i32) {
    %c0_i32 = arith.constant 0 : i32
    %c0_i32_0 = arith.constant 0 : i32
    %c0_i32_1 = arith.constant 0 : i32
    return %arg1, %arg0, %c0_i32, %c0_i32_0 : i32, i32, i32, i32
  }
  func.func @transform_2(%arg0: i32, %arg1: i32) -> (i32, i32) {
    %c0_i32 = arith.constant 0 : i32
    %c0_i32_0 = arith.constant 0 : i32
    %c0_i32_1 = arith.constant 0 : i32
    return %c0_i32, %c0_i32_0 : i32, i32
  }
  func.func @transform_3(%arg0: i32, %arg1: i32) -> (i32, i32) {
    %c0_i32 = arith.constant 0 : i32
    %c0_i32_0 = arith.constant 0 : i32
    %c0_i32_1 = arith.constant 0 : i32
    return %c0_i32, %c0_i32_0 : i32, i32
  }
  func.func @transform_4(%arg0: i32, %arg1: i32) -> (i32, i32) {
    %c0_i32 = arith.constant 0 : i32
    %c0_i32_0 = arith.constant 0 : i32
    %c0_i32_1 = arith.constant 0 : i32
    return %c0_i32, %c0_i32_0 : i32, i32
  }
  func.func @transform_5(%arg0: i32, %arg1: i32) -> (i32, i32) {
    %c0_i32 = arith.constant 0 : i32
    %c0_i32_0 = arith.constant 0 : i32
    %c0_i32_1 = arith.constant 0 : i32
    return %c0_i32, %c0_i32_0 : i32, i32
  }
  func.func @transform_6(%arg0: i32, %arg1: i32) -> (i32, i32, i32, i32) {
    %c0_i32 = arith.constant 0 : i32
    %c0_i32_0 = arith.constant 0 : i32
    %c0_i32_1 = arith.constant 0 : i32
    return %arg1, %arg0, %c0_i32, %c0_i32_0 : i32, i32, i32, i32
  }
}

</mosaic_0001>

<llo_original>
// kernel: basic_block_pallas.5
$region0: #{basic_block_pallas.5}
  #allocation0 [shape = 'u32[]', space=smem, size = 0x4, offset = 0x4, fixed_abs, tag = 'smem constant byte address 0x4 - core index']
  #allocation1 [shape = 'u32[72,128]{1,0:T(1,128)}', space=vmem, size = 0x9000, scoped, tag = 'internal scratch']
  %s0 = inlined_call_operand.vmem [shape: f32[2,8,8,128], index: 0, kind: input, shape index: {}]
  %s1 = inlined_call_operand.vmem [shape: f32[2,8,8,128], index: 1, kind: input, shape index: {}]
  %s2 = inlined_call_operand.vmem [shape: f32[1,128], index: 2, kind: input, shape index: {}]
  %s3 = inlined_call_operand.vmem [shape: f32[1,128], index: 3, kind: input, shape index: {}]
  %s4 = inlined_call_operand.vmem [shape: f32[1,128], index: 4, kind: input, shape index: {}]
  %s5 = inlined_call_operand.vmem [shape: f32[1,128], index: 5, kind: input, shape index: {}]
  %s6 = inlined_call_operand.vmem [shape: f32[2,8,8,128], index: 6, kind: output, shape index: {}]
  %s7 = sld [smem:[#allocation0]]
  $region57: #{basic_block_pallas.5} parent=0
    _
  %s9 = ssub.s32 1, %s7
  %s10 = scalar_select 0, %s9, %s7
  loop: start=0, step=1, limit=4
  $region2: #{basic_block_pallas.5} parent=0 // loop_pre_header
    _
  $region3: #{basic_block_pallas.5} parent=0 // loop_header
    %s12 = sphi 0, %s16
    %p13 = scmp.ge.s32.totalorder %s12, 4
    %s19 = sphi 0, %s31
    %s20 = sphi 0, %s27
    %s21 = sphi 0, %s19
    %s22 = sphi 0, %s20
    %s23 = sphi 0, %s21
    %s24 = sphi 0, %s22
    %s36 = sphi 0, %s38
    %s39 = sphi 0, %s36
    %s40 = sphi 0, %s39
    %s56 = sphi 0, %s40
    %s64 = sphi 0, %s66
    %s67 = sphi 0, %s64
    %s68 = sphi 0, %s67
    %s84 = sphi 0, %s68
    %s88 = sphi 0, %s88
    %s90 = sphi 0, %s88
    %s91 = sphi 0, %s90
    %s105 = sphi 0, %s91
    %s109 = sphi 0, %s109
    %s111 = sphi 0, %s109
    %s112 = sphi 0, %s111
    %s126 = sphi 0, %s112
    %s130 = sphi 0, %s130
    %s132 = sphi 0, %s130
    %s133 = sphi 0, %s132
    %s147 = sphi 0, %s133
    %s151 = sphi 0, %s151
    %s153 = sphi 0, %s151
    %s154 = sphi 0, %s153
    %s168 = sphi 0, %s154
    %s176 = sphi 0, %s178
    %s179 = sphi 0, %s176
    %s180 = sphi 0, %s179
    %s196 = sphi 0, %s180
  $region4: #{basic_block_pallas.5} parent=0 // loop_header_branch
    %15 = sbr.rel (%p13) target = $region8
  $region5: #{basic_block_pallas.5} parent=0 // loop_body
    %s17 = ssub.s32 %s12, 1
    %s18 = ssub.s32 %s12, 2
    %s25 = sadd.s32 1, %s20
    %p26 = scmp.ge.s32.totalorder %s25, 2
    %s27 = scalar_select %p26, 0, %s25
    %s28 = sadd.s32 1, %s19
    %s29 = scalar_select %p26, %s28, %s19
    %p30 = scmp.ge.s32.totalorder %s29, 1
    %s31 = scalar_select %p30, 0, %s29
    %s32 = ssub.s32 %s20, %s27
    %s33 = ssub.s32 %s19, %s31
    %s34 = sor.u32 %s32, %s33
    %p35 = scmp.eq.s32.totalorder %s34, 0
    %s37 = sadd.s32 %s36, 1
    %s38 = scalar_select %p35, %s36, %s37
    %p41 = pneg %p35
    %p42 = scmp.eq.s32.totalorder %s12, 1
    %p43 = por %p41, %p42
    %p44 = scmp.ne.s32.totalorder %s36, %s39
    %p45 = scmp.eq.s32.totalorder %s12, 0
    %p46 = por %p44, %p45
    %p47 = scmp.ne.s32.totalorder %s36, %s39
    %p48 = scmp.eq.s32.totalorder %s17, 1
    %p49 = por %p47, %p48
    %p50 = scmp.ne.s32.totalorder %s39, %s40
    %p51 = scmp.eq.s32.totalorder %s17, 0
    %p52 = por %p50, %p51
    %p53 = scmp.ne.s32.totalorder %s39, %s40
    %p54 = scmp.eq.s32.totalorder %s18, 1
    %p55 = por %p53, %p54
    %p57 = scmp.ne.s32.totalorder %s40, %s56
    %p58 = scmp.eq.s32.totalorder %s18, 0
    %p59 = por %p57, %p58
    %s60 = ssub.s32 %s20, %s27
    %s61 = ssub.s32 %s19, %s31
    %s62 = sor.u32 %s60, %s61
    %p63 = scmp.eq.s32.totalorder %s62, 0
    %s65 = sadd.s32 %s64, 1
    %s66 = scalar_select %p63, %s64, %s65
    %p69 = pneg %p63
    %p70 = scmp.eq.s32.totalorder %s12, 1
    %p71 = por %p69, %p70
    %p72 = scmp.ne.s32.totalorder %s64, %s67
    %p73 = scmp.eq.s32.totalorder %s12, 0
    %p74 = por %p72, %p73
    %p75 = scmp.ne.s32.totalorder %s64, %s67
    %p76 = scmp.eq.s32.totalorder %s17, 1
    %p77 = por %p75, %p76
    %p78 = scmp.ne.s32.totalorder %s67, %s68
    %p79 = scmp.eq.s32.totalorder %s17, 0
    %p80 = por %p78, %p79
    %p81 = scmp.ne.s32.totalorder %s67, %s68
    %p82 = scmp.eq.s32.totalorder %s18, 1
    %p83 = por %p81, %p82
    %p85 = scmp.ne.s32.totalorder %s68, %s84
    %p86 = scmp.eq.s32.totalorder %s18, 0
    %p87 = por %p85, %p86
    %s89 = sadd.s32 %s88, 1
    %p92 = scmp.eq.s32.totalorder %s12, 1
    %p93 = scmp.ne.s32.totalorder %s88, %s90
    %p94 = scmp.eq.s32.totalorder %s12, 0
    %p95 = por %p93, %p94
    %p96 = scmp.ne.s32.totalorder %s88, %s90
    %p97 = scmp.eq.s32.totalorder %s17, 1
    %p98 = por %p96, %p97
    %p99 = scmp.ne.s32.totalorder %s90, %s91
    %p100 = scmp.eq.s32.totalorder %s17, 0
    %p101 = por %p99, %p100
    %p102 = scmp.ne.s32.totalorder %s90, %s91
    %p103 = scmp.eq.s32.totalorder %s18, 1
    %p104 = por %p102, %p103
    %p106 = scmp.ne.s32.totalorder %s91, %s105
    %p107 = scmp.eq.s32.totalorder %s18, 0
    %p108 = por %p106, %p107
    %s110 = sadd.s32 %s109, 1
    %p113 = scmp.eq.s32.totalorder %s12, 1
    %p114 = scmp.ne.s32.totalorder %s109, %s111
    %p115 = scmp.eq.s32.totalorder %s12, 0
    %p116 = por %p114, %p115
    %p117 = scmp.ne.s32.totalorder %s109, %s111
    %p118 = scmp.eq.s32.totalorder %s17, 1
    %p119 = por %p117, %p118
    %p120 = scmp.ne.s32.totalorder %s111, %s112
    %p121 = scmp.eq.s32.totalorder %s17, 0
    %p122 = por %p120, %p121
    %p123 = scmp.ne.s32.totalorder %s111, %s112
    %p124 = scmp.eq.s32.totalorder %s18, 1
    %p125 = por %p123, %p124
    %p127 = scmp.ne.s32.totalorder %s112, %s126
    %p128 = scmp.eq.s32.totalorder %s18, 0
    %p129 = por %p127, %p128
    %s131 = sadd.s32 %s130, 1
    %p134 = scmp.eq.s32.totalorder %s12, 1
    %p135 = scmp.ne.s32.totalorder %s130, %s132
    %p136 = scmp.eq.s32.totalorder %s12, 0
    %p137 = por %p135, %p136
    %p138 = scmp.ne.s32.totalorder %s130, %s132
    %p139 = scmp.eq.s32.totalorder %s17, 1
    %p140 = por %p138, %p139
    %p141 = scmp.ne.s32.totalorder %s132, %s133
    %p142 = scmp.eq.s32.totalorder %s17, 0
    %p143 = por %p141, %p142
    %p144 = scmp.ne.s32.totalorder %s132, %s133
    %p145 = scmp.eq.s32.totalorder %s18, 1
    %p146 = por %p144, %p145
    %p148 = scmp.ne.s32.totalorder %s133, %s147
    %p149 = scmp.eq.s32.totalorder %s18, 0
    %p150 = por %p148, %p149
    %s152 = sadd.s32 %s151, 1
    %p155 = scmp.eq.s32.totalorder %s12, 1
    %p156 = scmp.ne.s32.totalorder %s151, %s153
    %p157 = scmp.eq.s32.totalorder %s12, 0
    %p158 = por %p156, %p157
    %p159 = scmp.ne.s32.totalorder %s151, %s153
    %p160 = scmp.eq.s32.totalorder %s17, 1
    %p161 = por %p159, %p160
    %p162 = scmp.ne.s32.totalorder %s153, %s154
    %p163 = scmp.eq.s32.totalorder %s17, 0
    %p164 = por %p162, %p163
    %p165 = scmp.ne.s32.totalorder %s153, %s154
    %p166 = scmp.eq.s32.totalorder %s18, 1
    %p167 = por %p165, %p166
    %p169 = scmp.ne.s32.totalorder %s154, %s168
    %p170 = scmp.eq.s32.totalorder %s18, 0
    %p171 = por %p169, %p170
    %s172 = ssub.s32 %s20, %s27
    %s173 = ssub.s32 %s19, %s31
    %s174 = sor.u32 %s172, %s173
    %p175 = scmp.eq.s32.totalorder %s174, 0
    %s177 = sadd.s32 %s176, 1
    %s178 = scalar_select %p175, %s176, %s177
    %p181 = pneg %p175
    %p182 = scmp.eq.s32.totalorder %s12, 1
    %p183 = por %p181, %p182
    %p184 = scmp.ne.s32.totalorder %s176, %s179
    %p185 = scmp.eq.s32.totalorder %s12, 0
    %p186 = por %p184, %p185
    %p187 = scmp.ne.s32.totalorder %s176, %s179
    %p188 = scmp.eq.s32.totalorder %s17, 1
    %p189 = por %p187, %p188
    %p190 = scmp.ne.s32.totalorder %s179, %s180
    %p191 = scmp.eq.s32.totalorder %s17, 0
    %p192 = por %p190, %p191
    %p193 = scmp.ne.s32.totalorder %s179, %s180
    %p194 = scmp.eq.s32.totalorder %s18, 1
    %p195 = por %p193, %p194
    %p197 = scmp.ne.s32.totalorder %s180, %s196
    %p198 = scmp.eq.s32.totalorder %s18, 0
    %p199 = por %p197, %p198
    %p200 = scmp.le.s32.totalorder 1, %s12
    %p201 = scmp.lt.s32.totalorder %s12, 3
    %p202 = pnand %p200, %p201
    %p203 = pneg %p202
    // Predicated region
    $region9: #{basic_block_pallas.5} parent=5 // pred_check
      _
    $region10: #{basic_block_pallas.5} parent=5 // pred_check_branch
      %205 = sbr.rel (%p202) target = $region12
    $region11: #{basic_block_pallas.5} parent=5 // pred_region
      %s206 = ssub.s32 %s12, 1
      // Predicated region
      $region13: #{basic_block_pallas.5} parent=11 // pred_check
        %p207 = pneg %p101
      $region14: #{basic_block_pallas.5} parent=11 // pred_check_branch
        %209 = sbr.rel (%p207) target = $region16
      $region15: #{basic_block_pallas.5} parent=11 // pred_region
        _
      $region16: #{basic_block_pallas.5} parent=11 // pred_fallthru
        _
      // Predicated region
      $region17: #{basic_block_pallas.5} parent=11 // pred_check
        %p210 = pneg %p122
      $region18: #{basic_block_pallas.5} parent=11 // pred_check_branch
        %212 = sbr.rel (%p210) target = $region20
      $region19: #{basic_block_pallas.5} parent=11 // pred_region
        _
      $region20: #{basic_block_pallas.5} parent=11 // pred_fallthru
        _
      // Predicated region
      $region21: #{basic_block_pallas.5} parent=11 // pred_check
        %p213 = pneg %p143
      $region22: #{basic_block_pallas.5} parent=11 // pred_check_branch
        %215 = sbr.rel (%p213) target = $region24
      $region23: #{basic_block_pallas.5} parent=11 // pred_region
        _
      $region24: #{basic_block_pallas.5} parent=11 // pred_fallthru
        _
      // Predicated region
      $region25: #{basic_block_pallas.5} parent=11 // pred_check
        %p216 = pneg %p164
      $region26: #{basic_block_pallas.5} parent=11 // pred_check_branch
        %218 = sbr.rel (%p216) target = $region28
      $region27: #{basic_block_pallas.5} parent=11 // pred_region
        _
      $region28: #{basic_block_pallas.5} parent=11 // pred_fallthru
        _
    $region12: #{basic_block_pallas.5} parent=5 // pred_fallthru
      _
    %p219 = scmp.lt.s32.totalorder %s12, 2
    // Predicated region
    $region29: #{basic_block_pallas.5} parent=5 // pred_check
      %p220 = pneg %p219
    $region30: #{basic_block_pallas.5} parent=5 // pred_check_branch
      %222 = sbr.rel (%p220) target = $region32
    $region31: #{basic_block_pallas.5} parent=5 // pred_region
      // Predicated region
      $region33: #{basic_block_pallas.5} parent=31 // pred_check
        %p223 = pneg %p46
      $region34: #{basic_block_pallas.5} parent=31 // pred_check_branch
        %225 = sbr.rel (%p223) target = $region36
      $region35: #{basic_block_pallas.5} parent=31 // pred_region
        %s226 = smul.u32 8, %s19
        %p227 = scmp.lt.s32.totalorder %s20, 1
        %s228 = scalar_select %p227, %s20, 1
        %p229 = scmp.lt.s32.totalorder %s226, 7
        %s230 = scalar_select %p229, %s226, 7
        %s231 = smul.addr %s228, 8
        %s232 = sadd.s32 %s230, %s231
        %s233 = smul.addr %s232, 8
        %s234 = scalar_lea.vmem %s0, %s233
        %s235 = smul.u32 8, %s19
      $region36: #{basic_block_pallas.5} parent=31 // pred_fallthru
        _
      // Predicated region
      $region37: #{basic_block_pallas.5} parent=31 // pred_check
        %p236 = pneg %p74
      $region38: #{basic_block_pallas.5} parent=31 // pred_check_branch
        %238 = sbr.rel (%p236) target = $region40
      $region39: #{basic_block_pallas.5} parent=31 // pred_region
        %s239 = smul.u32 8, %s19
        %p240 = scmp.lt.s32.totalorder %s20, 1
        %s241 = scalar_select %p240, %s20, 1
        %p242 = scmp.lt.s32.totalorder %s239, 7
        %s243 = scalar_select %p242, %s239, 7
        %s244 = smul.addr %s241, 8
        %s245 = sadd.s32 %s243, %s244
        %s246 = smul.addr %s245, 8
        %s247 = scalar_lea.vmem %s1, %s246
        %s248 = smul.u32 8, %s19
      $region40: #{basic_block_pallas.5} parent=31 // pred_fallthru
        _
    $region32: #{basic_block_pallas.5} parent=5 // pred_fallthru
      _
    %p249 = scmp.le.s32.totalorder 1, %s12
    %p250 = scmp.lt.s32.totalorder %s12, 3
    %p251 = pnand %p249, %p250
    %p252 = pneg %p251
    // Predicated region
    $region41: #{basic_block_pallas.5} parent=5 // pred_check
      _
    $region42: #{basic_block_pallas.5} parent=5 // pred_check_branch
      %254 = sbr.rel (%p251) target = $region44
    $region43: #{basic_block_pallas.5} parent=5 // pred_region
      %s255 = ssub.s32 %s12, 1
      %s256 = smul.u32 8, %s21
      %p257 = scmp.lt.s32.totalorder %s22, 1
      %s258 = scalar_select %p257, %s22, 1
      %p259 = scmp.lt.s32.totalorder %s256, 7
      %s260 = scalar_select %p259, %s256, 7
      %s261 = smul.addr %s258, 8
      %s262 = sadd.s32 %s260, %s261
      %s263 = smul.addr %s262, 8
      %s264 = scalar_lea.vmem %s0, %s263
      %p265 = pneg %p52
      %p266 = pneg %p49
      %s267 = smul.u32 8, %s21
      %p268 = scmp.lt.s32.totalorder %s22, 1
      %s269 = scalar_select %p268, %s22, 1
      %p270 = scmp.lt.s32.totalorder %s267, 7
      %s271 = scalar_select %p270, %s267, 7
      %s272 = smul.addr %s269, 8
      %s273 = sadd.s32 %s271, %s272
      %s274 = smul.addr %s273, 8
      %s275 = scalar_lea.vmem %s1, %s274
      %p276 = pneg %p80
      %p277 = pneg %p77
      %p278 = pneg %p101
      %p279 = pneg %p98
      %p280 = pneg %p122
      %p281 = pneg %p119
      %p282 = pneg %p143
      %p283 = pneg %p140
      %p284 = pneg %p164
      %p285 = pneg %p161
      %p286 = pneg %p192
      %p287 = pneg %p189
      %s288 = smul.u32 8, %s21
      %p289 = scmp.lt.s32.totalorder %s22, 1
      %s290 = scalar_select %p289, %s22, 1
      %p291 = scmp.lt.s32.totalorder %s288, 7
      %s292 = scalar_select %p291, %s288, 7
      %s293 = smul.addr %s290, 8
      %s294 = sadd.s32 %s292, %s293
      %s295 = smul.addr %s294, 8
      %s296 = scalar_lea.vmem %s6, %s295
      %s297 = smul.u32 8, %s21
      %p298 = scmp.lt.s32.totalorder %s22, 1
      %s299 = scalar_select %p298, %s22, 1
      %p300 = scmp.lt.s32.totalorder %s297, 7
      %s301 = scalar_select %p300, %s297, 7
      %s302 = smul.addr %s299, 8
      %s303 = sadd.s32 %s301, %s302
      %s304 = smul.addr %s303, 8
      %s305 = scalar_lea.vmem %s0, %s304
      %s306 = smul.u32 8, %s21
      %s307 = smul.u32 8, %s21
      %p308 = scmp.lt.s32.totalorder %s22, 1
      %s309 = scalar_select %p308, %s22, 1
      %p310 = scmp.lt.s32.totalorder %s307, 7
      %s311 = scalar_select %p310, %s307, 7
      %s312 = smul.addr %s309, 8
      %s313 = sadd.s32 %s311, %s312
      %s314 = smul.addr %s313, 8
      %s315 = scalar_lea.vmem %s1, %s314
      %s316 = smul.u32 8, %s21
      %s317 = smul.u32 8, %s21
      %p318 = scmp.lt.s32.totalorder %s22, 1
      %s319 = scalar_select %p318, %s22, 1
      %p320 = scmp.lt.s32.totalorder %s317, 7
      %s321 = scalar_select %p320, %s317, 7
      %s322 = smul.addr %s319, 8
      %s323 = sadd.s32 %s321, %s322
      %s324 = smul.addr %s323, 8
      %s325 = scalar_lea.vmem %s6, %s324
      %s326 = smul.u32 8, %s21
      %v327 = vld [vmem:[%s305] sm:$0xff]
      %v328 = vld [vmem:[%s305 + $0x8] sm:$0xff]
      %v329 = vld [vmem:[%s305 + $0x10] sm:$0xff]
      %v330 = vld [vmem:[%s305 + $0x18] sm:$0xff]
      %v331 = vld [vmem:[%s305 + $0x20] sm:$0xff]
      %v332 = vld [vmem:[%s305 + $0x28] sm:$0xff]
      %v333 = vld [vmem:[%s305 + $0x30] sm:$0xff]
      %v334 = vld [vmem:[%s305 + $0x38] sm:$0xff]
      %v335 = vld [vmem:[%s2] sm:$0x1]
      %v337 = vperm.slane %v335, 0
      %v339 = vmul.f32 %v327, %v337
      %v340 = vmul.f32 %v328, %v337
      %v341 = vmul.f32 %v329, %v337
      %v342 = vmul.f32 %v330, %v337
      %v343 = vmul.f32 %v331, %v337
      %v344 = vmul.f32 %v332, %v337
      %v345 = vmul.f32 %v333, %v337
      %v346 = vmul.f32 %v334, %v337
      %v347 = vld [vmem:[%s3] sm:$0x1]
      %v349 = vperm.slane %v347, 0
      %v351 = vadd.f32 %v339, %v349
      %v352 = vadd.f32 %v340, %v349
      %v353 = vadd.f32 %v341, %v349
      %v354 = vadd.f32 %v342, %v349
      %v355 = vadd.f32 %v343, %v349
      %v356 = vadd.f32 %v344, %v349
      %v357 = vadd.f32 %v345, %v349
      %v358 = vadd.f32 %v346, %v349
      %v359 = vld [vmem:[%s315] sm:$0xff]
      %v360 = vld [vmem:[%s315 + $0x8] sm:$0xff]
      %v361 = vld [vmem:[%s315 + $0x10] sm:$0xff]
      %v362 = vld [vmem:[%s315 + $0x18] sm:$0xff]
      %v363 = vld [vmem:[%s315 + $0x20] sm:$0xff]
      %v364 = vld [vmem:[%s315 + $0x28] sm:$0xff]
      %v365 = vld [vmem:[%s315 + $0x30] sm:$0xff]
      %v366 = vld [vmem:[%s315 + $0x38] sm:$0xff]
      %v367 = vld [vmem:[%s4] sm:$0x1]
      %v369 = vperm.slane %v367, 0
      %v371 = vmul.f32 %v359, %v369
      %v372 = vmul.f32 %v360, %v369
      %v373 = vmul.f32 %v361, %v369
      %v374 = vmul.f32 %v362, %v369
      %v375 = vmul.f32 %v363, %v369
      %v376 = vmul.f32 %v364, %v369
      %v377 = vmul.f32 %v365, %v369
      %v378 = vmul.f32 %v366, %v369
      %v379 = vadd.f32 %v351, %v371
      %v380 = vadd.f32 %v352, %v372
      %v381 = vadd.f32 %v353, %v373
      %v382 = vadd.f32 %v354, %v374
      %v383 = vadd.f32 %v355, %v375
      %v384 = vadd.f32 %v356, %v376
      %v385 = vadd.f32 %v357, %v377
      %v386 = vadd.f32 %v358, %v378
      %v387 = vld [vmem:[%s5] sm:$0x1]
      %v389 = vperm.slane %v387, 0
      %v391 = vadd.f32 %v379, %v389
      %v392 = vadd.f32 %v380, %v389
      %v393 = vadd.f32 %v381, %v389
      %v394 = vadd.f32 %v382, %v389
      %v395 = vadd.f32 %v383, %v389
      %v396 = vadd.f32 %v384, %v389
      %v397 = vadd.f32 %v385, %v389
      %v398 = vadd.f32 %v386, %v389
      %v399 = vmax.f32 %v391, 0.0
      %v400 = vmax.f32 %v392, 0.0
      %v401 = vmax.f32 %v393, 0.0
      %v402 = vmax.f32 %v394, 0.0
      %v403 = vmax.f32 %v395, 0.0
      %v404 = vmax.f32 %v396, 0.0
      %v405 = vmax.f32 %v397, 0.0
      %v406 = vmax.f32 %v398, 0.0
      %407 = vst [vmem:[%s325] sm:$0xff] %v399
      %408 = vst [vmem:[%s325 + $0x8] sm:$0xff] %v400
      %409 = vst [vmem:[%s325 + $0x10] sm:$0xff] %v401
      %410 = vst [vmem:[%s325 + $0x18] sm:$0xff] %v402
      %411 = vst [vmem:[%s325 + $0x20] sm:$0xff] %v403
      %412 = vst [vmem:[%s325 + $0x28] sm:$0xff] %v404
      %413 = vst [vmem:[%s325 + $0x30] sm:$0xff] %v405
      %414 = vst [vmem:[%s325 + $0x38] sm:$0xff] %v406
      %s415 = smul.u32 8, %s21
      %p416 = scmp.lt.s32.totalorder %s22, 1
      %s417 = scalar_select %p416, %s22, 1
      %p418 = scmp.lt.s32.totalorder %s415, 7
      %s419 = scalar_select %p418, %s415, 7
      %s420 = smul.addr %s417, 8
      %s421 = sadd.s32 %s419, %s420
      %s422 = smul.addr %s421, 8
      %s423 = scalar_lea.vmem %s6, %s422
      // Predicated region
      $region45: #{basic_block_pallas.5} parent=43 // pred_check
        %p424 = pneg %p189
      $region46: #{basic_block_pallas.5} parent=43 // pred_check_branch
        %426 = sbr.rel (%p424) target = $region48
      $region47: #{basic_block_pallas.5} parent=43 // pred_region
        %s427 = smul.u32 8, %s21
      $region48: #{basic_block_pallas.5} parent=43 // pred_fallthru
        _
    $region44: #{basic_block_pallas.5} parent=5 // pred_fallthru
      _
    %p428 = scmp.le.s32.totalorder 2, %s12
    // Predicated region
    $region49: #{basic_block_pallas.5} parent=5 // pred_check
      %p429 = pneg %p428
    $region50: #{basic_block_pallas.5} parent=5 // pred_check_branch
      %431 = sbr.rel (%p429) target = $region52
    $region51: #{basic_block_pallas.5} parent=5 // pred_region
      %s432 = ssub.s32 %s12, 2
      // Predicated region
      $region53: #{basic_block_pallas.5} parent=51 // pred_check
        %p433 = pneg %p195
      $region54: #{basic_block_pallas.5} parent=51 // pred_check_branch
        %435 = sbr.rel (%p433) target = $region56
      $region55: #{basic_block_pallas.5} parent=51 // pred_region
        %s436 = smul.u32 8, %s23
        %p437 = scmp.lt.s32.totalorder %s24, 1
        %s438 = scalar_select %p437, %s24, 1
        %p439 = scmp.lt.s32.totalorder %s436, 7
        %s440 = scalar_select %p439, %s436, 7
        %s441 = smul.addr %s438, 8
        %s442 = sadd.s32 %s440, %s441
        %s443 = smul.addr %s442, 8
        %s444 = scalar_lea.vmem %s6, %s443
      $region56: #{basic_block_pallas.5} parent=51 // pred_fallthru
        _
    $region52: #{basic_block_pallas.5} parent=5 // pred_fallthru
      _
  $region6: #{basic_block_pallas.5} parent=0 // loop_footer
    %s16 = sadd.s32 1, %s12
  $region7: #{basic_block_pallas.5} parent=0 // loop_footer_branch
    %11 = sbr.rel target = $region3
  $region8: #{basic_block_pallas.5} parent=0 // loop_exit
    _

// kernel: basic_block_pallas.3
$region0: #{basic_block_pallas.3}
  #allocation0 [shape = 'u32[]', space=smem, size = 0x4, offset = 0x4, fixed_abs, tag = 'smem constant byte address 0x4 - core index']
  #allocation1 [shape = 'u32[72,128]{1,0:T(1,128)}', space=vmem, size = 0x9000, scoped, tag = 'internal scratch']
  %s0 = inlined_call_operand.vmem [shape: f32[2,4,9,9,128], index: 0, kind: input, shape index: {}]
  %s1 = inlined_call_operand.vmem [shape: f32[1152,128], index: 1, kind: input, shape index: {}]
  %s2 = inlined_call_operand.vmem [shape: f32[128,128], index: 2, kind: input, shape index: {}]
  %s3 = inlined_call_operand.vmem [shape: f32[2,8,8,128], index: 3, kind: output, shape index: {0}]
  %s4 = inlined_call_operand.vmem [shape: f32[2,2,128], index: 4, kind: output, shape index: {1}]
  %s5 = inlined_call_operand.vmem [shape: f32[2,8,8,128], index: 5, kind: output, shape index: {2}]
  %s6 = inlined_call_operand.vmem [shape: f32[2,2,128], index: 6, kind: output, shape index: {3}]
  %7 = xla_tuple %s3, %s4, %s5, %s6
  %s8 = sld [smem:[#allocation0]]
  $region69: #{basic_block_pallas.3} parent=0
    _
  %s10 = ssub.s32 1, %s8
  %s11 = scalar_select 0, %s10, %s8
  loop: start=0, step=1, limit=4
  $region2: #{basic_block_pallas.3} parent=0 // loop_pre_header
    _
  $region3: #{basic_block_pallas.3} parent=0 // loop_header
    %s13 = sphi 0, %s17
    %p14 = scmp.ge.s32.totalorder %s13, 4
    %s23 = sphi 0, %s25
    %s26 = sphi 0, %s23
    %s27 = sphi 0, %s26
    %s43 = sphi 0, %s27
    %s47 = sphi 0, %s47
    %s49 = sphi 0, %s47
    %s50 = sphi 0, %s49
    %s64 = sphi 0, %s50
    %s68 = sphi 0, %s68
    %s70 = sphi 0, %s68
    %s71 = sphi 0, %s70
    %s85 = sphi 0, %s71
    %s91 = sphi 0, %s93
    %s94 = sphi 0, %s91
    %s95 = sphi 0, %s94
    %s111 = sphi 0, %s95
    %s117 = sphi 0, %s119
    %s120 = sphi 0, %s117
    %s121 = sphi 0, %s120
    %s137 = sphi 0, %s121
    %s143 = sphi 0, %s145
    %s146 = sphi 0, %s143
    %s147 = sphi 0, %s146
    %s163 = sphi 0, %s147
    %s169 = sphi 0, %s171
    %s172 = sphi 0, %s169
    %s173 = sphi 0, %s172
    %s189 = sphi 0, %s173
  $region4: #{basic_block_pallas.3} parent=0 // loop_header_branch
    %16 = sbr.rel (%p14) target = $region8
  $region5: #{basic_block_pallas.3} parent=0 // loop_body
    %s18 = ssub.s32 %s13, 1
    %s19 = ssub.s32 %s13, 2
    %s20 = sadd.s32 %s13, 1
    %s21 = ssub.s32 %s13, %s20
    %p22 = scmp.eq.s32.totalorder %s21, 0
    %s24 = sadd.s32 %s23, 1
    %s25 = scalar_select %p22, %s23, %s24
    %p28 = pneg %p22
    %p29 = scmp.eq.s32.totalorder %s13, 1
    %p30 = por %p28, %p29
    %p31 = scmp.ne.s32.totalorder %s23, %s26
    %p32 = scmp.eq.s32.totalorder %s13, 0
    %p33 = por %p31, %p32
    %p34 = scmp.ne.s32.totalorder %s23, %s26
    %p35 = scmp.eq.s32.totalorder %s18, 1
    %p36 = por %p34, %p35
    %p37 = scmp.ne.s32.totalorder %s26, %s27
    %p38 = scmp.eq.s32.totalorder %s18, 0
    %p39 = por %p37, %p38
    %p40 = scmp.ne.s32.totalorder %s26, %s27
    %p41 = scmp.eq.s32.totalorder %s19, 1
    %p42 = por %p40, %p41
    %p44 = scmp.ne.s32.totalorder %s27, %s43
    %p45 = scmp.eq.s32.totalorder %s19, 0
    %p46 = por %p44, %p45
    %s48 = sadd.s32 %s47, 1
    %p51 = scmp.eq.s32.totalorder %s13, 1
    %p52 = scmp.ne.s32.totalorder %s47, %s49
    %p53 = scmp.eq.s32.totalorder %s13, 0
    %p54 = por %p52, %p53
    %p55 = scmp.ne.s32.totalorder %s47, %s49
    %p56 = scmp.eq.s32.totalorder %s18, 1
    %p57 = por %p55, %p56
    %p58 = scmp.ne.s32.totalorder %s49, %s50
    %p59 = scmp.eq.s32.totalorder %s18, 0
    %p60 = por %p58, %p59
    %p61 = scmp.ne.s32.totalorder %s49, %s50
    %p62 = scmp.eq.s32.totalorder %s19, 1
    %p63 = por %p61, %p62
    %p65 = scmp.ne.s32.totalorder %s50, %s64
    %p66 = scmp.eq.s32.totalorder %s19, 0
    %p67 = por %p65, %p66
    %s69 = sadd.s32 %s68, 1
    %p72 = scmp.eq.s32.totalorder %s13, 1
    %p73 = scmp.ne.s32.totalorder %s68, %s70
    %p74 = scmp.eq.s32.totalorder %s13, 0
    %p75 = por %p73, %p74
    %p76 = scmp.ne.s32.totalorder %s68, %s70
    %p77 = scmp.eq.s32.totalorder %s18, 1
    %p78 = por %p76, %p77
    %p79 = scmp.ne.s32.totalorder %s70, %s71
    %p80 = scmp.eq.s32.totalorder %s18, 0
    %p81 = por %p79, %p80
    %p82 = scmp.ne.s32.totalorder %s70, %s71
    %p83 = scmp.eq.s32.totalorder %s19, 1
    %p84 = por %p82, %p83
    %p86 = scmp.ne.s32.totalorder %s71, %s85
    %p87 = scmp.eq.s32.totalorder %s19, 0
    %p88 = por %p86, %p87
    %s89 = ssub.s32 %s13, %s20
    %p90 = scmp.eq.s32.totalorder %s89, 0
    %s92 = sadd.s32 %s91, 1
    %s93 = scalar_select %p90, %s91, %s92
    %p96 = pneg %p90
    %p97 = scmp.eq.s32.totalorder %s13, 1
    %p98 = por %p96, %p97
    %p99 = scmp.ne.s32.totalorder %s91, %s94
    %p100 = scmp.eq.s32.totalorder %s13, 0
    %p101 = por %p99, %p100
    %p102 = scmp.ne.s32.totalorder %s91, %s94
    %p103 = scmp.eq.s32.totalorder %s18, 1
    %p104 = por %p102, %p103
    %p105 = scmp.ne.s32.totalorder %s94, %s95
    %p106 = scmp.eq.s32.totalorder %s18, 0
    %p107 = por %p105, %p106
    %p108 = scmp.ne.s32.totalorder %s94, %s95
    %p109 = scmp.eq.s32.totalorder %s19, 1
    %p110 = por %p108, %p109
    %p112 = scmp.ne.s32.totalorder %s95, %s111
    %p113 = scmp.eq.s32.totalorder %s19, 0
    %p114 = por %p112, %p113
    %s115 = ssub.s32 %s13, %s20
    %p116 = scmp.eq.s32.totalorder %s115, 0
    %s118 = sadd.s32 %s117, 1
    %s119 = scalar_select %p116, %s117, %s118
    %p122 = pneg %p116
    %p123 = scmp.eq.s32.totalorder %s13, 1
    %p124 = por %p122, %p123
    %p125 = scmp.ne.s32.totalorder %s117, %s120
    %p126 = scmp.eq.s32.totalorder %s13, 0
    %p127 = por %p125, %p126
    %p128 = scmp.ne.s32.totalorder %s117, %s120
    %p129 = scmp.eq.s32.totalorder %s18, 1
    %p130 = por %p128, %p129
    %p131 = scmp.ne.s32.totalorder %s120, %s121
    %p132 = scmp.eq.s32.totalorder %s18, 0
    %p133 = por %p131, %p132
    %p134 = scmp.ne.s32.totalorder %s120, %s121
    %p135 = scmp.eq.s32.totalorder %s19, 1
    %p136 = por %p134, %p135
    %p138 = scmp.ne.s32.totalorder %s121, %s137
    %p139 = scmp.eq.s32.totalorder %s19, 0
    %p140 = por %p138, %p139
    %s141 = ssub.s32 %s13, %s20
    %p142 = scmp.eq.s32.totalorder %s141, 0
    %s144 = sadd.s32 %s143, 1
    %s145 = scalar_select %p142, %s143, %s144
    %p148 = pneg %p142
    %p149 = scmp.eq.s32.totalorder %s13, 1
    %p150 = por %p148, %p149
    %p151 = scmp.ne.s32.totalorder %s143, %s146
    %p152 = scmp.eq.s32.totalorder %s13, 0
    %p153 = por %p151, %p152
    %p154 = scmp.ne.s32.totalorder %s143, %s146
    %p155 = scmp.eq.s32.totalorder %s18, 1
    %p156 = por %p154, %p155
    %p157 = scmp.ne.s32.totalorder %s146, %s147
    %p158 = scmp.eq.s32.totalorder %s18, 0
    %p159 = por %p157, %p158
    %p160 = scmp.ne.s32.totalorder %s146, %s147
    %p161 = scmp.eq.s32.totalorder %s19, 1
    %p162 = por %p160, %p161
    %p164 = scmp.ne.s32.totalorder %s147, %s163
    %p165 = scmp.eq.s32.totalorder %s19, 0
    %p166 = por %p164, %p165
    %s167 = ssub.s32 %s13, %s20
    %p168 = scmp.eq.s32.totalorder %s167, 0
    %s170 = sadd.s32 %s169, 1
    %s171 = scalar_select %p168, %s169, %s170
    %p174 = pneg %p168
    %p175 = scmp.eq.s32.totalorder %s13, 1
    %p176 = por %p174, %p175
    %p177 = scmp.ne.s32.totalorder %s169, %s172
    %p178 = scmp.eq.s32.totalorder %s13, 0
    %p179 = por %p177, %p178
    %p180 = scmp.ne.s32.totalorder %s169, %s172
    %p181 = scmp.eq.s32.totalorder %s18, 1
    %p182 = por %p180, %p181
    %p183 = scmp.ne.s32.totalorder %s172, %s173
    %p184 = scmp.eq.s32.totalorder %s18, 0
    %p185 = por %p183, %p184
    %p186 = scmp.ne.s32.totalorder %s172, %s173
    %p187 = scmp.eq.s32.totalorder %s19, 1
    %p188 = por %p186, %p187
    %p190 = scmp.ne.s32.totalorder %s173, %s189
    %p191 = scmp.eq.s32.totalorder %s19, 0
    %p192 = por %p190, %p191
    %p193 = scmp.le.s32.totalorder 1, %s13
    %p194 = scmp.lt.s32.totalorder %s13, 3
    %p195 = pnand %p193, %p194
    %p196 = pneg %p195
    // Predicated region
    $region9: #{basic_block_pallas.3} parent=5 // pred_check
      _
    $region10: #{basic_block_pallas.3} parent=5 // pred_check_branch
      %198 = sbr.rel (%p195) target = $region12
    $region11: #{basic_block_pallas.3} parent=5 // pred_region
      %s199 = ssub.s32 %s13, 1
      // Predicated region
      $region13: #{basic_block_pallas.3} parent=11 // pred_check
        %p200 = pneg %p60
      $region14: #{basic_block_pallas.3} parent=11 // pred_check_branch
        %202 = sbr.rel (%p200) target = $region16
      $region15: #{basic_block_pallas.3} parent=11 // pred_region
        _
      $region16: #{basic_block_pallas.3} parent=11 // pred_fallthru
        _
      // Predicated region
      $region17: #{basic_block_pallas.3} parent=11 // pred_check
        %p203 = pneg %p81
      $region18: #{basic_block_pallas.3} parent=11 // pred_check_branch
        %205 = sbr.rel (%p203) target = $region20
      $region19: #{basic_block_pallas.3} parent=11 // pred_region
        _
      $region20: #{basic_block_pallas.3} parent=11 // pred_fallthru
        _
    $region12: #{basic_block_pallas.3} parent=5 // pred_fallthru
      _
    %p206 = scmp.lt.s32.totalorder %s13, 2
    // Predicated region
    $region21: #{basic_block_pallas.3} parent=5 // pred_check
      %p207 = pneg %p206
    $region22: #{basic_block_pallas.3} parent=5 // pred_check_branch
      %209 = sbr.rel (%p207) target = $region24
    $region23: #{basic_block_pallas.3} parent=5 // pred_region
      // Predicated region
      $region25: #{basic_block_pallas.3} parent=23 // pred_check
        %p210 = pneg %p33
      $region26: #{basic_block_pallas.3} parent=23 // pred_check_branch
        %212 = sbr.rel (%p210) target = $region28
      $region27: #{basic_block_pallas.3} parent=23 // pred_region
        %p213 = scmp.lt.s32.totalorder %s13, 1
        %s214 = scalar_select %p213, %s13, 1
        %s215 = smul.addr %s214, 72
        %s216 = smul.addr %s215, 8
        %s217 = scalar_lea.vmem %s0, %s216
      $region28: #{basic_block_pallas.3} parent=23 // pred_fallthru
        _
    $region24: #{basic_block_pallas.3} parent=5 // pred_fallthru
      _
    %p218 = scmp.le.s32.totalorder 1, %s13
    %p219 = scmp.lt.s32.totalorder %s13, 3
    %p220 = pnand %p218, %p219
    %p221 = pneg %p220
    // Predicated region
    $region29: #{basic_block_pallas.3} parent=5 // pred_check
      _
    $region30: #{basic_block_pallas.3} parent=5 // pred_check_branch
      %223 = sbr.rel (%p220) target = $region32
    $region31: #{basic_block_pallas.3} parent=5 // pred_region
      %s224 = ssub.s32 %s13, 1
      %p225 = scmp.lt.s32.totalorder %s18, 1
      %s226 = scalar_select %p225, %s18, 1
      %s227 = smul.addr %s226, 72
      %s228 = smul.addr %s227, 8
      %s229 = scalar_lea.vmem %s0, %s228
      %p230 = pneg %p39
      %p231 = pneg %p36
      %p232 = pneg %p60
      %p233 = pneg %p57
      %p234 = pneg %p81
      %p235 = pneg %p78
      %p236 = pneg %p107
      %p237 = pneg %p104
      %p238 = scmp.lt.s32.totalorder %s18, 1
      %s239 = scalar_select %p238, %s18, 1
      %s240 = smul.addr %s239, 8
      %s241 = smul.addr %s240, 8
      %s242 = scalar_lea.vmem %s3, %s241
      %p243 = pneg %p133
      %p244 = pneg %p130
      %p245 = scmp.lt.s32.totalorder %s18, 1
      %s246 = scalar_select %p245, %s18, 1
      %s247 = smul.addr %s246, 2
      %s248 = scalar_lea.vmem %s4, %s247
      %p249 = pneg %p159
      %p250 = pneg %p156
      %p251 = scmp.lt.s32.totalorder %s18, 1
      %s252 = scalar_select %p251, %s18, 1
      %s253 = smul.addr %s252, 8
      %s254 = smul.addr %s253, 8
      %s255 = scalar_lea.vmem %s5, %s254
      %p256 = pneg %p185
      %p257 = pneg %p182
      %p258 = scmp.lt.s32.totalorder %s18, 1
      %s259 = scalar_select %p258, %s18, 1
      %s260 = smul.addr %s259, 2
      %s261 = scalar_lea.vmem %s6, %s260
      %p262 = scmp.lt.s32.totalorder %s18, 1
      %s263 = scalar_select %p262, %s18, 1
      %s264 = smul.addr %s263, 72
      %s265 = smul.addr %s264, 8
      %s266 = scalar_lea.vmem %s0, %s265
      %p267 = scmp.lt.s32.totalorder %s18, 1
      %s268 = scalar_select %p267, %s18, 1
      %s269 = smul.addr %s268, 8
      %s270 = smul.addr %s269, 8
      %s271 = scalar_lea.vmem %s3, %s270
      %p272 = scmp.lt.s32.totalorder %s18, 1
      %s273 = scalar_select %p272, %s18, 1
      %s274 = smul.addr %s273, 2
      %s275 = scalar_lea.vmem %s4, %s274
      %p276 = scmp.lt.s32.totalorder %s18, 1
      %s277 = scalar_select %p276, %s18, 1
      %s278 = smul.addr %s277, 8
      %s279 = smul.addr %s278, 8
      %s280 = scalar_lea.vmem %s5, %s279
      %p281 = scmp.lt.s32.totalorder %s18, 1
      %s282 = scalar_select %p281, %s18, 1
      %s283 = smul.addr %s282, 2
      %s284 = scalar_lea.vmem %s6, %s283
      %v285 = vld [vmem:[%s266] sm:$0xff]
      %v286 = vld [vmem:[%s266 + $0x10] sm:$0xff]
      %v287 = vld [vmem:[%s266 + $0x20] sm:$0xff]
      %v288 = vld [vmem:[%s266 + $0x30] sm:$0xff]
      %v289 = vld [vmem:[%s266 + $0x40] sm:$0xff]
      %v290 = vld [vmem:[%s266 + $0x50] sm:$0xff]
      %v291 = vld [vmem:[%s266 + $0x60] sm:$0xff]
      %v292 = vld [vmem:[%s266 + $0x70] sm:$0xff]
      %v293 = vld [vmem:[%s1] sm:$0xff]
      %v294 = vld [vmem:[%s1 + $0x8] sm:$0xff]
      %v295 = vld [vmem:[%s1 + $0x10] sm:$0xff]
      %v296 = vld [vmem:[%s1 + $0x18] sm:$0xff]
      %v297 = vld [vmem:[%s1 + $0x20] sm:$0xff]
      %v298 = vld [vmem:[%s1 + $0x28] sm:$0xff]
      %v299 = vld [vmem:[%s1 + $0x30] sm:$0xff]
      %v300 = vld [vmem:[%s1 + $0x38] sm:$0xff]
      %v301 = vld [vmem:[%s1 + $0x40] sm:$0xff]
      %v302 = vld [vmem:[%s1 + $0x48] sm:$0xff]
      %v303 = vld [vmem:[%s1 + $0x50] sm:$0xff]
      %v304 = vld [vmem:[%s1 + $0x58] sm:$0xff]
      %v305 = vld [vmem:[%s1 + $0x60] sm:$0xff]
      %v306 = vld [vmem:[%s1 + $0x68] sm:$0xff]
      %v307 = vld [vmem:[%s1 + $0x70] sm:$0xff]
      %v308 = vld [vmem:[%s1 + $0x78] sm:$0xff]
      %s309 = scalar_lea.vmem %s266, 144
      %v310 = vld [vmem:[%s309] sm:$0xff]
      %v311 = vld [vmem:[%s309 + $0x10] sm:$0xff]
      %v312 = vld [vmem:[%s309 + $0x20] sm:$0xff]
      %v313 = vld [vmem:[%s309 + $0x30] sm:$0xff]
      %v314 = vld [vmem:[%s309 + $0x40] sm:$0xff]
      %v315 = vld [vmem:[%s309 + $0x50] sm:$0xff]
      %v316 = vld [vmem:[%s309 + $0x60] sm:$0xff]
      %v317 = vld [vmem:[%s309 + $0x70] sm:$0xff]
      %v318 = vld [vmem:[%s1 + $0x80] sm:$0xff]
      %v319 = vld [vmem:[%s1 + $0x88] sm:$0xff]
      %v320 = vld [vmem:[%s1 + $0x90] sm:$0xff]
      %v321 = vld [vmem:[%s1 + $0x98] sm:$0xff]
      %v322 = vld [vmem:[%s1 + $0xa0] sm:$0xff]
      %v323 = vld [vmem:[%s1 + $0xa8] sm:$0xff]
      %v324 = vld [vmem:[%s1 + $0xb0] sm:$0xff]
      %v325 = vld [vmem:[%s1 + $0xb8] sm:$0xff]
      %v326 = vld [vmem:[%s1 + $0xc0] sm:$0xff]
      %v327 = vld [vmem:[%s1 + $0xc8] sm:$0xff]
      %v328 = vld [vmem:[%s1 + $0xd0] sm:$0xff]
      %v329 = vld [vmem:[%s1 + $0xd8] sm:$0xff]
      %v330 = vld [vmem:[%s1 + $0xe0] sm:$0xff]
      %v331 = vld [vmem:[%s1 + $0xe8] sm:$0xff]
      %v332 = vld [vmem:[%s1 + $0xf0] sm:$0xff]
      %v333 = vld [vmem:[%s1 + $0xf8] sm:$0xff]
      %334 = vmatpush.msra.mxu0 %v333
      %335 = vmatpush.msra.mxu0 %v332
      %336 = vmatpush.msra.mxu0 %v331
      %337 = vmatpush.msra.mxu0 %v330
      %338 = vmatpush.msra.mxu0 %v329
      %339 = vmatpush.msra.mxu0 %v328
      %340 = vmatpush.msra.mxu0 %v327
      %341 = vmatpush.msra.mxu0 %v326
      %342 = vmatpush.msra.mxu0 %v325
      %343 = vmatpush.msra.mxu0 %v324
      %344 = vmatpush.msra.mxu0 %v323
      %345 = vmatpush.msra.mxu0 %v322
      %346 = vmatpush.msra.mxu0 %v321
      %347 = vmatpush.msra.mxu0 %v320
      %348 = vmatpush.msra.mxu0 %v319
      %349 = vmatpush.msra.mxu0 %v318
      %350 = vmatmul.f32.gmra.mxu0 %v310
      %v351 = vpop.f32.mrf.mxu0
      %v352 = vadd.f32 0.0, %v351
      %353 = vmatmul.f32.gmra.mxu0 %v311
      %v354 = vpop.f32.mrf.mxu0
      %v355 = vadd.f32 0.0, %v354
      %356 = vmatmul.f32.gmra.mxu0 %v312
      %v357 = vpop.f32.mrf.mxu0
      %v358 = vadd.f32 0.0, %v357
      %359 = vmatmul.f32.gmra.mxu0 %v313
      %v360 = vpop.f32.mrf.mxu0
      %v361 = vadd.f32 0.0, %v360
      %362 = vmatmul.f32.gmra.mxu0 %v314
      %v363 = vpop.f32.mrf.mxu0
      %v364 = vadd.f32 0.0, %v363
      %365 = vmatmul.f32.gmra.mxu0 %v315
      %v366 = vpop.f32.mrf.mxu0
      %v367 = vadd.f32 0.0, %v366
      %368 = vmatmul.f32.gmra.mxu0 %v316
      %v369 = vpop.f32.mrf.mxu0
      %v370 = vadd.f32 0.0, %v369
      %371 = vmatmul.f32.gmra.mxu0 %v317
      %v372 = vpop.f32.mrf.mxu0
      %v373 = vadd.f32 0.0, %v372
      %374 = vdwg.mxu0
      %375 = vmatpush.msra.mxu0 %v308
      %376 = vmatpush.msra.mxu0 %v307
      %377 = vmatpush.msra.mxu0 %v306
      %378 = vmatpush.msra.mxu0 %v305
      %379 = vmatpush.msra.mxu0 %v304
      %380 = vmatpush.msra.mxu0 %v303
      %381 = vmatpush.msra.mxu0 %v302
      %382 = vmatpush.msra.mxu0 %v301
      %383 = vmatpush.msra.mxu0 %v300
      %384 = vmatpush.msra.mxu0 %v299
      %385 = vmatpush.msra.mxu0 %v298
      %386 = vmatpush.msra.mxu0 %v297
      %387 = vmatpush.msra.mxu0 %v296
      %388 = vmatpush.msra.mxu0 %v295
      %389 = vmatpush.msra.mxu0 %v294
      %390 = vmatpush.msra.mxu0 %v293
      %391 = vmatmul.f32.gmra.mxu0 %v285
      %v392 = vpop.f32.mrf.mxu0
      %v393 = vadd.f32 %v352, %v392
      %394 = vmatmul.f32.gmra.mxu0 %v286
      %v395 = vpop.f32.mrf.mxu0
      %v396 = vadd.f32 %v355, %v395
      %397 = vmatmul.f32.gmra.mxu0 %v287
      %v398 = vpop.f32.mrf.mxu0
      %v399 = vadd.f32 %v358, %v398
      %400 = vmatmul.f32.gmra.mxu0 %v288
      %v401 = vpop.f32.mrf.mxu0
      %v402 = vadd.f32 %v361, %v401
      %403 = vmatmul.f32.gmra.mxu0 %v289
      %v404 = vpop.f32.mrf.mxu0
      %v405 = vadd.f32 %v364, %v404
      %406 = vmatmul.f32.gmra.mxu0 %v290
      %v407 = vpop.f32.mrf.mxu0
      %v408 = vadd.f32 %v367, %v407
      %409 = vmatmul.f32.gmra.mxu0 %v291
      %v410 = vpop.f32.mrf.mxu0
      %v411 = vadd.f32 %v370, %v410
      %412 = vmatmul.f32.gmra.mxu0 %v292
      %v413 = vpop.f32.mrf.mxu0
      %v414 = vadd.f32 %v373, %v413
      %415 = vdwg.mxu0
      %v416 = vld [vmem:[%s266 + $0x1] sm:$0xff]
      %v417 = vld [vmem:[%s266 + $0x11] sm:$0xff]
      %v418 = vld [vmem:[%s266 + $0x21] sm:$0xff]
      %v419 = vld [vmem:[%s266 + $0x31] sm:$0xff]
      %v420 = vld [vmem:[%s266 + $0x41] sm:$0xff]
      %v421 = vld [vmem:[%s266 + $0x51] sm:$0xff]
      %v422 = vld [vmem:[%s266 + $0x61] sm:$0xff]
      %v423 = vld [vmem:[%s266 + $0x71] sm:$0xff]
      %v424 = vld [vmem:[%s1 + $0x100] sm:$0xff]
      %v425 = vld [vmem:[%s1 + $0x108] sm:$0xff]
      %v426 = vld [vmem:[%s1 + $0x110] sm:$0xff]
      %v427 = vld [vmem:[%s1 + $0x118] sm:$0xff]
      %v428 = vld [vmem:[%s1 + $0x120] sm:$0xff]
      %v429 = vld [vmem:[%s1 + $0x128] sm:$0xff]
      %v430 = vld [vmem:[%s1 + $0x130] sm:$0xff]
      %v431 = vld [vmem:[%s1 + $0x138] sm:$0xff]
      %v432 = vld [vmem:[%s1 + $0x140] sm:$0xff]
      %v433 = vld [vmem:[%s1 + $0x148] sm:$0xff]
      %v434 = vld [vmem:[%s1 + $0x150] sm:$0xff]
      %v435 = vld [vmem:[%s1 + $0x158] sm:$0xff]
      %v436 = vld [vmem:[%s1 + $0x160] sm:$0xff]
      %v437 = vld [vmem:[%s1 + $0x168] sm:$0xff]
      %v438 = vld [vmem:[%s1 + $0x170] sm:$0xff]
      %v439 = vld [vmem:[%s1 + $0x178] sm:$0xff]
      %440 = vmatpush.msra.mxu0 %v439
      %441 = vmatpush.msra.mxu0 %v438
      %442 = vmatpush.msra.mxu0 %v437
      %443 = vmatpush.msra.mxu0 %v436
      %444 = vmatpush.msra.mxu0 %v435
      %445 = vmatpush.msra.mxu0 %v434
      %446 = vmatpush.msra.mxu0 %v433
      %447 = vmatpush.msra.mxu0 %v432
      %448 = vmatpush.msra.mxu0 %v431
      %449 = vmatpush.msra.mxu0 %v430
      %450 = vmatpush.msra.mxu0 %v429
      %451 = vmatpush.msra.mxu0 %v428
      %452 = vmatpush.msra.mxu0 %v427
      %453 = vmatpush.msra.mxu0 %v426
      %454 = vmatpush.msra.mxu0 %v425
      %455 = vmatpush.msra.mxu0 %v424
      %456 = vmatmul.f32.gmra.mxu0 %v416
      %v457 = vpop.f32.mrf.mxu0
      %v458 = vadd.f32 0.0, %v457
      %459 = vmatmul.f32.gmra.mxu0 %v417
      %v460 = vpop.f32.mrf.mxu0
      %v461 = vadd.f32 0.0, %v460
      %462 = vmatmul.f32.gmra.mxu0 %v418
      %v463 = vpop.f32.mrf.mxu0
      %v464 = vadd.f32 0.0, %v463
      %465 = vmatmul.f32.gmra.mxu0 %v419
      %v466 = vpop.f32.mrf.mxu0
      %v467 = vadd.f32 0.0, %v466
      %468 = vmatmul.f32.gmra.mxu0 %v420
      %v469 = vpop.f32.mrf.mxu0
      %v470 = vadd.f32 0.0, %v469
      %471 = vmatmul.f32.gmra.mxu0 %v421
      %v472 = vpop.f32.mrf.mxu0
      %v473 = vadd.f32 0.0, %v472
      %474 = vmatmul.f32.gmra.mxu0 %v422
      %v475 = vpop.f32.mrf.mxu0
      %v476 = vadd.f32 0.0, %v475
      %477 = vmatmul.f32.gmra.mxu0 %v423
      %v478 = vpop.f32.mrf.mxu0
      %v479 = vadd.f32 0.0, %v478
      %480 = vdwg.mxu0
      %v481 = vadd.f32 %v393, %v458
      %v482 = vadd.f32 %v396, %v461
      %v483 = vadd.f32 %v399, %v464
      %v484 = vadd.f32 %v402, %v467
      %v485 = vadd.f32 %v405, %v470
      %v486 = vadd.f32 %v408, %v473
      %v487 = vadd.f32 %v411, %v476
      %v488 = vadd.f32 %v414, %v479
      %s489 = scalar_lea.vmem %s266, 288
      %v490 = vld [vmem:[%s489] sm:$0xff]
      %v491 = vld [vmem:[%s489 + $0x10] sm:$0xff]
      %v492 = vld [vmem:[%s489 + $0x20] sm:$0xff]
      %v493 = vld [vmem:[%s489 + $0x30] sm:$0xff]
      %v494 = vld [vmem:[%s489 + $0x40] sm:$0xff]
      %v495 = vld [vmem:[%s489 + $0x50] sm:$0xff]
      %v496 = vld [vmem:[%s489 + $0x60] sm:$0xff]
      %v497 = vld [vmem:[%s489 + $0x70] sm:$0xff]
      %v498 = vld [vmem:[%s1 + $0x180] sm:$0xff]
      %v499 = vld [vmem:[%s1 + $0x188] sm:$0xff]
      %v500 = vld [vmem:[%s1 + $0x190] sm:$0xff]
      %v501 = vld [vmem:[%s1 + $0x198] sm:$0xff]
      %v502 = vld [vmem:[%s1 + $0x1a0] sm:$0xff]
      %v503 = vld [vmem:[%s1 + $0x1a8] sm:$0xff]
      %v504 = vld [vmem:[%s1 + $0x1b0] sm:$0xff]
      %v505 = vld [vmem:[%s1 + $0x1b8] sm:$0xff]
      %v506 = vld [vmem:[%s1 + $0x1c0] sm:$0xff]
      %v507 = vld [vmem:[%s1 + $0x1c8] sm:$0xff]
      %v508 = vld [vmem:[%s1 + $0x1d0] sm:$0xff]
      %v509 = vld [vmem:[%s1 + $0x1d8] sm:$0xff]
      %v510 = vld [vmem:[%s1 + $0x1e0] sm:$0xff]
      %v511 = vld [vmem:[%s1 + $0x1e8] sm:$0xff]
      %v512 = vld [vmem:[%s1 + $0x1f0] sm:$0xff]
      %v513 = vld [vmem:[%s1 + $0x1f8] sm:$0xff]
      %514 = vmatpush.msra.mxu0 %v513
      %515 = vmatpush.msra.mxu0 %v512
      %516 = vmatpush.msra.mxu0 %v511
      %517 = vmatpush.msra.mxu0 %v510
      %518 = vmatpush.msra.mxu0 %v509
      %519 = vmatpush.msra.mxu0 %v508
      %520 = vmatpush.msra.mxu0 %v507
      %521 = vmatpush.msra.mxu0 %v506
      %522 = vmatpush.msra.mxu0 %v505
      %523 = vmatpush.msra.mxu0 %v504
      %524 = vmatpush.msra.mxu0 %v503
      %525 = vmatpush.msra.mxu0 %v502
      %526 = vmatpush.msra.mxu0 %v501
      %527 = vmatpush.msra.mxu0 %v500
      %528 = vmatpush.msra.mxu0 %v499
      %529 = vmatpush.msra.mxu0 %v498
      %530 = vmatmul.f32.gmra.mxu0 %v490
      %v531 = vpop.f32.mrf.mxu0
      %v532 = vadd.f32 0.0, %v531
      %533 = vmatmul.f32.gmra.mxu0 %v491
      %v534 = vpop.f32.mrf.mxu0
      %v535 = vadd.f32 0.0, %v534
      %536 = vmatmul.f32.gmra.mxu0 %v492
      %v537 = vpop.f32.mrf.mxu0
      %v538 = vadd.f32 0.0, %v537
      %539 = vmatmul.f32.gmra.mxu0 %v493
      %v540 = vpop.f32.mrf.mxu0
      %v541 = vadd.f32 0.0, %v540
      %542 = vmatmul.f32.gmra.mxu0 %v494
      %v543 = vpop.f32.mrf.mxu0
      %v544 = vadd.f32 0.0, %v543
      %545 = vmatmul.f32.gmra.mxu0 %v495
      %v546 = vpop.f32.mrf.mxu0
      %v547 = vadd.f32 0.0, %v546
      %548 = vmatmul.f32.gmra.mxu0 %v496
      %v549 = vpop.f32.mrf.mxu0
      %v550 = vadd.f32 0.0, %v549
      %551 = vmatmul.f32.gmra.mxu0 %v497
      %v552 = vpop.f32.mrf.mxu0
      %v553 = vadd.f32 0.0, %v552
      %554 = vdwg.mxu0
      %v555 = vadd.f32 %v481, %v532
      %v556 = vadd.f32 %v482, %v535
      %v557 = vadd.f32 %v483, %v538
      %v558 = vadd.f32 %v484, %v541
      %v559 = vadd.f32 %v485, %v544
      %v560 = vadd.f32 %v486, %v547
      %v561 = vadd.f32 %v487, %v550
      %v562 = vadd.f32 %v488, %v553
      %s563 = scalar_lea.vmem %s266, 432
      %v564 = vld [vmem:[%s563] sm:$0xff]
      %v565 = vld [vmem:[%s563 + $0x10] sm:$0xff]
      %v566 = vld [vmem:[%s563 + $0x20] sm:$0xff]
      %v567 = vld [vmem:[%s563 + $0x30] sm:$0xff]
      %v568 = vld [vmem:[%s563 + $0x40] sm:$0xff]
      %v569 = vld [vmem:[%s563 + $0x50] sm:$0xff]
      %v570 = vld [vmem:[%s563 + $0x60] sm:$0xff]
      %v571 = vld [vmem:[%s563 + $0x70] sm:$0xff]
      %v572 = vld [vmem:[%s1 + $0x200] sm:$0xff]
      %v573 = vld [vmem:[%s1 + $0x208] sm:$0xff]
      %v574 = vld [vmem:[%s1 + $0x210] sm:$0xff]
      %v575 = vld [vmem:[%s1 + $0x218] sm:$0xff]
      %v576 = vld [vmem:[%s1 + $0x220] sm:$0xff]
      %v577 = vld [vmem:[%s1 + $0x228] sm:$0xff]
      %v578 = vld [vmem:[%s1 + $0x230] sm:$0xff]
      %v579 = vld [vmem:[%s1 + $0x238] sm:$0xff]
      %v580 = vld [vmem:[%s1 + $0x240] sm:$0xff]
      %v581 = vld [vmem:[%s1 + $0x248] sm:$0xff]
      %v582 = vld [vmem:[%s1 + $0x250] sm:$0xff]
      %v583 = vld [vmem:[%s1 + $0x258] sm:$0xff]
      %v584 = vld [vmem:[%s1 + $0x260] sm:$0xff]
      %v585 = vld [vmem:[%s1 + $0x268] sm:$0xff]
      %v586 = vld [vmem:[%s1 + $0x270] sm:$0xff]
      %v587 = vld [vmem:[%s1 + $0x278] sm:$0xff]
      %588 = vmatpush.msra.mxu0 %v587
      %589 = vmatpush.msra.mxu0 %v586
      %590 = vmatpush.msra.mxu0 %v585
      %591 = vmatpush.msra.mxu0 %v584
      %592 = vmatpush.msra.mxu0 %v583
      %593 = vmatpush.msra.mxu0 %v582
      %594 = vmatpush.msra.mxu0 %v581
      %595 = vmatpush.msra.mxu0 %v580
      %596 = vmatpush.msra.mxu0 %v579
      %597 = vmatpush.msra.mxu0 %v578
      %598 = vmatpush.msra.mxu0 %v577
      %599 = vmatpush.msra.mxu0 %v576
      %600 = vmatpush.msra.mxu0 %v575
      %601 = vmatpush.msra.mxu0 %v574
      %602 = vmatpush.msra.mxu0 %v573
      %603 = vmatpush.msra.mxu0 %v572
      %604 = vmatmul.f32.gmra.mxu0 %v564
      %v605 = vpop.f32.mrf.mxu0
      %v606 = vadd.f32 0.0, %v605
      %607 = vmatmul.f32.gmra.mxu0 %v565
      %v608 = vpop.f32.mrf.mxu0
      %v609 = vadd.f32 0.0, %v608
      %610 = vmatmul.f32.gmra.mxu0 %v566
      %v611 = vpop.f32.mrf.mxu0
      %v612 = vadd.f32 0.0, %v611
      %613 = vmatmul.f32.gmra.mxu0 %v567
      %v614 = vpop.f32.mrf.mxu0
      %v615 = vadd.f32 0.0, %v614
      %616 = vmatmul.f32.gmra.mxu0 %v568
      %v617 = vpop.f32.mrf.mxu0
      %v618 = vadd.f32 0.0, %v617
      %619 = vmatmul.f32.gmra.mxu0 %v569
      %v620 = vpop.f32.mrf.mxu0
      %v621 = vadd.f32 0.0, %v620
      %622 = vmatmul.f32.gmra.mxu0 %v570
      %v623 = vpop.f32.mrf.mxu0
      %v624 = vadd.f32 0.0, %v623
      %625 = vmatmul.f32.gmra.mxu0 %v571
      %v626 = vpop.f32.mrf.mxu0
      %v627 = vadd.f32 0.0, %v626
      %628 = vdwg.mxu0
      %v629 = vadd.f32 %v555, %v606
      %v630 = vadd.f32 %v556, %v609
      %v631 = vadd.f32 %v557, %v612
      %v632 = vadd.f32 %v558, %v615
      %v633 = vadd.f32 %v559, %v618
      %v634 = vadd.f32 %v560, %v621
      %v635 = vadd.f32 %v561, %v624
      %v636 = vadd.f32 %v562, %v627
      %v637 = vld [vmem:[%s489 + $0x1] sm:$0xff]
      %v638 = vld [vmem:[%s489 + $0x11] sm:$0xff]
      %v639 = vld [vmem:[%s489 + $0x21] sm:$0xff]
      %v640 = vld [vmem:[%s489 + $0x31] sm:$0xff]
      %v641 = vld [vmem:[%s489 + $0x41] sm:$0xff]
      %v642 = vld [vmem:[%s489 + $0x51] sm:$0xff]
      %v643 = vld [vmem:[%s489 + $0x61] sm:$0xff]
      %v644 = vld [vmem:[%s489 + $0x71] sm:$0xff]
      %v645 = vld [vmem:[%s1 + $0x280] sm:$0xff]
      %v646 = vld [vmem:[%s1 + $0x288] sm:$0xff]
      %v647 = vld [vmem:[%s1 + $0x290] sm:$0xff]
      %v648 = vld [vmem:[%s1 + $0x298] sm:$0xff]
      %v649 = vld [vmem:[%s1 + $0x2a0] sm:$0xff]
      %v650 = vld [vmem:[%s1 + $0x2a8] sm:$0xff]
      %v651 = vld [vmem:[%s1 + $0x2b0] sm:$0xff]
      %v652 = vld [vmem:[%s1 + $0x2b8] sm:$0xff]
      %v653 = vld [vmem:[%s1 + $0x2c0] sm:$0xff]
      %v654 = vld [vmem:[%s1 + $0x2c8] sm:$0xff]
      %v655 = vld [vmem:[%s1 + $0x2d0] sm:$0xff]
      %v656 = vld [vmem:[%s1 + $0x2d8] sm:$0xff]
      %v657 = vld [vmem:[%s1 + $0x2e0] sm:$0xff]
      %v658 = vld [vmem:[%s1 + $0x2e8] sm:$0xff]
      %v659 = vld [vmem:[%s1 + $0x2f0] sm:$0xff]
      %v660 = vld [vmem:[%s1 + $0x2f8] sm:$0xff]
      %661 = vmatpush.msra.mxu0 %v660
      %662 = vmatpush.msra.mxu0 %v659
      %663 = vmatpush.msra.mxu0 %v658
      %664 = vmatpush.msra.mxu0 %v657
      %665 = vmatpush.msra.mxu0 %v656
      %666 = vmatpush.msra.mxu0 %v655
      %667 = vmatpush.msra.mxu0 %v654
      %668 = vmatpush.msra.mxu0 %v653
      %669 = vmatpush.msra.mxu0 %v652
      %670 = vmatpush.msra.mxu0 %v651
      %671 = vmatpush.msra.mxu0 %v650
      %672 = vmatpush.msra.mxu0 %v649
      %673 = vmatpush.msra.mxu0 %v648
      %674 = vmatpush.msra.mxu0 %v647
      %675 = vmatpush.msra.mxu0 %v646
      %676 = vmatpush.msra.mxu0 %v645
      %677 = vmatmul.f32.gmra.mxu0 %v637
      %v678 = vpop.f32.mrf.mxu0
      %v679 = vadd.f32 0.0, %v678
      %680 = vmatmul.f32.gmra.mxu0 %v638
      %v681 = vpop.f32.mrf.mxu0
      %v682 = vadd.f32 0.0, %v681
      %683 = vmatmul.f32.gmra.mxu0 %v639
      %v684 = vpop.f32.mrf.mxu0
      %v685 = vadd.f32 0.0, %v684
      %686 = vmatmul.f32.gmra.mxu0 %v640
      %v687 = vpop.f32.mrf.mxu0
      %v688 = vadd.f32 0.0, %v687
      %689 = vmatmul.f32.gmra.mxu0 %v641
      %v690 = vpop.f32.mrf.mxu0
      %v691 = vadd.f32 0.0, %v690
      %692 = vmatmul.f32.gmra.mxu0 %v642
      %v693 = vpop.f32.mrf.mxu0
      %v694 = vadd.f32 0.0, %v693
      %695 = vmatmul.f32.gmra.mxu0 %v643
      %v696 = vpop.f32.mrf.mxu0
      %v697 = vadd.f32 0.0, %v696
      %698 = vmatmul.f32.gmra.mxu0 %v644
      %v699 = vpop.f32.mrf.mxu0
      %v700 = vadd.f32 0.0, %v699
      %701 = vdwg.mxu0
      %v702 = vadd.f32 %v629, %v679
      %v703 = vadd.f32 %v630, %v682
      %v704 = vadd.f32 %v631, %v685
      %v705 = vadd.f32 %v632, %v688
      %v706 = vadd.f32 %v633, %v691
      %v707 = vadd.f32 %v634, %v694
      %v708 = vadd.f32 %v635, %v697
      %v709 = vadd.f32 %v636, %v700
      %s710 = scalar_lea.vmem %s266, 16
      %v711 = vld [vmem:[%s710] sm:$0xff]
      %v712 = vld [vmem:[%s710 + $0x10] sm:$0xff]
      %v713 = vld [vmem:[%s710 + $0x20] sm:$0xff]
      %v714 = vld [vmem:[%s710 + $0x30] sm:$0xff]
      %v715 = vld [vmem:[%s710 + $0x40] sm:$0xff]
      %v716 = vld [vmem:[%s710 + $0x50] sm:$0xff]
      %v717 = vld [vmem:[%s710 + $0x60] sm:$0xff]
      %v718 = vld [vmem:[%s710 + $0x70] sm:$0xff]
      %v719 = vld [vmem:[%s1 + $0x300] sm:$0xff]
      %v720 = vld [vmem:[%s1 + $0x308] sm:$0xff]
      %v721 = vld [vmem:[%s1 + $0x310] sm:$0xff]
      %v722 = vld [vmem:[%s1 + $0x318] sm:$0xff]
      %v723 = vld [vmem:[%s1 + $0x320] sm:$0xff]
      %v724 = vld [vmem:[%s1 + $0x328] sm:$0xff]
      %v725 = vld [vmem:[%s1 + $0x330] sm:$0xff]
      %v726 = vld [vmem:[%s1 + $0x338] sm:$0xff]
      %v727 = vld [vmem:[%s1 + $0x340] sm:$0xff]
      %v728 = vld [vmem:[%s1 + $0x348] sm:$0xff]
      %v729 = vld [vmem:[%s1 + $0x350] sm:$0xff]
      %v730 = vld [vmem:[%s1 + $0x358] sm:$0xff]
      %v731 = vld [vmem:[%s1 + $0x360] sm:$0xff]
      %v732 = vld [vmem:[%s1 + $0x368] sm:$0xff]
      %v733 = vld [vmem:[%s1 + $0x370] sm:$0xff]
      %v734 = vld [vmem:[%s1 + $0x378] sm:$0xff]
      %735 = vmatpush.msra.mxu0 %v734
      %736 = vmatpush.msra.mxu0 %v733
      %737 = vmatpush.msra.mxu0 %v732
      %738 = vmatpush.msra.mxu0 %v731
      %739 = vmatpush.msra.mxu0 %v730
      %740 = vmatpush.msra.mxu0 %v729
      %741 = vmatpush.msra.mxu0 %v728
      %742 = vmatpush.msra.mxu0 %v727
      %743 = vmatpush.msra.mxu0 %v726
      %744 = vmatpush.msra.mxu0 %v725
      %745 = vmatpush.msra.mxu0 %v724
      %746 = vmatpush.msra.mxu0 %v723
      %747 = vmatpush.msra.mxu0 %v722
      %748 = vmatpush.msra.mxu0 %v721
      %749 = vmatpush.msra.mxu0 %v720
      %750 = vmatpush.msra.mxu0 %v719
      %751 = vmatmul.f32.gmra.mxu0 %v711
      %v752 = vpop.f32.mrf.mxu0
      %v753 = vadd.f32 0.0, %v752
      %754 = vmatmul.f32.gmra.mxu0 %v712
      %v755 = vpop.f32.mrf.mxu0
      %v756 = vadd.f32 0.0, %v755
      %757 = vmatmul.f32.gmra.mxu0 %v713
      %v758 = vpop.f32.mrf.mxu0
      %v759 = vadd.f32 0.0, %v758
      %760 = vmatmul.f32.gmra.mxu0 %v714
      %v761 = vpop.f32.mrf.mxu0
      %v762 = vadd.f32 0.0, %v761
      %763 = vmatmul.f32.gmra.mxu0 %v715
      %v764 = vpop.f32.mrf.mxu0
      %v765 = vadd.f32 0.0, %v764
      %766 = vmatmul.f32.gmra.mxu0 %v716
      %v767 = vpop.f32.mrf.mxu0
      %v768 = vadd.f32 0.0, %v767
      %769 = vmatmul.f32.gmra.mxu0 %v717
      %v770 = vpop.f32.mrf.mxu0
      %v771 = vadd.f32 0.0, %v770
      %772 = vmatmul.f32.gmra.mxu0 %v718
      %v773 = vpop.f32.mrf.mxu0
      %v774 = vadd.f32 0.0, %v773
      %775 = vdwg.mxu0
      %v776 = vadd.f32 %v702, %v753
      %v777 = vadd.f32 %v703, %v756
      %v778 = vadd.f32 %v704, %v759
      %v779 = vadd.f32 %v705, %v762
      %v780 = vadd.f32 %v706, %v765
      %v781 = vadd.f32 %v707, %v768
      %v782 = vadd.f32 %v708, %v771
      %v783 = vadd.f32 %v709, %v774
      %s784 = scalar_lea.vmem %s266, 160
      %v785 = vld [vmem:[%s784] sm:$0xff]
      %v786 = vld [vmem:[%s784 + $0x10] sm:$0xff]
      %v787 = vld [vmem:[%s784 + $0x20] sm:$0xff]
      %v788 = vld [vmem:[%s784 + $0x30] sm:$0xff]
      %v789 = vld [vmem:[%s784 + $0x40] sm:$0xff]
      %v790 = vld [vmem:[%s784 + $0x50] sm:$0xff]
      %v791 = vld [vmem:[%s784 + $0x60] sm:$0xff]
      %v792 = vld [vmem:[%s784 + $0x70] sm:$0xff]
      %v793 = vld [vmem:[%s1 + $0x380] sm:$0xff]
      %v794 = vld [vmem:[%s1 + $0x388] sm:$0xff]
      %v795 = vld [vmem:[%s1 + $0x390] sm:$0xff]
      %v796 = vld [vmem:[%s1 + $0x398] sm:$0xff]
      %v797 = vld [vmem:[%s1 + $0x3a0] sm:$0xff]
      %v798 = vld [vmem:[%s1 + $0x3a8] sm:$0xff]
      %v799 = vld [vmem:[%s1 + $0x3b0] sm:$0xff]
      %v800 = vld [vmem:[%s1 + $0x3b8] sm:$0xff]
      %v801 = vld [vmem:[%s1 + $0x3c0] sm:$0xff]
      %v802 = vld [vmem:[%s1 + $0x3c8] sm:$0xff]
      %v803 = vld [vmem:[%s1 + $0x3d0] sm:$0xff]
      %v804 = vld [vmem:[%s1 + $0x3d8] sm:$0xff]
      %v805 = vld [vmem:[%s1 + $0x3e0] sm:$0xff]
      %v806 = vld [vmem:[%s1 + $0x3e8] sm:$0xff]
      %v807 = vld [vmem:[%s1 + $0x3f0] sm:$0xff]
      %v808 = vld [vmem:[%s1 + $0x3f8] sm:$0xff]
      %809 = vmatpush.msra.mxu0 %v808
      %810 = vmatpush.msra.mxu0 %v807
      %811 = vmatpush.msra.mxu0 %v806
      %812 = vmatpush.msra.mxu0 %v805
      %813 = vmatpush.msra.mxu0 %v804
      %814 = vmatpush.msra.mxu0 %v803
      %815 = vmatpush.msra.mxu0 %v802
      %816 = vmatpush.msra.mxu0 %v801
      %817 = vmatpush.msra.mxu0 %v800
      %818 = vmatpush.msra.mxu0 %v799
      %819 = vmatpush.msra.mxu0 %v798
      %820 = vmatpush.msra.mxu0 %v797
      %821 = vmatpush.msra.mxu0 %v796
      %822 = vmatpush.msra.mxu0 %v795
      %823 = vmatpush.msra.mxu0 %v794
      %824 = vmatpush.msra.mxu0 %v793
      %825 = vmatmul.f32.gmra.mxu0 %v785
      %v826 = vpop.f32.mrf.mxu0
      %v827 = vadd.f32 0.0, %v826
      %828 = vmatmul.f32.gmra.mxu0 %v786
      %v829 = vpop.f32.mrf.mxu0
      %v830 = vadd.f32 0.0, %v829
      %831 = vmatmul.f32.gmra.mxu0 %v787
      %v832 = vpop.f32.mrf.mxu0
      %v833 = vadd.f32 0.0, %v832
      %834 = vmatmul.f32.gmra.mxu0 %v788
      %v835 = vpop.f32.mrf.mxu0
      %v836 = vadd.f32 0.0, %v835
      %837 = vmatmul.f32.gmra.mxu0 %v789
      %v838 = vpop.f32.mrf.mxu0
      %v839 = vadd.f32 0.0, %v838
      %840 = vmatmul.f32.gmra.mxu0 %v790
      %v841 = vpop.f32.mrf.mxu0
      %v842 = vadd.f32 0.0, %v841
      %843 = vmatmul.f32.gmra.mxu0 %v791
      %v844 = vpop.f32.mrf.mxu0
      %v845 = vadd.f32 0.0, %v844
      %846 = vmatmul.f32.gmra.mxu0 %v792
      %v847 = vpop.f32.mrf.mxu0
      %v848 = vadd.f32 0.0, %v847
      %849 = vdwg.mxu0
      %v850 = vadd.f32 %v776, %v827
      %v851 = vadd.f32 %v777, %v830
      %v852 = vadd.f32 %v778, %v833
      %v853 = vadd.f32 %v779, %v836
      %v854 = vadd.f32 %v780, %v839
      %v855 = vadd.f32 %v781, %v842
      %v856 = vadd.f32 %v782, %v845
      %v857 = vadd.f32 %v783, %v848
      %v858 = vld [vmem:[%s710 + $0x1] sm:$0xff]
      %v859 = vld [vmem:[%s710 + $0x11] sm:$0xff]
      %v860 = vld [vmem:[%s710 + $0x21] sm:$0xff]
      %v861 = vld [vmem:[%s710 + $0x31] sm:$0xff]
      %v862 = vld [vmem:[%s710 + $0x41] sm:$0xff]
      %v863 = vld [vmem:[%s710 + $0x51] sm:$0xff]
      %v864 = vld [vmem:[%s710 + $0x61] sm:$0xff]
      %v865 = vld [vmem:[%s710 + $0x71] sm:$0xff]
      %v866 = vld [vmem:[%s1 + $0x400] sm:$0xff]
      %v867 = vld [vmem:[%s1 + $0x408] sm:$0xff]
      %v868 = vld [vmem:[%s1 + $0x410] sm:$0xff]
      %v869 = vld [vmem:[%s1 + $0x418] sm:$0xff]
      %v870 = vld [vmem:[%s1 + $0x420] sm:$0xff]
      %v871 = vld [vmem:[%s1 + $0x428] sm:$0xff]
      %v872 = vld [vmem:[%s1 + $0x430] sm:$0xff]
      %v873 = vld [vmem:[%s1 + $0x438] sm:$0xff]
      %v874 = vld [vmem:[%s1 + $0x440] sm:$0xff]
      %v875 = vld [vmem:[%s1 + $0x448] sm:$0xff]
      %v876 = vld [vmem:[%s1 + $0x450] sm:$0xff]
      %v877 = vld [vmem:[%s1 + $0x458] sm:$0xff]
      %v878 = vld [vmem:[%s1 + $0x460] sm:$0xff]
      %v879 = vld [vmem:[%s1 + $0x468] sm:$0xff]
      %v880 = vld [vmem:[%s1 + $0x470] sm:$0xff]
      %v881 = vld [vmem:[%s1 + $0x478] sm:$0xff]
      %882 = vmatpush.msra.mxu0 %v881
      %883 = vmatpush.msra.mxu0 %v880
      %884 = vmatpush.msra.mxu0 %v879
      %885 = vmatpush.msra.mxu0 %v878
      %886 = vmatpush.msra.mxu0 %v877
      %887 = vmatpush.msra.mxu0 %v876
      %888 = vmatpush.msra.mxu0 %v875
      %889 = vmatpush.msra.mxu0 %v874
      %890 = vmatpush.msra.mxu0 %v873
      %891 = vmatpush.msra.mxu0 %v872
      %892 = vmatpush.msra.mxu0 %v871
      %893 = vmatpush.msra.mxu0 %v870
      %894 = vmatpush.msra.mxu0 %v869
      %895 = vmatpush.msra.mxu0 %v868
      %896 = vmatpush.msra.mxu0 %v867
      %897 = vmatpush.msra.mxu0 %v866
      %898 = vmatmul.f32.gmra.mxu0 %v858
      %v899 = vpop.f32.mrf.mxu0
      %v900 = vadd.f32 0.0, %v899
      %901 = vmatmul.f32.gmra.mxu0 %v859
      %v902 = vpop.f32.mrf.mxu0
      %v903 = vadd.f32 0.0, %v902
      %904 = vmatmul.f32.gmra.mxu0 %v860
      %v905 = vpop.f32.mrf.mxu0
      %v906 = vadd.f32 0.0, %v905
      %907 = vmatmul.f32.gmra.mxu0 %v861
      %v908 = vpop.f32.mrf.mxu0
      %v909 = vadd.f32 0.0, %v908
      %910 = vmatmul.f32.gmra.mxu0 %v862
      %v911 = vpop.f32.mrf.mxu0
      %v912 = vadd.f32 0.0, %v911
      %913 = vmatmul.f32.gmra.mxu0 %v863
      %v914 = vpop.f32.mrf.mxu0
      %v915 = vadd.f32 0.0, %v914
      %916 = vmatmul.f32.gmra.mxu0 %v864
      %v917 = vpop.f32.mrf.mxu0
      %v918 = vadd.f32 0.0, %v917
      %919 = vmatmul.f32.gmra.mxu0 %v865
      %v920 = vpop.f32.mrf.mxu0
      %v921 = vadd.f32 0.0, %v920
      %922 = vdwg.mxu0
      %v923 = vadd.f32 %v850, %v900
      %v924 = vadd.f32 %v851, %v903
      %v925 = vadd.f32 %v852, %v906
      %v926 = vadd.f32 %v853, %v909
      %v927 = vadd.f32 %v854, %v912
      %v928 = vadd.f32 %v855, %v915
      %v929 = vadd.f32 %v856, %v918
      %v930 = vadd.f32 %v857, %v921
      %931 = vst [vmem:[%s271] sm:$0xff] %v923
      %932 = vst [vmem:[%s271 + $0x8] sm:$0xff] %v924
      %933 = vst [vmem:[%s271 + $0x10] sm:$0xff] %v925
      %934 = vst [vmem:[%s271 + $0x18] sm:$0xff] %v926
      %935 = vst [vmem:[%s271 + $0x20] sm:$0xff] %v927
      %936 = vst [vmem:[%s271 + $0x28] sm:$0xff] %v928
      %937 = vst [vmem:[%s271 + $0x30] sm:$0xff] %v929
      %938 = vst [vmem:[%s271 + $0x38] sm:$0xff] %v930
      %v939 = vadd.f32 %v923, %v924
      %v940 = vadd.f32 %v939, %v925
      %v941 = vadd.f32 %v940, %v926
      %v942 = vadd.f32 %v941, %v927
      %v943 = vadd.f32 %v942, %v928
      %v944 = vadd.f32 %v943, %v929
      %v945 = vadd.f32 %v944, %v930
      %v946 = vrot.slane %v945, 4
      %v947 = vadd.f32 %v945, %v946
      %v948 = vrot.slane %v947, 2
      %v949 = vadd.f32 %v947, %v948
      %v950 = vrot.slane %v949, 1
      %v951 = vadd.f32 %v949, %v950
      %952 = vst [vmem:[%s275] sm:$0x1] %v951
      %v953 = vmul.f32 %v923, %v923
      %v954 = vmul.f32 %v924, %v924
      %v955 = vmul.f32 %v925, %v925
      %v956 = vmul.f32 %v926, %v926
      %v957 = vmul.f32 %v927, %v927
      %v958 = vmul.f32 %v928, %v928
      %v959 = vmul.f32 %v929, %v929
      %v960 = vmul.f32 %v930, %v930
      %v961 = vadd.f32 %v953, %v954
      %v962 = vadd.f32 %v961, %v955
      %v963 = vadd.f32 %v962, %v956
      %v964 = vadd.f32 %v963, %v957
      %v965 = vadd.f32 %v964, %v958
      %v966 = vadd.f32 %v965, %v959
      %v967 = vadd.f32 %v966, %v960
      %v968 = vrot.slane %v967, 4
      %v969 = vadd.f32 %v967, %v968
      %v970 = vrot.slane %v969, 2
      %v971 = vadd.f32 %v969, %v970
      %v972 = vrot.slane %v971, 1
      %v973 = vadd.f32 %v971, %v972
      %974 = vst [vmem:[%s275 + $0x1] sm:$0x1] %v973
      %v975 = vld [vmem:[%s563] sm:$0xff]
      %v976 = vld [vmem:[%s563 + $0x10] sm:$0xff]
      %v977 = vld [vmem:[%s563 + $0x20] sm:$0xff]
      %v978 = vld [vmem:[%s563 + $0x30] sm:$0xff]
      %v979 = vld [vmem:[%s563 + $0x40] sm:$0xff]
      %v980 = vld [vmem:[%s563 + $0x50] sm:$0xff]
      %v981 = vld [vmem:[%s563 + $0x60] sm:$0xff]
      %v982 = vld [vmem:[%s563 + $0x70] sm:$0xff]
      %v983 = vld [vmem:[%s2] sm:$0xff]
      %v984 = vld [vmem:[%s2 + $0x8] sm:$0xff]
      %v985 = vld [vmem:[%s2 + $0x10] sm:$0xff]
      %v986 = vld [vmem:[%s2 + $0x18] sm:$0xff]
      %v987 = vld [vmem:[%s2 + $0x20] sm:$0xff]
      %v988 = vld [vmem:[%s2 + $0x28] sm:$0xff]
      %v989 = vld [vmem:[%s2 + $0x30] sm:$0xff]
      %v990 = vld [vmem:[%s2 + $0x38] sm:$0xff]
      %v991 = vld [vmem:[%s2 + $0x40] sm:$0xff]
      %v992 = vld [vmem:[%s2 + $0x48] sm:$0xff]
      %v993 = vld [vmem:[%s2 + $0x50] sm:$0xff]
      %v994 = vld [vmem:[%s2 + $0x58] sm:$0xff]
      %v995 = vld [vmem:[%s2 + $0x60] sm:$0xff]
      %v996 = vld [vmem:[%s2 + $0x68] sm:$0xff]
      %v997 = vld [vmem:[%s2 + $0x70] sm:$0xff]
      %v998 = vld [vmem:[%s2 + $0x78] sm:$0xff]
      %999 = vmatpush.msra.mxu0 %v998
      %1000 = vmatpush.msra.mxu0 %v997
      %1001 = vmatpush.msra.mxu0 %v996
      %1002 = vmatpush.msra.mxu0 %v995
      %1003 = vmatpush.msra.mxu0 %v994
      %1004 = vmatpush.msra.mxu0 %v993
      %1005 = vmatpush.msra.mxu0 %v992
      %1006 = vmatpush.msra.mxu0 %v991
      %1007 = vmatpush.msra.mxu0 %v990
      %1008 = vmatpush.msra.mxu0 %v989
      %1009 = vmatpush.msra.mxu0 %v988
      %1010 = vmatpush.msra.mxu0 %v987
      %1011 = vmatpush.msra.mxu0 %v986
      %1012 = vmatpush.msra.mxu0 %v985
      %1013 = vmatpush.msra.mxu0 %v984
      %1014 = vmatpush.msra.mxu0 %v983
      %1015 = vmatmul.f32.gmra.mxu0 %v975
      %v1016 = vpop.f32.mrf.mxu0
      %v1017 = vadd.f32 0.0, %v1016
      %1018 = vmatmul.f32.gmra.mxu0 %v976
      %v1019 = vpop.f32.mrf.mxu0
      %v1020 = vadd.f32 0.0, %v1019
      %1021 = vmatmul.f32.gmra.mxu0 %v977
      %v1022 = vpop.f32.mrf.mxu0
      %v1023 = vadd.f32 0.0, %v1022
      %1024 = vmatmul.f32.gmra.mxu0 %v978
      %v1025 = vpop.f32.mrf.mxu0
      %v1026 = vadd.f32 0.0, %v1025
      %1027 = vmatmul.f32.gmra.mxu0 %v979
      %v1028 = vpop.f32.mrf.mxu0
      %v1029 = vadd.f32 0.0, %v1028
      %1030 = vmatmul.f32.gmra.mxu0 %v980
      %v1031 = vpop.f32.mrf.mxu0
      %v1032 = vadd.f32 0.0, %v1031
      %1033 = vmatmul.f32.gmra.mxu0 %v981
      %v1034 = vpop.f32.mrf.mxu0
      %v1035 = vadd.f32 0.0, %v1034
      %1036 = vmatmul.f32.gmra.mxu0 %v982
      %v1037 = vpop.f32.mrf.mxu0
      %v1038 = vadd.f32 0.0, %v1037
      %1039 = vdwg.mxu0
      %1040 = vst [vmem:[%s280] sm:$0xff] %v1017
      %1041 = vst [vmem:[%s280 + $0x8] sm:$0xff] %v1020
      %1042 = vst [vmem:[%s280 + $0x10] sm:$0xff] %v1023
      %1043 = vst [vmem:[%s280 + $0x18] sm:$0xff] %v1026
      %1044 = vst [vmem:[%s280 + $0x20] sm:$0xff] %v1029
      %1045 = vst [vmem:[%s280 + $0x28] sm:$0xff] %v1032
      %1046 = vst [vmem:[%s280 + $0x30] sm:$0xff] %v1035
      %1047 = vst [vmem:[%s280 + $0x38] sm:$0xff] %v1038
      %v1048 = vadd.f32 %v1017, %v1020
      %v1049 = vadd.f32 %v1048, %v1023
      %v1050 = vadd.f32 %v1049, %v1026
      %v1051 = vadd.f32 %v1050, %v1029
      %v1052 = vadd.f32 %v1051, %v1032
      %v1053 = vadd.f32 %v1052, %v1035
      %v1054 = vadd.f32 %v1053, %v1038
      %v1055 = vrot.slane %v1054, 4
      %v1056 = vadd.f32 %v1054, %v1055
      %v1057 = vrot.slane %v1056, 2
      %v1058 = vadd.f32 %v1056, %v1057
      %v1059 = vrot.slane %v1058, 1
      %v1060 = vadd.f32 %v1058, %v1059
      %1061 = vst [vmem:[%s284] sm:$0x1] %v1060
      %v1062 = vmul.f32 %v1017, %v1017
      %v1063 = vmul.f32 %v1020, %v1020
      %v1064 = vmul.f32 %v1023, %v1023
      %v1065 = vmul.f32 %v1026, %v1026
      %v1066 = vmul.f32 %v1029, %v1029
      %v1067 = vmul.f32 %v1032, %v1032
      %v1068 = vmul.f32 %v1035, %v1035
      %v1069 = vmul.f32 %v1038, %v1038
      %v1070 = vadd.f32 %v1062, %v1063
      %v1071 = vadd.f32 %v1070, %v1064
      %v1072 = vadd.f32 %v1071, %v1065
      %v1073 = vadd.f32 %v1072, %v1066
      %v1074 = vadd.f32 %v1073, %v1067
      %v1075 = vadd.f32 %v1074, %v1068
      %v1076 = vadd.f32 %v1075, %v1069
      %v1077 = vrot.slane %v1076, 4
      %v1078 = vadd.f32 %v1076, %v1077
      %v1079 = vrot.slane %v1078, 2
      %v1080 = vadd.f32 %v1078, %v1079
      %v1081 = vrot.slane %v1080, 1
      %v1082 = vadd.f32 %v1080, %v1081
      %1083 = vst [vmem:[%s284 + $0x1] sm:$0x1] %v1082
      %p1084 = scmp.lt.s32.totalorder %s18, 1
      %s1085 = scalar_select %p1084, %s18, 1
      %s1086 = smul.addr %s1085, 8
      %s1087 = smul.addr %s1086, 8
      %s1088 = scalar_lea.vmem %s3, %s1087
      %p1089 = scmp.lt.s32.totalorder %s18, 1
      %s1090 = scalar_select %p1089, %s18, 1
      %s1091 = smul.addr %s1090, 2
      %s1092 = scalar_lea.vmem %s4, %s1091
      %p1093 = scmp.lt.s32.totalorder %s18, 1
      %s1094 = scalar_select %p1093, %s18, 1
      %s1095 = smul.addr %s1094, 8
      %s1096 = smul.addr %s1095, 8
      %s1097 = scalar_lea.vmem %s5, %s1096
      %p1098 = scmp.lt.s32.totalorder %s18, 1
      %s1099 = scalar_select %p1098, %s18, 1
      %s1100 = smul.addr %s1099, 2
      %s1101 = scalar_lea.vmem %s6, %s1100
      // Predicated region
      $region33: #{basic_block_pallas.3} parent=31 // pred_check
        %p1102 = pneg %p104
      $region34: #{basic_block_pallas.3} parent=31 // pred_check_branch
        %1104 = sbr.rel (%p1102) target = $region36
      $region35: #{basic_block_pallas.3} parent=31 // pred_region
        _
      $region36: #{basic_block_pallas.3} parent=31 // pred_fallthru
        _
      // Predicated region
      $region37: #{basic_block_pallas.3} parent=31 // pred_check
        %p1105 = pneg %p130
      $region38: #{basic_block_pallas.3} parent=31 // pred_check_branch
        %1107 = sbr.rel (%p1105) target = $region40
      $region39: #{basic_block_pallas.3} parent=31 // pred_region
        _
      $region40: #{basic_block_pallas.3} parent=31 // pred_fallthru
        _
      // Predicated region
      $region41: #{basic_block_pallas.3} parent=31 // pred_check
        %p1108 = pneg %p156
      $region42: #{basic_block_pallas.3} parent=31 // pred_check_branch
        %1110 = sbr.rel (%p1108) target = $region44
      $region43: #{basic_block_pallas.3} parent=31 // pred_region
        _
      $region44: #{basic_block_pallas.3} parent=31 // pred_fallthru
        _
      // Predicated region
      $region45: #{basic_block_pallas.3} parent=31 // pred_check
        %p1111 = pneg %p182
      $region46: #{basic_block_pallas.3} parent=31 // pred_check_branch
        %1113 = sbr.rel (%p1111) target = $region48
      $region47: #{basic_block_pallas.3} parent=31 // pred_region
        _
      $region48: #{basic_block_pallas.3} parent=31 // pred_fallthru
        _
    $region32: #{basic_block_pallas.3} parent=5 // pred_fallthru
      _
    %p1114 = scmp.le.s32.totalorder 2, %s13
    // Predicated region
    $region49: #{basic_block_pallas.3} parent=5 // pred_check
      %p1115 = pneg %p1114
    $region50: #{basic_block_pallas.3} parent=5 // pred_check_branch
      %1117 = sbr.rel (%p1115) target = $region52
    $region51: #{basic_block_pallas.3} parent=5 // pred_region
      %s1118 = ssub.s32 %s13, 2
      // Predicated region
      $region53: #{basic_block_pallas.3} parent=51 // pred_check
        %p1119 = pneg %p110
      $region54: #{basic_block_pallas.3} parent=51 // pred_check_branch
        %1121 = sbr.rel (%p1119) target = $region56
      $region55: #{basic_block_pallas.3} parent=51 // pred_region
        %p1122 = scmp.lt.s32.totalorder %s19, 1
        %s1123 = scalar_select %p1122, %s19, 1
        %s1124 = smul.addr %s1123, 8
        %s1125 = smul.addr %s1124, 8
        %s1126 = scalar_lea.vmem %s3, %s1125
      $region56: #{basic_block_pallas.3} parent=51 // pred_fallthru
        _
      // Predicated region
      $region57: #{basic_block_pallas.3} parent=51 // pred_check
        %p1127 = pneg %p136
      $region58: #{basic_block_pallas.3} parent=51 // pred_check_branch
        %1129 = sbr.rel (%p1127) target = $region60
      $region59: #{basic_block_pallas.3} parent=51 // pred_region
        %p1130 = scmp.lt.s32.totalorder %s19, 1
        %s1131 = scalar_select %p1130, %s19, 1
        %s1132 = smul.addr %s1131, 2
        %s1133 = scalar_lea.vmem %s4, %s1132
      $region60: #{basic_block_pallas.3} parent=51 // pred_fallthru
        _
      // Predicated region
      $region61: #{basic_block_pallas.3} parent=51 // pred_check
        %p1134 = pneg %p162
      $region62: #{basic_block_pallas.3} parent=51 // pred_check_branch
        %1136 = sbr.rel (%p1134) target = $region64
      $region63: #{basic_block_pallas.3} parent=51 // pred_region
        %p1137 = scmp.lt.s32.totalorder %s19, 1
        %s1138 = scalar_select %p1137, %s19, 1
        %s1139 = smul.addr %s1138, 8
        %s1140 = smul.addr %s1139, 8
        %s1141 = scalar_lea.vmem %s5, %s1140
      $region64: #{basic_block_pallas.3} parent=51 // pred_fallthru
        _
      // Predicated region
      $region65: #{basic_block_pallas.3} parent=51 // pred_check
        %p1142 = pneg %p188
      $region66: #{basic_block_pallas.3} parent=51 // pred_check_branch
        %1144 = sbr.rel (%p1142) target = $region68
      $region67: #{basic_block_pallas.3} parent=51 // pred_region
        %p1145 = scmp.lt.s32.totalorder %s19, 1
        %s1146 = scalar_select %p1145, %s19, 1
        %s1147 = smul.addr %s1146, 2
        %s1148 = scalar_lea.vmem %s6, %s1147
      $region68: #{basic_block_pallas.3} parent=51 // pred_fallthru
        _
    $region52: #{basic_block_pallas.3} parent=5 // pred_fallthru
      _
  $region6: #{basic_block_pallas.3} parent=0 // loop_footer
    %s17 = sadd.s32 1, %s13
  $region7: #{basic_block_pallas.3} parent=0 // loop_footer_branch
    %12 = sbr.rel target = $region3
  $region8: #{basic_block_pallas.3} parent=0 // loop_exit
    _

// kernel: basic_block_pallas.4
$region0: #{basic_block_pallas.4}
  #allocation0 [shape = 'u32[]', space=smem, size = 0x4, offset = 0x4, fixed_abs, tag = 'smem constant byte address 0x4 - core index']
  #allocation1 [shape = 'u32[72,128]{1,0:T(1,128)}', space=vmem, size = 0x9000, scoped, tag = 'internal scratch']
  #allocation2 [shape = 'f32[10,10,128]{2,1,0:T(8,128)}', space=vmem, size = 0x14000, scoped, tag = 'scratch operand']
  %s0 = inlined_call_operand.vmem [shape: f32[2,8,8,128], index: 0, kind: input, shape index: {}]
  %s1 = inlined_call_operand.vmem [shape: f32[1,128], index: 1, kind: input, shape index: {}]
  %s2 = inlined_call_operand.vmem [shape: f32[1,128], index: 2, kind: input, shape index: {}]
  %s3 = inlined_call_operand.vmem [shape: f32[1152,128], index: 3, kind: input, shape index: {}]
  %s4 = inlined_call_operand.vmem [shape: f32[2,8,8,128], index: 4, kind: output, shape index: {0}]
  %s5 = inlined_call_operand.vmem [shape: f32[2,2,128], index: 5, kind: output, shape index: {1}]
  %6 = xla_tuple %s4, %s5
  %s7 = sld [smem:[#allocation0]]
  $region57: #{basic_block_pallas.4} parent=0
    _
  %s9 = ssub.s32 1, %s7
  %s10 = scalar_select 0, %s9, %s7
  loop: start=0, step=1, limit=4
  $region2: #{basic_block_pallas.4} parent=0 // loop_pre_header
    _
  $region3: #{basic_block_pallas.4} parent=0 // loop_header
    %s12 = sphi 0, %s16
    %p13 = scmp.ge.s32.totalorder %s12, 4
    %s22 = sphi 0, %s24
    %s25 = sphi 0, %s22
    %s26 = sphi 0, %s25
    %s42 = sphi 0, %s26
    %s46 = sphi 0, %s46
    %s48 = sphi 0, %s46
    %s49 = sphi 0, %s48
    %s63 = sphi 0, %s49
    %s67 = sphi 0, %s67
    %s69 = sphi 0, %s67
    %s70 = sphi 0, %s69
    %s84 = sphi 0, %s70
    %s88 = sphi 0, %s88
    %s90 = sphi 0, %s88
    %s91 = sphi 0, %s90
    %s105 = sphi 0, %s91
    %s111 = sphi 0, %s113
    %s114 = sphi 0, %s111
    %s115 = sphi 0, %s114
    %s131 = sphi 0, %s115
    %s137 = sphi 0, %s139
    %s140 = sphi 0, %s137
    %s141 = sphi 0, %s140
    %s157 = sphi 0, %s141
  $region4: #{basic_block_pallas.4} parent=0 // loop_header_branch
    %15 = sbr.rel (%p13) target = $region8
  $region5: #{basic_block_pallas.4} parent=0 // loop_body
    %s17 = ssub.s32 %s12, 1
    %s18 = ssub.s32 %s12, 2
    %s19 = sadd.s32 %s12, 1
    %s20 = ssub.s32 %s12, %s19
    %p21 = scmp.eq.s32.totalorder %s20, 0
    %s23 = sadd.s32 %s22, 1
    %s24 = scalar_select %p21, %s22, %s23
    %p27 = pneg %p21
    %p28 = scmp.eq.s32.totalorder %s12, 1
    %p29 = por %p27, %p28
    %p30 = scmp.ne.s32.totalorder %s22, %s25
    %p31 = scmp.eq.s32.totalorder %s12, 0
    %p32 = por %p30, %p31
    %p33 = scmp.ne.s32.totalorder %s22, %s25
    %p34 = scmp.eq.s32.totalorder %s17, 1
    %p35 = por %p33, %p34
    %p36 = scmp.ne.s32.totalorder %s25, %s26
    %p37 = scmp.eq.s32.totalorder %s17, 0
    %p38 = por %p36, %p37
    %p39 = scmp.ne.s32.totalorder %s25, %s26
    %p40 = scmp.eq.s32.totalorder %s18, 1
    %p41 = por %p39, %p40
    %p43 = scmp.ne.s32.totalorder %s26, %s42
    %p44 = scmp.eq.s32.totalorder %s18, 0
    %p45 = por %p43, %p44
    %s47 = sadd.s32 %s46, 1
    %p50 = scmp.eq.s32.totalorder %s12, 1
    %p51 = scmp.ne.s32.totalorder %s46, %s48
    %p52 = scmp.eq.s32.totalorder %s12, 0
    %p53 = por %p51, %p52
    %p54 = scmp.ne.s32.totalorder %s46, %s48
    %p55 = scmp.eq.s32.totalorder %s17, 1
    %p56 = por %p54, %p55
    %p57 = scmp.ne.s32.totalorder %s48, %s49
    %p58 = scmp.eq.s32.totalorder %s17, 0
    %p59 = por %p57, %p58
    %p60 = scmp.ne.s32.totalorder %s48, %s49
    %p61 = scmp.eq.s32.totalorder %s18, 1
    %p62 = por %p60, %p61
    %p64 = scmp.ne.s32.totalorder %s49, %s63
    %p65 = scmp.eq.s32.totalorder %s18, 0
    %p66 = por %p64, %p65
    %s68 = sadd.s32 %s67, 1
    %p71 = scmp.eq.s32.totalorder %s12, 1
    %p72 = scmp.ne.s32.totalorder %s67, %s69
    %p73 = scmp.eq.s32.totalorder %s12, 0
    %p74 = por %p72, %p73
    %p75 = scmp.ne.s32.totalorder %s67, %s69
    %p76 = scmp.eq.s32.totalorder %s17, 1
    %p77 = por %p75, %p76
    %p78 = scmp.ne.s32.totalorder %s69, %s70
    %p79 = scmp.eq.s32.totalorder %s17, 0
    %p80 = por %p78, %p79
    %p81 = scmp.ne.s32.totalorder %s69, %s70
    %p82 = scmp.eq.s32.totalorder %s18, 1
    %p83 = por %p81, %p82
    %p85 = scmp.ne.s32.totalorder %s70, %s84
    %p86 = scmp.eq.s32.totalorder %s18, 0
    %p87 = por %p85, %p86
    %s89 = sadd.s32 %s88, 1
    %p92 = scmp.eq.s32.totalorder %s12, 1
    %p93 = scmp.ne.s32.totalorder %s88, %s90
    %p94 = scmp.eq.s32.totalorder %s12, 0
    %p95 = por %p93, %p94
    %p96 = scmp.ne.s32.totalorder %s88, %s90
    %p97 = scmp.eq.s32.totalorder %s17, 1
    %p98 = por %p96, %p97
    %p99 = scmp.ne.s32.totalorder %s90, %s91
    %p100 = scmp.eq.s32.totalorder %s17, 0
    %p101 = por %p99, %p100
    %p102 = scmp.ne.s32.totalorder %s90, %s91
    %p103 = scmp.eq.s32.totalorder %s18, 1
    %p104 = por %p102, %p103
    %p106 = scmp.ne.s32.totalorder %s91, %s105
    %p107 = scmp.eq.s32.totalorder %s18, 0
    %p108 = por %p106, %p107
    %s109 = ssub.s32 %s12, %s19
    %p110 = scmp.eq.s32.totalorder %s109, 0
    %s112 = sadd.s32 %s111, 1
    %s113 = scalar_select %p110, %s111, %s112
    %p116 = pneg %p110
    %p117 = scmp.eq.s32.totalorder %s12, 1
    %p118 = por %p116, %p117
    %p119 = scmp.ne.s32.totalorder %s111, %s114
    %p120 = scmp.eq.s32.totalorder %s12, 0
    %p121 = por %p119, %p120
    %p122 = scmp.ne.s32.totalorder %s111, %s114
    %p123 = scmp.eq.s32.totalorder %s17, 1
    %p124 = por %p122, %p123
    %p125 = scmp.ne.s32.totalorder %s114, %s115
    %p126 = scmp.eq.s32.totalorder %s17, 0
    %p127 = por %p125, %p126
    %p128 = scmp.ne.s32.totalorder %s114, %s115
    %p129 = scmp.eq.s32.totalorder %s18, 1
    %p130 = por %p128, %p129
    %p132 = scmp.ne.s32.totalorder %s115, %s131
    %p133 = scmp.eq.s32.totalorder %s18, 0
    %p134 = por %p132, %p133
    %s135 = ssub.s32 %s12, %s19
    %p136 = scmp.eq.s32.totalorder %s135, 0
    %s138 = sadd.s32 %s137, 1
    %s139 = scalar_select %p136, %s137, %s138
    %p142 = pneg %p136
    %p143 = scmp.eq.s32.totalorder %s12, 1
    %p144 = por %p142, %p143
    %p145 = scmp.ne.s32.totalorder %s137, %s140
    %p146 = scmp.eq.s32.totalorder %s12, 0
    %p147 = por %p145, %p146
    %p148 = scmp.ne.s32.totalorder %s137, %s140
    %p149 = scmp.eq.s32.totalorder %s17, 1
    %p150 = por %p148, %p149
    %p151 = scmp.ne.s32.totalorder %s140, %s141
    %p152 = scmp.eq.s32.totalorder %s17, 0
    %p153 = por %p151, %p152
    %p154 = scmp.ne.s32.totalorder %s140, %s141
    %p155 = scmp.eq.s32.totalorder %s18, 1
    %p156 = por %p154, %p155
    %p158 = scmp.ne.s32.totalorder %s141, %s157
    %p159 = scmp.eq.s32.totalorder %s18, 0
    %p160 = por %p158, %p159
    %p161 = scmp.le.s32.totalorder 1, %s12
    %p162 = scmp.lt.s32.totalorder %s12, 3
    %p163 = pnand %p161, %p162
    %p164 = pneg %p163
    // Predicated region
    $region9: #{basic_block_pallas.4} parent=5 // pred_check
      _
    $region10: #{basic_block_pallas.4} parent=5 // pred_check_branch
      %166 = sbr.rel (%p163) target = $region12
    $region11: #{basic_block_pallas.4} parent=5 // pred_region
      %s167 = ssub.s32 %s12, 1
      // Predicated region
      $region13: #{basic_block_pallas.4} parent=11 // pred_check
        %p168 = pneg %p59
      $region14: #{basic_block_pallas.4} parent=11 // pred_check_branch
        %170 = sbr.rel (%p168) target = $region16
      $region15: #{basic_block_pallas.4} parent=11 // pred_region
        _
      $region16: #{basic_block_pallas.4} parent=11 // pred_fallthru
        _
      // Predicated region
      $region17: #{basic_block_pallas.4} parent=11 // pred_check
        %p171 = pneg %p80
      $region18: #{basic_block_pallas.4} parent=11 // pred_check_branch
        %173 = sbr.rel (%p171) target = $region20
      $region19: #{basic_block_pallas.4} parent=11 // pred_region
        _
      $region20: #{basic_block_pallas.4} parent=11 // pred_fallthru
        _
      // Predicated region
      $region21: #{basic_block_pallas.4} parent=11 // pred_check
        %p174 = pneg %p101
      $region22: #{basic_block_pallas.4} parent=11 // pred_check_branch
        %176 = sbr.rel (%p174) target = $region24
      $region23: #{basic_block_pallas.4} parent=11 // pred_region
        _
      $region24: #{basic_block_pallas.4} parent=11 // pred_fallthru
        _
    $region12: #{basic_block_pallas.4} parent=5 // pred_fallthru
      _
    %p177 = scmp.lt.s32.totalorder %s12, 2
    // Predicated region
    $region25: #{basic_block_pallas.4} parent=5 // pred_check
      %p178 = pneg %p177
    $region26: #{basic_block_pallas.4} parent=5 // pred_check_branch
      %180 = sbr.rel (%p178) target = $region28
    $region27: #{basic_block_pallas.4} parent=5 // pred_region
      // Predicated region
      $region29: #{basic_block_pallas.4} parent=27 // pred_check
        %p181 = pneg %p32
      $region30: #{basic_block_pallas.4} parent=27 // pred_check_branch
        %183 = sbr.rel (%p181) target = $region32
      $region31: #{basic_block_pallas.4} parent=27 // pred_region
        %p184 = scmp.lt.s32.totalorder %s12, 1
        %s185 = scalar_select %p184, %s12, 1
        %s186 = smul.addr %s185, 8
        %s187 = smul.addr %s186, 8
        %s188 = scalar_lea.vmem %s0, %s187
      $region32: #{basic_block_pallas.4} parent=27 // pred_fallthru
        _
    $region28: #{basic_block_pallas.4} parent=5 // pred_fallthru
      _
    %p189 = scmp.le.s32.totalorder 1, %s12
    %p190 = scmp.lt.s32.totalorder %s12, 3
    %p191 = pnand %p189, %p190
    %p192 = pneg %p191
    // Predicated region
    $region33: #{basic_block_pallas.4} parent=5 // pred_check
      _
    $region34: #{basic_block_pallas.4} parent=5 // pred_check_branch
      %194 = sbr.rel (%p191) target = $region36
    $region35: #{basic_block_pallas.4} parent=5 // pred_region
      %s195 = ssub.s32 %s12, 1
      %p196 = scmp.lt.s32.totalorder %s17, 1
      %s197 = scalar_select %p196, %s17, 1
      %s198 = smul.addr %s197, 8
      %s199 = smul.addr %s198, 8
      %s200 = scalar_lea.vmem %s0, %s199
      %p201 = pneg %p38
      %p202 = pneg %p35
      %p203 = pneg %p59
      %p204 = pneg %p56
      %p205 = pneg %p80
      %p206 = pneg %p77
      %p207 = pneg %p101
      %p208 = pneg %p98
      %p209 = pneg %p127
      %p210 = pneg %p124
      %p211 = scmp.lt.s32.totalorder %s17, 1
      %s212 = scalar_select %p211, %s17, 1
      %s213 = smul.addr %s212, 8
      %s214 = smul.addr %s213, 8
      %s215 = scalar_lea.vmem %s4, %s214
      %p216 = pneg %p153
      %p217 = pneg %p150
      %p218 = scmp.lt.s32.totalorder %s17, 1
      %s219 = scalar_select %p218, %s17, 1
      %s220 = smul.addr %s219, 2
      %s221 = scalar_lea.vmem %s5, %s220
      %p222 = scmp.lt.s32.totalorder %s17, 1
      %s223 = scalar_select %p222, %s17, 1
      %s224 = smul.addr %s223, 8
      %s225 = smul.addr %s224, 8
      %s226 = scalar_lea.vmem %s0, %s225
      %p227 = scmp.lt.s32.totalorder %s17, 1
      %s228 = scalar_select %p227, %s17, 1
      %s229 = smul.addr %s228, 8
      %s230 = smul.addr %s229, 8
      %s231 = scalar_lea.vmem %s4, %s230
      %p232 = scmp.lt.s32.totalorder %s17, 1
      %s233 = scalar_select %p232, %s17, 1
      %s234 = smul.addr %s233, 2
      %s235 = scalar_lea.vmem %s5, %s234
      %v236 = vld [vmem:[%s226] sm:$0xff]
      %v237 = vld [vmem:[%s226 + $0x8] sm:$0xff]
      %v238 = vld [vmem:[%s226 + $0x10] sm:$0xff]
      %v239 = vld [vmem:[%s226 + $0x18] sm:$0xff]
      %v240 = vld [vmem:[%s226 + $0x20] sm:$0xff]
      %v241 = vld [vmem:[%s226 + $0x28] sm:$0xff]
      %v242 = vld [vmem:[%s226 + $0x30] sm:$0xff]
      %v243 = vld [vmem:[%s226 + $0x38] sm:$0xff]
      %v244 = vld [vmem:[%s1] sm:$0x1]
      %v246 = vperm.slane %v244, 0
      %v248 = vmul.f32 %v236, %v246
      %v249 = vmul.f32 %v237, %v246
      %v250 = vmul.f32 %v238, %v246
      %v251 = vmul.f32 %v239, %v246
      %v252 = vmul.f32 %v240, %v246
      %v253 = vmul.f32 %v241, %v246
      %v254 = vmul.f32 %v242, %v246
      %v255 = vmul.f32 %v243, %v246
      %v256 = vld [vmem:[%s2] sm:$0x1]
      %v258 = vperm.slane %v256, 0
      %v260 = vadd.f32 %v248, %v258
      %v261 = vadd.f32 %v249, %v258
      %v262 = vadd.f32 %v250, %v258
      %v263 = vadd.f32 %v251, %v258
      %v264 = vadd.f32 %v252, %v258
      %v265 = vadd.f32 %v253, %v258
      %v266 = vadd.f32 %v254, %v258
      %v267 = vadd.f32 %v255, %v258
      %v268 = vmax.f32 %v260, 0.0
      %v269 = vmax.f32 %v261, 0.0
      %v270 = vmax.f32 %v262, 0.0
      %v271 = vmax.f32 %v263, 0.0
      %v272 = vmax.f32 %v264, 0.0
      %v273 = vmax.f32 %v265, 0.0
      %v274 = vmax.f32 %v266, 0.0
      %v275 = vmax.f32 %v267, 0.0
      %276 = vst [vmem:[#allocation2] sm:$0xff] 0.0
      %277 = vst [vmem:[#allocation2 + $0x8] sm:$0x3] 0.0
      %s278 = scalar_lea.vmem [#allocation2], 144
      %279 = vst [vmem:[%s278] sm:$0xff] 0.0
      %280 = vst [vmem:[%s278 + $0x8] sm:$0x3] 0.0
      %281 = vst [vmem:[#allocation2] sm:$0x1] 0.0
      %282 = vst [vmem:[#allocation2 + $0x10] sm:$0x1] 0.0
      %283 = vst [vmem:[#allocation2 + $0x20] sm:$0x1] 0.0
      %284 = vst [vmem:[#allocation2 + $0x30] sm:$0x1] 0.0
      %285 = vst [vmem:[#allocation2 + $0x40] sm:$0x1] 0.0
      %286 = vst [vmem:[#allocation2 + $0x50] sm:$0x1] 0.0
      %287 = vst [vmem:[#allocation2 + $0x60] sm:$0x1] 0.0
      %288 = vst [vmem:[#allocation2 + $0x70] sm:$0x1] 0.0
      %289 = vst [vmem:[#allocation2 + $0x80] sm:$0x1] 0.0
      %290 = vst [vmem:[#allocation2 + $0x90] sm:$0x1] 0.0
      %291 = vst [vmem:[#allocation2 + $0x9] sm:$0x1] 0.0
      %292 = vst [vmem:[#allocation2 + $0x19] sm:$0x1] 0.0
      %293 = vst [vmem:[#allocation2 + $0x29] sm:$0x1] 0.0
      %294 = vst [vmem:[#allocation2 + $0x39] sm:$0x1] 0.0
      %295 = vst [vmem:[#allocation2 + $0x49] sm:$0x1] 0.0
      %296 = vst [vmem:[#allocation2 + $0x59] sm:$0x1] 0.0
      %297 = vst [vmem:[#allocation2 + $0x69] sm:$0x1] 0.0
      %298 = vst [vmem:[#allocation2 + $0x79] sm:$0x1] 0.0
      %299 = vst [vmem:[#allocation2 + $0x89] sm:$0x1] 0.0
      %300 = vst [vmem:[#allocation2 + $0x99] sm:$0x1] 0.0
      %s301 = scalar_lea.vmem [#allocation2], 16
      %302 = vst [vmem:[%s301 + $0x1] sm:$0xff] %v268
      %303 = vst [vmem:[%s301 + $0x11] sm:$0xff] %v269
      %304 = vst [vmem:[%s301 + $0x21] sm:$0xff] %v270
      %305 = vst [vmem:[%s301 + $0x31] sm:$0xff] %v271
      %306 = vst [vmem:[%s301 + $0x41] sm:$0xff] %v272
      %307 = vst [vmem:[%s301 + $0x51] sm:$0xff] %v273
      %308 = vst [vmem:[%s301 + $0x61] sm:$0xff] %v274
      %309 = vst [vmem:[%s301 + $0x71] sm:$0xff] %v275
      %v310 = vld [vmem:[#allocation2] sm:$0xff]
      %v311 = vld [vmem:[#allocation2 + $0x10] sm:$0xff]
      %v312 = vld [vmem:[#allocation2 + $0x20] sm:$0xff]
      %v313 = vld [vmem:[#allocation2 + $0x30] sm:$0xff]
      %v314 = vld [vmem:[#allocation2 + $0x40] sm:$0xff]
      %v315 = vld [vmem:[#allocation2 + $0x50] sm:$0xff]
      %v316 = vld [vmem:[#allocation2 + $0x60] sm:$0xff]
      %v317 = vld [vmem:[#allocation2 + $0x70] sm:$0xff]
      %v318 = vld [vmem:[%s3] sm:$0xff]
      %v319 = vld [vmem:[%s3 + $0x8] sm:$0xff]
      %v320 = vld [vmem:[%s3 + $0x10] sm:$0xff]
      %v321 = vld [vmem:[%s3 + $0x18] sm:$0xff]
      %v322 = vld [vmem:[%s3 + $0x20] sm:$0xff]
      %v323 = vld [vmem:[%s3 + $0x28] sm:$0xff]
      %v324 = vld [vmem:[%s3 + $0x30] sm:$0xff]
      %v325 = vld [vmem:[%s3 + $0x38] sm:$0xff]
      %v326 = vld [vmem:[%s3 + $0x40] sm:$0xff]
      %v327 = vld [vmem:[%s3 + $0x48] sm:$0xff]
      %v328 = vld [vmem:[%s3 + $0x50] sm:$0xff]
      %v329 = vld [vmem:[%s3 + $0x58] sm:$0xff]
      %v330 = vld [vmem:[%s3 + $0x60] sm:$0xff]
      %v331 = vld [vmem:[%s3 + $0x68] sm:$0xff]
      %v332 = vld [vmem:[%s3 + $0x70] sm:$0xff]
      %v333 = vld [vmem:[%s3 + $0x78] sm:$0xff]
      %v334 = vld [vmem:[#allocation2 + $0x1] sm:$0xff]
      %v335 = vld [vmem:[#allocation2 + $0x11] sm:$0xff]
      %v336 = vld [vmem:[#allocation2 + $0x21] sm:$0xff]
      %v337 = vld [vmem:[#allocation2 + $0x31] sm:$0xff]
      %v338 = vld [vmem:[#allocation2 + $0x41] sm:$0xff]
      %v339 = vld [vmem:[#allocation2 + $0x51] sm:$0xff]
      %v340 = vld [vmem:[#allocation2 + $0x61] sm:$0xff]
      %v341 = vld [vmem:[#allocation2 + $0x71] sm:$0xff]
      %v342 = vld [vmem:[%s3 + $0x80] sm:$0xff]
      %v343 = vld [vmem:[%s3 + $0x88] sm:$0xff]
      %v344 = vld [vmem:[%s3 + $0x90] sm:$0xff]
      %v345 = vld [vmem:[%s3 + $0x98] sm:$0xff]
      %v346 = vld [vmem:[%s3 + $0xa0] sm:$0xff]
      %v347 = vld [vmem:[%s3 + $0xa8] sm:$0xff]
      %v348 = vld [vmem:[%s3 + $0xb0] sm:$0xff]
      %v349 = vld [vmem:[%s3 + $0xb8] sm:$0xff]
      %v350 = vld [vmem:[%s3 + $0xc0] sm:$0xff]
      %v351 = vld [vmem:[%s3 + $0xc8] sm:$0xff]
      %v352 = vld [vmem:[%s3 + $0xd0] sm:$0xff]
      %v353 = vld [vmem:[%s3 + $0xd8] sm:$0xff]
      %v354 = vld [vmem:[%s3 + $0xe0] sm:$0xff]
      %v355 = vld [vmem:[%s3 + $0xe8] sm:$0xff]
      %v356 = vld [vmem:[%s3 + $0xf0] sm:$0xff]
      %v357 = vld [vmem:[%s3 + $0xf8] sm:$0xff]
      %358 = vmatpush.msra.mxu0 %v357
      %359 = vmatpush.msra.mxu0 %v356
      %360 = vmatpush.msra.mxu0 %v355
      %361 = vmatpush.msra.mxu0 %v354
      %362 = vmatpush.msra.mxu0 %v353
      %363 = vmatpush.msra.mxu0 %v352
      %364 = vmatpush.msra.mxu0 %v351
      %365 = vmatpush.msra.mxu0 %v350
      %366 = vmatpush.msra.mxu0 %v349
      %367 = vmatpush.msra.mxu0 %v348
      %368 = vmatpush.msra.mxu0 %v347
      %369 = vmatpush.msra.mxu0 %v346
      %370 = vmatpush.msra.mxu0 %v345
      %371 = vmatpush.msra.mxu0 %v344
      %372 = vmatpush.msra.mxu0 %v343
      %373 = vmatpush.msra.mxu0 %v342
      %374 = vmatmul.f32.gmra.mxu0 %v334
      %v375 = vpop.f32.mrf.mxu0
      %v376 = vadd.f32 0.0, %v375
      %377 = vmatmul.f32.gmra.mxu0 %v335
      %v378 = vpop.f32.mrf.mxu0
      %v379 = vadd.f32 0.0, %v378
      %380 = vmatmul.f32.gmra.mxu0 %v336
      %v381 = vpop.f32.mrf.mxu0
      %v382 = vadd.f32 0.0, %v381
      %383 = vmatmul.f32.gmra.mxu0 %v337
      %v384 = vpop.f32.mrf.mxu0
      %v385 = vadd.f32 0.0, %v384
      %386 = vmatmul.f32.gmra.mxu0 %v338
      %v387 = vpop.f32.mrf.mxu0
      %v388 = vadd.f32 0.0, %v387
      %389 = vmatmul.f32.gmra.mxu0 %v339
      %v390 = vpop.f32.mrf.mxu0
      %v391 = vadd.f32 0.0, %v390
      %392 = vmatmul.f32.gmra.mxu0 %v340
      %v393 = vpop.f32.mrf.mxu0
      %v394 = vadd.f32 0.0, %v393
      %395 = vmatmul.f32.gmra.mxu0 %v341
      %v396 = vpop.f32.mrf.mxu0
      %v397 = vadd.f32 0.0, %v396
      %398 = vdwg.mxu0
      %399 = vmatpush.msra.mxu0 %v333
      %400 = vmatpush.msra.mxu0 %v332
      %401 = vmatpush.msra.mxu0 %v331
      %402 = vmatpush.msra.mxu0 %v330
      %403 = vmatpush.msra.mxu0 %v329
      %404 = vmatpush.msra.mxu0 %v328
      %405 = vmatpush.msra.mxu0 %v327
      %406 = vmatpush.msra.mxu0 %v326
      %407 = vmatpush.msra.mxu0 %v325
      %408 = vmatpush.msra.mxu0 %v324
      %409 = vmatpush.msra.mxu0 %v323
      %410 = vmatpush.msra.mxu0 %v322
      %411 = vmatpush.msra.mxu0 %v321
      %412 = vmatpush.msra.mxu0 %v320
      %413 = vmatpush.msra.mxu0 %v319
      %414 = vmatpush.msra.mxu0 %v318
      %415 = vmatmul.f32.gmra.mxu0 %v310
      %v416 = vpop.f32.mrf.mxu0
      %v417 = vadd.f32 %v376, %v416
      %418 = vmatmul.f32.gmra.mxu0 %v311
      %v419 = vpop.f32.mrf.mxu0
      %v420 = vadd.f32 %v379, %v419
      %421 = vmatmul.f32.gmra.mxu0 %v312
      %v422 = vpop.f32.mrf.mxu0
      %v423 = vadd.f32 %v382, %v422
      %424 = vmatmul.f32.gmra.mxu0 %v313
      %v425 = vpop.f32.mrf.mxu0
      %v426 = vadd.f32 %v385, %v425
      %427 = vmatmul.f32.gmra.mxu0 %v314
      %v428 = vpop.f32.mrf.mxu0
      %v429 = vadd.f32 %v388, %v428
      %430 = vmatmul.f32.gmra.mxu0 %v315
      %v431 = vpop.f32.mrf.mxu0
      %v432 = vadd.f32 %v391, %v431
      %433 = vmatmul.f32.gmra.mxu0 %v316
      %v434 = vpop.f32.mrf.mxu0
      %v435 = vadd.f32 %v394, %v434
      %436 = vmatmul.f32.gmra.mxu0 %v317
      %v437 = vpop.f32.mrf.mxu0
      %v438 = vadd.f32 %v397, %v437
      %439 = vdwg.mxu0
      %v440 = vld [vmem:[#allocation2 + $0x2] sm:$0xff]
      %v441 = vld [vmem:[#allocation2 + $0x12] sm:$0xff]
      %v442 = vld [vmem:[#allocation2 + $0x22] sm:$0xff]
      %v443 = vld [vmem:[#allocation2 + $0x32] sm:$0xff]
      %v444 = vld [vmem:[#allocation2 + $0x42] sm:$0xff]
      %v445 = vld [vmem:[#allocation2 + $0x52] sm:$0xff]
      %v446 = vld [vmem:[#allocation2 + $0x62] sm:$0xff]
      %v447 = vld [vmem:[#allocation2 + $0x72] sm:$0xff]
      %v448 = vld [vmem:[%s3 + $0x100] sm:$0xff]
      %v449 = vld [vmem:[%s3 + $0x108] sm:$0xff]
      %v450 = vld [vmem:[%s3 + $0x110] sm:$0xff]
      %v451 = vld [vmem:[%s3 + $0x118] sm:$0xff]
      %v452 = vld [vmem:[%s3 + $0x120] sm:$0xff]
      %v453 = vld [vmem:[%s3 + $0x128] sm:$0xff]
      %v454 = vld [vmem:[%s3 + $0x130] sm:$0xff]
      %v455 = vld [vmem:[%s3 + $0x138] sm:$0xff]
      %v456 = vld [vmem:[%s3 + $0x140] sm:$0xff]
      %v457 = vld [vmem:[%s3 + $0x148] sm:$0xff]
      %v458 = vld [vmem:[%s3 + $0x150] sm:$0xff]
      %v459 = vld [vmem:[%s3 + $0x158] sm:$0xff]
      %v460 = vld [vmem:[%s3 + $0x160] sm:$0xff]
      %v461 = vld [vmem:[%s3 + $0x168] sm:$0xff]
      %v462 = vld [vmem:[%s3 + $0x170] sm:$0xff]
      %v463 = vld [vmem:[%s3 + $0x178] sm:$0xff]
      %464 = vmatpush.msra.mxu0 %v463
      %465 = vmatpush.msra.mxu0 %v462
      %466 = vmatpush.msra.mxu0 %v461
      %467 = vmatpush.msra.mxu0 %v460
      %468 = vmatpush.msra.mxu0 %v459
      %469 = vmatpush.msra.mxu0 %v458
      %470 = vmatpush.msra.mxu0 %v457
      %471 = vmatpush.msra.mxu0 %v456
      %472 = vmatpush.msra.mxu0 %v455
      %473 = vmatpush.msra.mxu0 %v454
      %474 = vmatpush.msra.mxu0 %v453
      %475 = vmatpush.msra.mxu0 %v452
      %476 = vmatpush.msra.mxu0 %v451
      %477 = vmatpush.msra.mxu0 %v450
      %478 = vmatpush.msra.mxu0 %v449
      %479 = vmatpush.msra.mxu0 %v448
      %480 = vmatmul.f32.gmra.mxu0 %v440
      %v481 = vpop.f32.mrf.mxu0
      %v482 = vadd.f32 0.0, %v481
      %483 = vmatmul.f32.gmra.mxu0 %v441
      %v484 = vpop.f32.mrf.mxu0
      %v485 = vadd.f32 0.0, %v484
      %486 = vmatmul.f32.gmra.mxu0 %v442
      %v487 = vpop.f32.mrf.mxu0
      %v488 = vadd.f32 0.0, %v487
      %489 = vmatmul.f32.gmra.mxu0 %v443
      %v490 = vpop.f32.mrf.mxu0
      %v491 = vadd.f32 0.0, %v490
      %492 = vmatmul.f32.gmra.mxu0 %v444
      %v493 = vpop.f32.mrf.mxu0
      %v494 = vadd.f32 0.0, %v493
      %495 = vmatmul.f32.gmra.mxu0 %v445
      %v496 = vpop.f32.mrf.mxu0
      %v497 = vadd.f32 0.0, %v496
      %498 = vmatmul.f32.gmra.mxu0 %v446
      %v499 = vpop.f32.mrf.mxu0
      %v500 = vadd.f32 0.0, %v499
      %501 = vmatmul.f32.gmra.mxu0 %v447
      %v502 = vpop.f32.mrf.mxu0
      %v503 = vadd.f32 0.0, %v502
      %504 = vdwg.mxu0
      %v505 = vadd.f32 %v417, %v482
      %v506 = vadd.f32 %v420, %v485
      %v507 = vadd.f32 %v423, %v488
      %v508 = vadd.f32 %v426, %v491
      %v509 = vadd.f32 %v429, %v494
      %v510 = vadd.f32 %v432, %v497
      %v511 = vadd.f32 %v435, %v500
      %v512 = vadd.f32 %v438, %v503
      %v513 = vld [vmem:[%s301] sm:$0xff]
      %v514 = vld [vmem:[%s301 + $0x10] sm:$0xff]
      %v515 = vld [vmem:[%s301 + $0x20] sm:$0xff]
      %v516 = vld [vmem:[%s301 + $0x30] sm:$0xff]
      %v517 = vld [vmem:[%s301 + $0x40] sm:$0xff]
      %v518 = vld [vmem:[%s301 + $0x50] sm:$0xff]
      %v519 = vld [vmem:[%s301 + $0x60] sm:$0xff]
      %v520 = vld [vmem:[%s301 + $0x70] sm:$0xff]
      %v521 = vld [vmem:[%s3 + $0x180] sm:$0xff]
      %v522 = vld [vmem:[%s3 + $0x188] sm:$0xff]
      %v523 = vld [vmem:[%s3 + $0x190] sm:$0xff]
      %v524 = vld [vmem:[%s3 + $0x198] sm:$0xff]
      %v525 = vld [vmem:[%s3 + $0x1a0] sm:$0xff]
      %v526 = vld [vmem:[%s3 + $0x1a8] sm:$0xff]
      %v527 = vld [vmem:[%s3 + $0x1b0] sm:$0xff]
      %v528 = vld [vmem:[%s3 + $0x1b8] sm:$0xff]
      %v529 = vld [vmem:[%s3 + $0x1c0] sm:$0xff]
      %v530 = vld [vmem:[%s3 + $0x1c8] sm:$0xff]
      %v531 = vld [vmem:[%s3 + $0x1d0] sm:$0xff]
      %v532 = vld [vmem:[%s3 + $0x1d8] sm:$0xff]
      %v533 = vld [vmem:[%s3 + $0x1e0] sm:$0xff]
      %v534 = vld [vmem:[%s3 + $0x1e8] sm:$0xff]
      %v535 = vld [vmem:[%s3 + $0x1f0] sm:$0xff]
      %v536 = vld [vmem:[%s3 + $0x1f8] sm:$0xff]
      %537 = vmatpush.msra.mxu0 %v536
      %538 = vmatpush.msra.mxu0 %v535
      %539 = vmatpush.msra.mxu0 %v534
      %540 = vmatpush.msra.mxu0 %v533
      %541 = vmatpush.msra.mxu0 %v532
      %542 = vmatpush.msra.mxu0 %v531
      %543 = vmatpush.msra.mxu0 %v530
      %544 = vmatpush.msra.mxu0 %v529
      %545 = vmatpush.msra.mxu0 %v528
      %546 = vmatpush.msra.mxu0 %v527
      %547 = vmatpush.msra.mxu0 %v526
      %548 = vmatpush.msra.mxu0 %v525
      %549 = vmatpush.msra.mxu0 %v524
      %550 = vmatpush.msra.mxu0 %v523
      %551 = vmatpush.msra.mxu0 %v522
      %552 = vmatpush.msra.mxu0 %v521
      %553 = vmatmul.f32.gmra.mxu0 %v513
      %v554 = vpop.f32.mrf.mxu0
      %v555 = vadd.f32 0.0, %v554
      %556 = vmatmul.f32.gmra.mxu0 %v514
      %v557 = vpop.f32.mrf.mxu0
      %v558 = vadd.f32 0.0, %v557
      %559 = vmatmul.f32.gmra.mxu0 %v515
      %v560 = vpop.f32.mrf.mxu0
      %v561 = vadd.f32 0.0, %v560
      %562 = vmatmul.f32.gmra.mxu0 %v516
      %v563 = vpop.f32.mrf.mxu0
      %v564 = vadd.f32 0.0, %v563
      %565 = vmatmul.f32.gmra.mxu0 %v517
      %v566 = vpop.f32.mrf.mxu0
      %v567 = vadd.f32 0.0, %v566
      %568 = vmatmul.f32.gmra.mxu0 %v518
      %v569 = vpop.f32.mrf.mxu0
      %v570 = vadd.f32 0.0, %v569
      %571 = vmatmul.f32.gmra.mxu0 %v519
      %v572 = vpop.f32.mrf.mxu0
      %v573 = vadd.f32 0.0, %v572
      %574 = vmatmul.f32.gmra.mxu0 %v520
      %v575 = vpop.f32.mrf.mxu0
      %v576 = vadd.f32 0.0, %v575
      %577 = vdwg.mxu0
      %v578 = vadd.f32 %v505, %v555
      %v579 = vadd.f32 %v506, %v558
      %v580 = vadd.f32 %v507, %v561
      %v581 = vadd.f32 %v508, %v564
      %v582 = vadd.f32 %v509, %v567
      %v583 = vadd.f32 %v510, %v570
      %v584 = vadd.f32 %v511, %v573
      %v585 = vadd.f32 %v512, %v576
      %v586 = vld [vmem:[%s301 + $0x1] sm:$0xff]
      %v587 = vld [vmem:[%s301 + $0x11] sm:$0xff]
      %v588 = vld [vmem:[%s301 + $0x21] sm:$0xff]
      %v589 = vld [vmem:[%s301 + $0x31] sm:$0xff]
      %v590 = vld [vmem:[%s301 + $0x41] sm:$0xff]
      %v591 = vld [vmem:[%s301 + $0x51] sm:$0xff]
      %v592 = vld [vmem:[%s301 + $0x61] sm:$0xff]
      %v593 = vld [vmem:[%s301 + $0x71] sm:$0xff]
      %v594 = vld [vmem:[%s3 + $0x200] sm:$0xff]
      %v595 = vld [vmem:[%s3 + $0x208] sm:$0xff]
      %v596 = vld [vmem:[%s3 + $0x210] sm:$0xff]
      %v597 = vld [vmem:[%s3 + $0x218] sm:$0xff]
      %v598 = vld [vmem:[%s3 + $0x220] sm:$0xff]
      %v599 = vld [vmem:[%s3 + $0x228] sm:$0xff]
      %v600 = vld [vmem:[%s3 + $0x230] sm:$0xff]
      %v601 = vld [vmem:[%s3 + $0x238] sm:$0xff]
      %v602 = vld [vmem:[%s3 + $0x240] sm:$0xff]
      %v603 = vld [vmem:[%s3 + $0x248] sm:$0xff]
      %v604 = vld [vmem:[%s3 + $0x250] sm:$0xff]
      %v605 = vld [vmem:[%s3 + $0x258] sm:$0xff]
      %v606 = vld [vmem:[%s3 + $0x260] sm:$0xff]
      %v607 = vld [vmem:[%s3 + $0x268] sm:$0xff]
      %v608 = vld [vmem:[%s3 + $0x270] sm:$0xff]
      %v609 = vld [vmem:[%s3 + $0x278] sm:$0xff]
      %610 = vmatpush.msra.mxu0 %v609
      %611 = vmatpush.msra.mxu0 %v608
      %612 = vmatpush.msra.mxu0 %v607
      %613 = vmatpush.msra.mxu0 %v606
      %614 = vmatpush.msra.mxu0 %v605
      %615 = vmatpush.msra.mxu0 %v604
      %616 = vmatpush.msra.mxu0 %v603
      %617 = vmatpush.msra.mxu0 %v602
      %618 = vmatpush.msra.mxu0 %v601
      %619 = vmatpush.msra.mxu0 %v600
      %620 = vmatpush.msra.mxu0 %v599
      %621 = vmatpush.msra.mxu0 %v598
      %622 = vmatpush.msra.mxu0 %v597
      %623 = vmatpush.msra.mxu0 %v596
      %624 = vmatpush.msra.mxu0 %v595
      %625 = vmatpush.msra.mxu0 %v594
      %626 = vmatmul.f32.gmra.mxu0 %v586
      %v627 = vpop.f32.mrf.mxu0
      %v628 = vadd.f32 0.0, %v627
      %629 = vmatmul.f32.gmra.mxu0 %v587
      %v630 = vpop.f32.mrf.mxu0
      %v631 = vadd.f32 0.0, %v630
      %632 = vmatmul.f32.gmra.mxu0 %v588
      %v633 = vpop.f32.mrf.mxu0
      %v634 = vadd.f32 0.0, %v633
      %635 = vmatmul.f32.gmra.mxu0 %v589
      %v636 = vpop.f32.mrf.mxu0
      %v637 = vadd.f32 0.0, %v636
      %638 = vmatmul.f32.gmra.mxu0 %v590
      %v639 = vpop.f32.mrf.mxu0
      %v640 = vadd.f32 0.0, %v639
      %641 = vmatmul.f32.gmra.mxu0 %v591
      %v642 = vpop.f32.mrf.mxu0
      %v643 = vadd.f32 0.0, %v642
      %644 = vmatmul.f32.gmra.mxu0 %v592
      %v645 = vpop.f32.mrf.mxu0
      %v646 = vadd.f32 0.0, %v645
      %647 = vmatmul.f32.gmra.mxu0 %v593
      %v648 = vpop.f32.mrf.mxu0
      %v649 = vadd.f32 0.0, %v648
      %650 = vdwg.mxu0
      %v651 = vadd.f32 %v578, %v628
      %v652 = vadd.f32 %v579, %v631
      %v653 = vadd.f32 %v580, %v634
      %v654 = vadd.f32 %v581, %v637
      %v655 = vadd.f32 %v582, %v640
      %v656 = vadd.f32 %v583, %v643
      %v657 = vadd.f32 %v584, %v646
      %v658 = vadd.f32 %v585, %v649
      %v659 = vld [vmem:[%s301 + $0x2] sm:$0xff]
      %v660 = vld [vmem:[%s301 + $0x12] sm:$0xff]
      %v661 = vld [vmem:[%s301 + $0x22] sm:$0xff]
      %v662 = vld [vmem:[%s301 + $0x32] sm:$0xff]
      %v663 = vld [vmem:[%s301 + $0x42] sm:$0xff]
      %v664 = vld [vmem:[%s301 + $0x52] sm:$0xff]
      %v665 = vld [vmem:[%s301 + $0x62] sm:$0xff]
      %v666 = vld [vmem:[%s301 + $0x72] sm:$0xff]
      %v667 = vld [vmem:[%s3 + $0x280] sm:$0xff]
      %v668 = vld [vmem:[%s3 + $0x288] sm:$0xff]
      %v669 = vld [vmem:[%s3 + $0x290] sm:$0xff]
      %v670 = vld [vmem:[%s3 + $0x298] sm:$0xff]
      %v671 = vld [vmem:[%s3 + $0x2a0] sm:$0xff]
      %v672 = vld [vmem:[%s3 + $0x2a8] sm:$0xff]
      %v673 = vld [vmem:[%s3 + $0x2b0] sm:$0xff]
      %v674 = vld [vmem:[%s3 + $0x2b8] sm:$0xff]
      %v675 = vld [vmem:[%s3 + $0x2c0] sm:$0xff]
      %v676 = vld [vmem:[%s3 + $0x2c8] sm:$0xff]
      %v677 = vld [vmem:[%s3 + $0x2d0] sm:$0xff]
      %v678 = vld [vmem:[%s3 + $0x2d8] sm:$0xff]
      %v679 = vld [vmem:[%s3 + $0x2e0] sm:$0xff]
      %v680 = vld [vmem:[%s3 + $0x2e8] sm:$0xff]
      %v681 = vld [vmem:[%s3 + $0x2f0] sm:$0xff]
      %v682 = vld [vmem:[%s3 + $0x2f8] sm:$0xff]
      %683 = vmatpush.msra.mxu0 %v682
      %684 = vmatpush.msra.mxu0 %v681
      %685 = vmatpush.msra.mxu0 %v680
      %686 = vmatpush.msra.mxu0 %v679
      %687 = vmatpush.msra.mxu0 %v678
      %688 = vmatpush.msra.mxu0 %v677
      %689 = vmatpush.msra.mxu0 %v676
      %690 = vmatpush.msra.mxu0 %v675
      %691 = vmatpush.msra.mxu0 %v674
      %692 = vmatpush.msra.mxu0 %v673
      %693 = vmatpush.msra.mxu0 %v672
      %694 = vmatpush.msra.mxu0 %v671
      %695 = vmatpush.msra.mxu0 %v670
      %696 = vmatpush.msra.mxu0 %v669
      %697 = vmatpush.msra.mxu0 %v668
      %698 = vmatpush.msra.mxu0 %v667
      %699 = vmatmul.f32.gmra.mxu0 %v659
      %v700 = vpop.f32.mrf.mxu0
      %v701 = vadd.f32 0.0, %v700
      %702 = vmatmul.f32.gmra.mxu0 %v660
      %v703 = vpop.f32.mrf.mxu0
      %v704 = vadd.f32 0.0, %v703
      %705 = vmatmul.f32.gmra.mxu0 %v661
      %v706 = vpop.f32.mrf.mxu0
      %v707 = vadd.f32 0.0, %v706
      %708 = vmatmul.f32.gmra.mxu0 %v662
      %v709 = vpop.f32.mrf.mxu0
      %v710 = vadd.f32 0.0, %v709
      %711 = vmatmul.f32.gmra.mxu0 %v663
      %v712 = vpop.f32.mrf.mxu0
      %v713 = vadd.f32 0.0, %v712
      %714 = vmatmul.f32.gmra.mxu0 %v664
      %v715 = vpop.f32.mrf.mxu0
      %v716 = vadd.f32 0.0, %v715
      %717 = vmatmul.f32.gmra.mxu0 %v665
      %v718 = vpop.f32.mrf.mxu0
      %v719 = vadd.f32 0.0, %v718
      %720 = vmatmul.f32.gmra.mxu0 %v666
      %v721 = vpop.f32.mrf.mxu0
      %v722 = vadd.f32 0.0, %v721
      %723 = vdwg.mxu0
      %v724 = vadd.f32 %v651, %v701
      %v725 = vadd.f32 %v652, %v704
      %v726 = vadd.f32 %v653, %v707
      %v727 = vadd.f32 %v654, %v710
      %v728 = vadd.f32 %v655, %v713
      %v729 = vadd.f32 %v656, %v716
      %v730 = vadd.f32 %v657, %v719
      %v731 = vadd.f32 %v658, %v722
      %s732 = scalar_lea.vmem [#allocation2], 32
      %v733 = vld [vmem:[%s732] sm:$0xff]
      %v734 = vld [vmem:[%s732 + $0x10] sm:$0xff]
      %v735 = vld [vmem:[%s732 + $0x20] sm:$0xff]
      %v736 = vld [vmem:[%s732 + $0x30] sm:$0xff]
      %v737 = vld [vmem:[%s732 + $0x40] sm:$0xff]
      %v738 = vld [vmem:[%s732 + $0x50] sm:$0xff]
      %v739 = vld [vmem:[%s732 + $0x60] sm:$0xff]
      %v740 = vld [vmem:[%s732 + $0x70] sm:$0xff]
      %v741 = vld [vmem:[%s3 + $0x300] sm:$0xff]
      %v742 = vld [vmem:[%s3 + $0x308] sm:$0xff]
      %v743 = vld [vmem:[%s3 + $0x310] sm:$0xff]
      %v744 = vld [vmem:[%s3 + $0x318] sm:$0xff]
      %v745 = vld [vmem:[%s3 + $0x320] sm:$0xff]
      %v746 = vld [vmem:[%s3 + $0x328] sm:$0xff]
      %v747 = vld [vmem:[%s3 + $0x330] sm:$0xff]
      %v748 = vld [vmem:[%s3 + $0x338] sm:$0xff]
      %v749 = vld [vmem:[%s3 + $0x340] sm:$0xff]
      %v750 = vld [vmem:[%s3 + $0x348] sm:$0xff]
      %v751 = vld [vmem:[%s3 + $0x350] sm:$0xff]
      %v752 = vld [vmem:[%s3 + $0x358] sm:$0xff]
      %v753 = vld [vmem:[%s3 + $0x360] sm:$0xff]
      %v754 = vld [vmem:[%s3 + $0x368] sm:$0xff]
      %v755 = vld [vmem:[%s3 + $0x370] sm:$0xff]
      %v756 = vld [vmem:[%s3 + $0x378] sm:$0xff]
      %757 = vmatpush.msra.mxu0 %v756
      %758 = vmatpush.msra.mxu0 %v755
      %759 = vmatpush.msra.mxu0 %v754
      %760 = vmatpush.msra.mxu0 %v753
      %761 = vmatpush.msra.mxu0 %v752
      %762 = vmatpush.msra.mxu0 %v751
      %763 = vmatpush.msra.mxu0 %v750
      %764 = vmatpush.msra.mxu0 %v749
      %765 = vmatpush.msra.mxu0 %v748
      %766 = vmatpush.msra.mxu0 %v747
      %767 = vmatpush.msra.mxu0 %v746
      %768 = vmatpush.msra.mxu0 %v745
      %769 = vmatpush.msra.mxu0 %v744
      %770 = vmatpush.msra.mxu0 %v743
      %771 = vmatpush.msra.mxu0 %v742
      %772 = vmatpush.msra.mxu0 %v741
      %773 = vmatmul.f32.gmra.mxu0 %v733
      %v774 = vpop.f32.mrf.mxu0
      %v775 = vadd.f32 0.0, %v774
      %776 = vmatmul.f32.gmra.mxu0 %v734
      %v777 = vpop.f32.mrf.mxu0
      %v778 = vadd.f32 0.0, %v777
      %779 = vmatmul.f32.gmra.mxu0 %v735
      %v780 = vpop.f32.mrf.mxu0
      %v781 = vadd.f32 0.0, %v780
      %782 = vmatmul.f32.gmra.mxu0 %v736
      %v783 = vpop.f32.mrf.mxu0
      %v784 = vadd.f32 0.0, %v783
      %785 = vmatmul.f32.gmra.mxu0 %v737
      %v786 = vpop.f32.mrf.mxu0
      %v787 = vadd.f32 0.0, %v786
      %788 = vmatmul.f32.gmra.mxu0 %v738
      %v789 = vpop.f32.mrf.mxu0
      %v790 = vadd.f32 0.0, %v789
      %791 = vmatmul.f32.gmra.mxu0 %v739
      %v792 = vpop.f32.mrf.mxu0
      %v793 = vadd.f32 0.0, %v792
      %794 = vmatmul.f32.gmra.mxu0 %v740
      %v795 = vpop.f32.mrf.mxu0
      %v796 = vadd.f32 0.0, %v795
      %797 = vdwg.mxu0
      %v798 = vadd.f32 %v724, %v775
      %v799 = vadd.f32 %v725, %v778
      %v800 = vadd.f32 %v726, %v781
      %v801 = vadd.f32 %v727, %v784
      %v802 = vadd.f32 %v728, %v787
      %v803 = vadd.f32 %v729, %v790
      %v804 = vadd.f32 %v730, %v793
      %v805 = vadd.f32 %v731, %v796
      %v806 = vld [vmem:[%s732 + $0x1] sm:$0xff]
      %v807 = vld [vmem:[%s732 + $0x11] sm:$0xff]
      %v808 = vld [vmem:[%s732 + $0x21] sm:$0xff]
      %v809 = vld [vmem:[%s732 + $0x31] sm:$0xff]
      %v810 = vld [vmem:[%s732 + $0x41] sm:$0xff]
      %v811 = vld [vmem:[%s732 + $0x51] sm:$0xff]
      %v812 = vld [vmem:[%s732 + $0x61] sm:$0xff]
      %v813 = vld [vmem:[%s732 + $0x71] sm:$0xff]
      %v814 = vld [vmem:[%s3 + $0x380] sm:$0xff]
      %v815 = vld [vmem:[%s3 + $0x388] sm:$0xff]
      %v816 = vld [vmem:[%s3 + $0x390] sm:$0xff]
      %v817 = vld [vmem:[%s3 + $0x398] sm:$0xff]
      %v818 = vld [vmem:[%s3 + $0x3a0] sm:$0xff]
      %v819 = vld [vmem:[%s3 + $0x3a8] sm:$0xff]
      %v820 = vld [vmem:[%s3 + $0x3b0] sm:$0xff]
      %v821 = vld [vmem:[%s3 + $0x3b8] sm:$0xff]
      %v822 = vld [vmem:[%s3 + $0x3c0] sm:$0xff]
      %v823 = vld [vmem:[%s3 + $0x3c8] sm:$0xff]
      %v824 = vld [vmem:[%s3 + $0x3d0] sm:$0xff]
      %v825 = vld [vmem:[%s3 + $0x3d8] sm:$0xff]
      %v826 = vld [vmem:[%s3 + $0x3e0] sm:$0xff]
      %v827 = vld [vmem:[%s3 + $0x3e8] sm:$0xff]
      %v828 = vld [vmem:[%s3 + $0x3f0] sm:$0xff]
      %v829 = vld [vmem:[%s3 + $0x3f8] sm:$0xff]
      %830 = vmatpush.msra.mxu0 %v829
      %831 = vmatpush.msra.mxu0 %v828
      %832 = vmatpush.msra.mxu0 %v827
      %833 = vmatpush.msra.mxu0 %v826
      %834 = vmatpush.msra.mxu0 %v825
      %835 = vmatpush.msra.mxu0 %v824
      %836 = vmatpush.msra.mxu0 %v823
      %837 = vmatpush.msra.mxu0 %v822
      %838 = vmatpush.msra.mxu0 %v821
      %839 = vmatpush.msra.mxu0 %v820
      %840 = vmatpush.msra.mxu0 %v819
      %841 = vmatpush.msra.mxu0 %v818
      %842 = vmatpush.msra.mxu0 %v817
      %843 = vmatpush.msra.mxu0 %v816
      %844 = vmatpush.msra.mxu0 %v815
      %845 = vmatpush.msra.mxu0 %v814
      %846 = vmatmul.f32.gmra.mxu0 %v806
      %v847 = vpop.f32.mrf.mxu0
      %v848 = vadd.f32 0.0, %v847
      %849 = vmatmul.f32.gmra.mxu0 %v807
      %v850 = vpop.f32.mrf.mxu0
      %v851 = vadd.f32 0.0, %v850
      %852 = vmatmul.f32.gmra.mxu0 %v808
      %v853 = vpop.f32.mrf.mxu0
      %v854 = vadd.f32 0.0, %v853
      %855 = vmatmul.f32.gmra.mxu0 %v809
      %v856 = vpop.f32.mrf.mxu0
      %v857 = vadd.f32 0.0, %v856
      %858 = vmatmul.f32.gmra.mxu0 %v810
      %v859 = vpop.f32.mrf.mxu0
      %v860 = vadd.f32 0.0, %v859
      %861 = vmatmul.f32.gmra.mxu0 %v811
      %v862 = vpop.f32.mrf.mxu0
      %v863 = vadd.f32 0.0, %v862
      %864 = vmatmul.f32.gmra.mxu0 %v812
      %v865 = vpop.f32.mrf.mxu0
      %v866 = vadd.f32 0.0, %v865
      %867 = vmatmul.f32.gmra.mxu0 %v813
      %v868 = vpop.f32.mrf.mxu0
      %v869 = vadd.f32 0.0, %v868
      %870 = vdwg.mxu0
      %v871 = vadd.f32 %v798, %v848
      %v872 = vadd.f32 %v799, %v851
      %v873 = vadd.f32 %v800, %v854
      %v874 = vadd.f32 %v801, %v857
      %v875 = vadd.f32 %v802, %v860
      %v876 = vadd.f32 %v803, %v863
      %v877 = vadd.f32 %v804, %v866
      %v878 = vadd.f32 %v805, %v869
      %v879 = vld [vmem:[%s732 + $0x2] sm:$0xff]
      %v880 = vld [vmem:[%s732 + $0x12] sm:$0xff]
      %v881 = vld [vmem:[%s732 + $0x22] sm:$0xff]
      %v882 = vld [vmem:[%s732 + $0x32] sm:$0xff]
      %v883 = vld [vmem:[%s732 + $0x42] sm:$0xff]
      %v884 = vld [vmem:[%s732 + $0x52] sm:$0xff]
      %v885 = vld [vmem:[%s732 + $0x62] sm:$0xff]
      %v886 = vld [vmem:[%s732 + $0x72] sm:$0xff]
      %v887 = vld [vmem:[%s3 + $0x400] sm:$0xff]
      %v888 = vld [vmem:[%s3 + $0x408] sm:$0xff]
      %v889 = vld [vmem:[%s3 + $0x410] sm:$0xff]
      %v890 = vld [vmem:[%s3 + $0x418] sm:$0xff]
      %v891 = vld [vmem:[%s3 + $0x420] sm:$0xff]
      %v892 = vld [vmem:[%s3 + $0x428] sm:$0xff]
      %v893 = vld [vmem:[%s3 + $0x430] sm:$0xff]
      %v894 = vld [vmem:[%s3 + $0x438] sm:$0xff]
      %v895 = vld [vmem:[%s3 + $0x440] sm:$0xff]
      %v896 = vld [vmem:[%s3 + $0x448] sm:$0xff]
      %v897 = vld [vmem:[%s3 + $0x450] sm:$0xff]
      %v898 = vld [vmem:[%s3 + $0x458] sm:$0xff]
      %v899 = vld [vmem:[%s3 + $0x460] sm:$0xff]
      %v900 = vld [vmem:[%s3 + $0x468] sm:$0xff]
      %v901 = vld [vmem:[%s3 + $0x470] sm:$0xff]
      %v902 = vld [vmem:[%s3 + $0x478] sm:$0xff]
      %903 = vmatpush.msra.mxu0 %v902
      %904 = vmatpush.msra.mxu0 %v901
      %905 = vmatpush.msra.mxu0 %v900
      %906 = vmatpush.msra.mxu0 %v899
      %907 = vmatpush.msra.mxu0 %v898
      %908 = vmatpush.msra.mxu0 %v897
      %909 = vmatpush.msra.mxu0 %v896
      %910 = vmatpush.msra.mxu0 %v895
      %911 = vmatpush.msra.mxu0 %v894
      %912 = vmatpush.msra.mxu0 %v893
      %913 = vmatpush.msra.mxu0 %v892
      %914 = vmatpush.msra.mxu0 %v891
      %915 = vmatpush.msra.mxu0 %v890
      %916 = vmatpush.msra.mxu0 %v889
      %917 = vmatpush.msra.mxu0 %v888
      %918 = vmatpush.msra.mxu0 %v887
      %919 = vmatmul.f32.gmra.mxu0 %v879
      %v920 = vpop.f32.mrf.mxu0
      %v921 = vadd.f32 0.0, %v920
      %922 = vmatmul.f32.gmra.mxu0 %v880
      %v923 = vpop.f32.mrf.mxu0
      %v924 = vadd.f32 0.0, %v923
      %925 = vmatmul.f32.gmra.mxu0 %v881
      %v926 = vpop.f32.mrf.mxu0
      %v927 = vadd.f32 0.0, %v926
      %928 = vmatmul.f32.gmra.mxu0 %v882
      %v929 = vpop.f32.mrf.mxu0
      %v930 = vadd.f32 0.0, %v929
      %931 = vmatmul.f32.gmra.mxu0 %v883
      %v932 = vpop.f32.mrf.mxu0
      %v933 = vadd.f32 0.0, %v932
      %934 = vmatmul.f32.gmra.mxu0 %v884
      %v935 = vpop.f32.mrf.mxu0
      %v936 = vadd.f32 0.0, %v935
      %937 = vmatmul.f32.gmra.mxu0 %v885
      %v938 = vpop.f32.mrf.mxu0
      %v939 = vadd.f32 0.0, %v938
      %940 = vmatmul.f32.gmra.mxu0 %v886
      %v941 = vpop.f32.mrf.mxu0
      %v942 = vadd.f32 0.0, %v941
      %943 = vdwg.mxu0
      %v944 = vadd.f32 %v871, %v921
      %v945 = vadd.f32 %v872, %v924
      %v946 = vadd.f32 %v873, %v927
      %v947 = vadd.f32 %v874, %v930
      %v948 = vadd.f32 %v875, %v933
      %v949 = vadd.f32 %v876, %v936
      %v950 = vadd.f32 %v877, %v939
      %v951 = vadd.f32 %v878, %v942
      %952 = vst [vmem:[%s231] sm:$0xff] %v944
      %953 = vst [vmem:[%s231 + $0x8] sm:$0xff] %v945
      %954 = vst [vmem:[%s231 + $0x10] sm:$0xff] %v946
      %955 = vst [vmem:[%s231 + $0x18] sm:$0xff] %v947
      %956 = vst [vmem:[%s231 + $0x20] sm:$0xff] %v948
      %957 = vst [vmem:[%s231 + $0x28] sm:$0xff] %v949
      %958 = vst [vmem:[%s231 + $0x30] sm:$0xff] %v950
      %959 = vst [vmem:[%s231 + $0x38] sm:$0xff] %v951
      %v960 = vadd.f32 %v944, %v945
      %v961 = vadd.f32 %v960, %v946
      %v962 = vadd.f32 %v961, %v947
      %v963 = vadd.f32 %v962, %v948
      %v964 = vadd.f32 %v963, %v949
      %v965 = vadd.f32 %v964, %v950
      %v966 = vadd.f32 %v965, %v951
      %v967 = vrot.slane %v966, 4
      %v968 = vadd.f32 %v966, %v967
      %v969 = vrot.slane %v968, 2
      %v970 = vadd.f32 %v968, %v969
      %v971 = vrot.slane %v970, 1
      %v972 = vadd.f32 %v970, %v971
      %973 = vst [vmem:[%s235] sm:$0x1] %v972
      %v974 = vmul.f32 %v944, %v944
      %v975 = vmul.f32 %v945, %v945
      %v976 = vmul.f32 %v946, %v946
      %v977 = vmul.f32 %v947, %v947
      %v978 = vmul.f32 %v948, %v948
      %v979 = vmul.f32 %v949, %v949
      %v980 = vmul.f32 %v950, %v950
      %v981 = vmul.f32 %v951, %v951
      %v982 = vadd.f32 %v974, %v975
      %v983 = vadd.f32 %v982, %v976
      %v984 = vadd.f32 %v983, %v977
      %v985 = vadd.f32 %v984, %v978
      %v986 = vadd.f32 %v985, %v979
      %v987 = vadd.f32 %v986, %v980
      %v988 = vadd.f32 %v987, %v981
      %v989 = vrot.slane %v988, 4
      %v990 = vadd.f32 %v988, %v989
      %v991 = vrot.slane %v990, 2
      %v992 = vadd.f32 %v990, %v991
      %v993 = vrot.slane %v992, 1
      %v994 = vadd.f32 %v992, %v993
      %995 = vst [vmem:[%s235 + $0x1] sm:$0x1] %v994
      %p996 = scmp.lt.s32.totalorder %s17, 1
      %s997 = scalar_select %p996, %s17, 1
      %s998 = smul.addr %s997, 8
      %s999 = smul.addr %s998, 8
      %s1000 = scalar_lea.vmem %s4, %s999
      %p1001 = scmp.lt.s32.totalorder %s17, 1
      %s1002 = scalar_select %p1001, %s17, 1
      %s1003 = smul.addr %s1002, 2
      %s1004 = scalar_lea.vmem %s5, %s1003
      // Predicated region
      $region37: #{basic_block_pallas.4} parent=35 // pred_check
        %p1005 = pneg %p124
      $region38: #{basic_block_pallas.4} parent=35 // pred_check_branch
        %1007 = sbr.rel (%p1005) target = $region40
      $region39: #{basic_block_pallas.4} parent=35 // pred_region
        _
      $region40: #{basic_block_pallas.4} parent=35 // pred_fallthru
        _
      // Predicated region
      $region41: #{basic_block_pallas.4} parent=35 // pred_check
        %p1008 = pneg %p150
      $region42: #{basic_block_pallas.4} parent=35 // pred_check_branch
        %1010 = sbr.rel (%p1008) target = $region44
      $region43: #{basic_block_pallas.4} parent=35 // pred_region
        _
      $region44: #{basic_block_pallas.4} parent=35 // pred_fallthru
        _
    $region36: #{basic_block_pallas.4} parent=5 // pred_fallthru
      _
    %p1011 = scmp.le.s32.totalorder 2, %s12
    // Predicated region
    $region45: #{basic_block_pallas.4} parent=5 // pred_check
      %p1012 = pneg %p1011
    $region46: #{basic_block_pallas.4} parent=5 // pred_check_branch
      %1014 = sbr.rel (%p1012) target = $region48
    $region47: #{basic_block_pallas.4} parent=5 // pred_region
      %s1015 = ssub.s32 %s12, 2
      // Predicated region
      $region49: #{basic_block_pallas.4} parent=47 // pred_check
        %p1016 = pneg %p130
      $region50: #{basic_block_pallas.4} parent=47 // pred_check_branch
        %1018 = sbr.rel (%p1016) target = $region52
      $region51: #{basic_block_pallas.4} parent=47 // pred_region
        %p1019 = scmp.lt.s32.totalorder %s18, 1
        %s1020 = scalar_select %p1019, %s18, 1
        %s1021 = smul.addr %s1020, 8
        %s1022 = smul.addr %s1021, 8
        %s1023 = scalar_lea.vmem %s4, %s1022
      $region52: #{basic_block_pallas.4} parent=47 // pred_fallthru
        _
      // Predicated region
      $region53: #{basic_block_pallas.4} parent=47 // pred_check
        %p1024 = pneg %p156
      $region54: #{basic_block_pallas.4} parent=47 // pred_check_branch
        %1026 = sbr.rel (%p1024) target = $region56
      $region55: #{basic_block_pallas.4} parent=47 // pred_region
        %p1027 = scmp.lt.s32.totalorder %s18, 1
        %s1028 = scalar_select %p1027, %s18, 1
        %s1029 = smul.addr %s1028, 2
        %s1030 = scalar_lea.vmem %s5, %s1029
      $region56: #{basic_block_pallas.4} parent=47 // pred_fallthru
        _
    $region48: #{basic_block_pallas.4} parent=5 // pred_fallthru
      _
  $region6: #{basic_block_pallas.4} parent=0 // loop_footer
    %s16 = sadd.s32 1, %s12
  $region7: #{basic_block_pallas.4} parent=0 // loop_footer_branch
    %11 = sbr.rel target = $region3
  $region8: #{basic_block_pallas.4} parent=0 // loop_exit
    _

</llo_original>
